<compile_context>
chip_gen: v5e
topology: v5e:2x2
jax: 0.10.0
libtpu: 0.0.40
codegen_flags: <defaults>
</compile_context>

<pallas_src>
import functools
import math

import jax
import jax.numpy as jnp
from jax.experimental import pallas as pl
from jax.experimental.pallas import tpu as pltpu

# ----------------------------- small synthetic config -----------------------------
VOCAB_SIZE = 100
NUM_TOKEN_TYPES = 8
SUBTOKENS = 4                 # subtokens_per_token
D_MODEL = 128                 # lane-dense hidden size (last dim = 128)
N_HEAD = 4
D_HEAD = D_MODEL // N_HEAD
D_INNER = 256
N_LAYER = 2
LN_EPS = 1e-12                # XLNetConfig.layer_norm_eps default
B = 2
S = 8

_N_PER_LAYER = 13             # number of per-layer weight tensors fed to the kernel


# ------------------------------------ kernel ---------------------------------------
def _layer_norm(y, w, b):
    mu = jnp.mean(y, axis=-1, keepdims=True)
    var = jnp.mean((y - mu) ** 2, axis=-1, keepdims=True)
    return (y - mu) * jax.lax.rsqrt(var + LN_EPS) * w + b


def _fused_encoder_kernel(*refs, n_layer, n_head, d_head, seq_len):
    # refs = [emb_cat(1,S,E), neg_bias(1,S,S), tl_w(E,D), tl_b(1,D),
    #         n_layer * 13 per-layer weights..., out(1,S,D)]
    emb_ref, bias_ref, tlw_ref, tlb_ref = refs[0], refs[1], refs[2], refs[3]
    o_ref = refs[-1]
    layer_refs = refs[4:-1]

    H = n_head

    # --- token_linear + tanh (input_nonlinearity='tanh') ---
    x = jnp.tanh(jnp.dot(emb_ref[0], tlw_ref[...],
                         preferred_element_type=jnp.float32) + tlb_ref[...])   # [S, D]
    neg_bias = bias_ref[0]                                                     # [S, S]

    for l in range(n_layer):
        (wqkv_ref, rwb_ref, rrb_ref, krg_ref, wo_ref, ln1w_ref, ln1b_ref,
         w1_ref, b1_ref, w2_ref, b2_ref, ln2w_ref, ln2b_ref) = \
            layer_refs[l * _N_PER_LAYER:(l + 1) * _N_PER_LAYER]

        # ---- relative multi-head attention (head-batched) ----
        # NOTE: 1/sqrt(d_head) is already folded into the q-part of wqkv and into
        #       r_w_bias / r_r_bias host-side.
        d = x.shape[-1]
        xb = jnp.broadcast_to(x[None], (3 * H, seq_len, d))                    # [3H,S,D]
        qkv = jnp.einsum('hsd,hdk->hsk', xb, wqkv_ref[...],
                         preferred_element_type=jnp.float32)                   # [3H,S,DH]
        q, k, v = qkv[:H], qkv[H:2 * H], qkv[2 * H:]                           # [H,S,DH]

        # content score: ac[h,i,j] = (q + r_w_bias) . k   (pre-scaled)
        ac = jnp.einsum('hsk,htk->hst', q + rwb_ref[...], k,
                        preferred_element_type=jnp.float32)                    # [H,S,S]
        # positional score with rel-shift pre-folded into kr_g (host side):
        #   bd[h,i,j] = sum_k (q + r_r_bias)[h,i,k] * kr_g[h,i,j,k]
        bd = jnp.sum((q + rrb_ref[...])[:, :, None, :] * krg_ref[...], axis=-1)  # [H,S,S]

        score = ac + bd + neg_bias[None]                                       # mask once
        score = score - jnp.max(score, axis=-1, keepdims=True)
        p = jnp.exp(score)
        p = p * pl.reciprocal(jnp.sum(p, axis=-1, keepdims=True), approx=True)

        av = jnp.einsum('hst,htk->hsk', p, v,
                        preferred_element_type=jnp.float32)                    # [H,S,DH]
        attn = jnp.sum(jnp.einsum('hsk,hkd->hsd', av, wo_ref[...],
                                  preferred_element_type=jnp.float32), axis=0)  # [S,D]
        x = _layer_norm(attn + x, ln1w_ref[...], ln1b_ref[...])

        # ---- position-wise FFN (exact erf GELU) ----
        h1 = jnp.dot(x, w1_ref[...], preferred_element_type=jnp.float32) + b1_ref[...]
        h1 = 0.5 * h1 * (1.0 + jax.lax.erf(h1 * (1.0 / math.sqrt(2.0))))
        y = jnp.dot(h1, w2_ref[...], preferred_element_type=jnp.float32) + b2_ref[...]
        x = _layer_norm(y + x, ln2w_ref[...], ln2b_ref[...])

    o_ref[0] = x


# ------------------------------------ wrappers -------------------------------------
def _const_index_map(nd):
    return lambda b: (0,) * nd


def _prepare_kernel_weights(params, seq_len):
    """Host-side weight re-layout: per-head stacking, rel-shift gather folded into
    kr_g, and attention scale folded into the q weights / biases."""
    D, H, DH = D_MODEL, N_HEAD, D_HEAD
    scale = 1.0 / math.sqrt(DH)

    # relative sinusoid positions, attn_type='bi' (pos_seq = S .. -S+1)
    pos_seq = jnp.arange(seq_len, -seq_len, -1, dtype=jnp.float32)             # [2S]
    freq_seq = jnp.arange(0, D, 2, dtype=jnp.float32)
    inv_freq = 1.0 / (10000.0 ** (freq_seq / D))
    sinusoid = pos_seq[:, None] * inv_freq[None, :]
    pos_emb = jnp.concatenate([jnp.sin(sinusoid), jnp.cos(sinusoid)], axis=-1)  # [2S, D]
    # gathered positions: pos_g[i, j] = pos_emb[S - i + j]  (the rel-shift, done once here)
    ii = jnp.arange(seq_len)[:, None]
    jj = jnp.arange(seq_len)[None, :]
    pos_g = pos_emb[seq_len - ii + jj]                                          # [S, S, D]

    def heads(w):                      # [D, H*DH] -> [H, D, DH]
        return w.reshape(D, H, DH).transpose(1, 0, 2)

    flat = [params['token_linear_w'], params['token_linear_b']]
    for lp in params['layers']:
        wqkv = jnp.concatenate([heads(lp['wq'] * scale), heads(lp['wk']),
                                heads(lp['wv'])], axis=0)                       # [3H, D, DH]
        krg = jnp.einsum('ijd,dhk->hijk', pos_g, lp['wr'].reshape(D, H, DH))    # [H,S,S,DH]
        wo = lp['wo_t'].reshape(H, DH, D)                                       # [H, DH, D]
        rwb = (lp['r_w_bias'] * scale)[:, None, :]                              # [H, 1, DH]
        rrb = (lp['r_r_bias'] * scale)[:, None, :]
        flat += [wqkv, rwb, rrb, krg, wo, lp['attn_ln_w'], lp['attn_ln_b'],
                 lp['w1'], lp['b1'], lp['w2'], lp['b2'], lp['ff_ln_w'], lp['ff_ln_b']]
    return flat


def _fused_encoder_call(emb_cat, neg_bias, weight_arrays):
    bsz, seq, e = emb_cat.shape
    d = D_MODEL
    kernel = functools.partial(_fused_encoder_kernel, n_layer=N_LAYER,
                               n_head=N_HEAD, d_head=D_HEAD, seq_len=seq)
    weight_specs = [pl.BlockSpec(a.shape, _const_index_map(a.ndim)) for a in weight_arrays]
    return pl.pallas_call(
        kernel,
        out_shape=jax.ShapeDtypeStruct((bsz, seq, d), jnp.float32),
        grid=(bsz,),
        in_specs=[pl.BlockSpec((1, seq, e), lambda b: (b, 0, 0)),      # emb_cat
                  pl.BlockSpec((1, seq, seq), lambda b: (b, 0, 0))]    # mask bias
                 + weight_specs,
        out_specs=pl.BlockSpec((1, seq, d), lambda b: (b, 0, 0)),
        compiler_params=pltpu.CompilerParams(dimension_semantics=("parallel",)),
    )(emb_cat, neg_bias, *weight_arrays)


@jax.jit
def xlnet_lm_encoder_forward(params, input_ids, token_type_ids, pad_mask):
    bsz, seq, sub = input_ids.shape
    # --- embedding glue (data-dependent gathers / reshapes stay in plain JAX) ---
    tok_emb = jnp.take(params['token_embedding'], input_ids, axis=0)            # [B,S,SUB,D]
    type_emb = jnp.take(params['token_type_embedding'], token_type_ids, axis=0)  # [B,S,D]
    emb_cat = jnp.concatenate([tok_emb, type_emb[:, :, None, :]], axis=-2)       # [B,S,SUB+1,D]
    emb_cat = emb_cat.reshape(bsz, seq, (sub + 1) * D_MODEL)

    # --- additive mask bias from pad_mask: forbid attending to PAD keys except self ---
    eye = jnp.eye(seq, dtype=jnp.float32)
    neg_bias = -1e30 * (pad_mask.astype(jnp.float32)[:, None, :] * (1.0 - eye)[None])  # [B,S,S]

    # --- single fused Pallas kernel: token_linear+tanh and all transformer layers ---
    weight_arrays = _prepare_kernel_weights(params, seq)
    return _fused_encoder_call(emb_cat, neg_bias, weight_arrays)                # out_emb [B,S,D]


def xlnet_lm_encoder_lstm_adapter_forward(params, input_tokens, input_node_types,
                                          relative_distances, input_token_types=None,
                                          attention_mask=None, pad_mask=None,
                                          target_mapping=None, need_weights=False):
    # input_node_types / relative_distances / need_weights are ignored by the adapter.
    del input_node_types, relative_distances, attention_mask, target_mapping, need_weights
    return xlnet_lm_encoder_forward(params, input_tokens, input_token_types, pad_mask)


# --------------------------------- parameter init ----------------------------------
def _xavier(key, shape):
    fan_in = shape[0]
    fan_out = int(jnp.prod(jnp.asarray(shape[1:])))
    limit = math.sqrt(6.0 / (fan_in + fan_out))
    return jax.random.uniform(key, shape, jnp.float32, -limit, limit)


def init_params(key):
    keys = jax.random.split(key, 3 + N_LAYER)
    p = {
        'token_embedding': _xavier(keys[0], (VOCAB_SIZE, D_MODEL)),
        'token_type_embedding': _xavier(keys[1], (NUM_TOKEN_TYPES, D_MODEL)),
        'token_linear_w': _xavier(keys[2], ((SUBTOKENS + 1) * D_MODEL, D_MODEL)),
        'token_linear_b': jnp.zeros((1, D_MODEL), jnp.float32),
        # token_linear_up / language_embedding exist in __init__ but are unused here.
        'layers': [],
    }
    for l in range(N_LAYER):
        lk = jax.random.split(keys[3 + l], 9)
        p['layers'].append({
            'wq': _xavier(lk[0], (D_MODEL, N_HEAD * D_HEAD)),
            'wk': _xavier(lk[1], (D_MODEL, N_HEAD * D_HEAD)),
            'wv': _xavier(lk[2], (D_MODEL, N_HEAD * D_HEAD)),
            'wr': _xavier(lk[3], (D_MODEL, N_HEAD * D_HEAD)),
            'wo_t': _xavier(lk[4], (N_HEAD * D_HEAD, D_MODEL)),   # o projection, pre-transposed
            'r_w_bias': _xavier(lk[5], (N_HEAD, D_HEAD)),
            'r_r_bias': _xavier(lk[6], (N_HEAD, D_HEAD)),
            'attn_ln_w': jnp.ones((1, D_MODEL), jnp.float32),
            'attn_ln_b': jnp.zeros((1, D_MODEL), jnp.float32),
            'w1': _xavier(lk[7], (D_MODEL, D_INNER)),
            'b1': jnp.zeros((1, D_INNER), jnp.float32),
            'w2': _xavier(lk[8], (D_INNER, D_MODEL)),
            'b2': jnp.zeros((1, D_MODEL), jnp.float32),
            'ff_ln_w': jnp.ones((1, D_MODEL), jnp.float32),
            'ff_ln_b': jnp.zeros((1, D_MODEL), jnp.float32),
        })
    return p


# -------------------------------------- main ---------------------------------------
if __name__ == "__main__":
    key = jax.random.PRNGKey(0)
    k_tok, k_typ, k_par = jax.random.split(key, 3)

    params = init_params(k_par)
    input_tokens = jax.random.randint(k_tok, (B, S, SUBTOKENS), 0, VOCAB_SIZE, dtype=jnp.int32)
    input_token_types = jax.random.randint(k_typ, (B, S), 0, NUM_TOKEN_TYPES, dtype=jnp.int32)
    pad_mask = jnp.zeros((B, S), dtype=jnp.float32).at[:, S - 2:].set(1.0)   # last 2 = PAD
    input_node_types = jnp.zeros((B, S), dtype=jnp.int32)                    # unused by adapter
    relative_distances = []                                                  # unused by adapter

    out = xlnet_lm_encoder_lstm_adapter_forward(
        params, input_tokens, input_node_types, relative_distances,
        input_token_types=input_token_types, attention_mask=None, pad_mask=pad_mask)
    out = jax.block_until_ready(out)

    assert out.shape == (B, S, D_MODEL)
    assert bool(jnp.all(jnp.isfinite(out)))
    print("KERNEL_OK")
</pallas_src>

<mosaic_0001>
module attributes {stable_mosaic.version = 11 : i64} {
  func.func @_fused_encoder_kernel(%arg0: i32, %arg1: memref<1x8x640xf32, #tpu.memory_space<vmem>>, %arg2: memref<1x8x8xf32, #tpu.memory_space<vmem>>, %arg3: memref<640x128xf32, #tpu.memory_space<vmem>>, %arg4: memref<1x128xf32, #tpu.memory_space<vmem>>, %arg5: memref<12x128x32xf32, #tpu.memory_space<vmem>>, %arg6: memref<4x1x32xf32, #tpu.memory_space<vmem>>, %arg7: memref<4x1x32xf32, #tpu.memory_space<vmem>>, %arg8: memref<4x8x8x32xf32, #tpu.memory_space<vmem>>, %arg9: memref<4x32x128xf32, #tpu.memory_space<vmem>>, %arg10: memref<1x128xf32, #tpu.memory_space<vmem>>, %arg11: memref<1x128xf32, #tpu.memory_space<vmem>>, %arg12: memref<128x256xf32, #tpu.memory_space<vmem>>, %arg13: memref<1x256xf32, #tpu.memory_space<vmem>>, %arg14: memref<256x128xf32, #tpu.memory_space<vmem>>, %arg15: memref<1x128xf32, #tpu.memory_space<vmem>>, %arg16: memref<1x128xf32, #tpu.memory_space<vmem>>, %arg17: memref<1x128xf32, #tpu.memory_space<vmem>>, %arg18: memref<12x128x32xf32, #tpu.memory_space<vmem>>, %arg19: memref<4x1x32xf32, #tpu.memory_space<vmem>>, %arg20: memref<4x1x32xf32, #tpu.memory_space<vmem>>, %arg21: memref<4x8x8x32xf32, #tpu.memory_space<vmem>>, %arg22: memref<4x32x128xf32, #tpu.memory_space<vmem>>, %arg23: memref<1x128xf32, #tpu.memory_space<vmem>>, %arg24: memref<1x128xf32, #tpu.memory_space<vmem>>, %arg25: memref<128x256xf32, #tpu.memory_space<vmem>>, %arg26: memref<1x256xf32, #tpu.memory_space<vmem>>, %arg27: memref<256x128xf32, #tpu.memory_space<vmem>>, %arg28: memref<1x128xf32, #tpu.memory_space<vmem>>, %arg29: memref<1x128xf32, #tpu.memory_space<vmem>>, %arg30: memref<1x128xf32, #tpu.memory_space<vmem>>, %arg31: memref<1x8x128xf32, #tpu.memory_space<vmem>>) attributes {dimension_semantics = [#tpu.dimension_semantics<parallel>], iteration_bounds = array<i64: 2>, scalar_prefetch = 0 : i64, scratch_operands = 0 : i64, tpu.core_type = #tpu.core_type<tc>, window_params = [{transform_indices = @transform_0, window_bounds = array<i64: 1, 8, 640>}, {transform_indices = @transform_1, window_bounds = array<i64: 1, 8, 8>}, {pipeline_mode = #tpu.pipeline_mode<synchronous>, transform_indices = @transform_2, window_bounds = array<i64: 640, 128>}, {pipeline_mode = #tpu.pipeline_mode<synchronous>, transform_indices = @transform_3, window_bounds = array<i64: 1, 128>}, {pipeline_mode = #tpu.pipeline_mode<synchronous>, transform_indices = @transform_4, window_bounds = array<i64: 12, 128, 32>}, {pipeline_mode = #tpu.pipeline_mode<synchronous>, transform_indices = @transform_5, window_bounds = array<i64: 4, 1, 32>}, {pipeline_mode = #tpu.pipeline_mode<synchronous>, transform_indices = @transform_6, window_bounds = array<i64: 4, 1, 32>}, {pipeline_mode = #tpu.pipeline_mode<synchronous>, transform_indices = @transform_7, window_bounds = array<i64: 4, 8, 8, 32>}, {pipeline_mode = #tpu.pipeline_mode<synchronous>, transform_indices = @transform_8, window_bounds = array<i64: 4, 32, 128>}, {pipeline_mode = #tpu.pipeline_mode<synchronous>, transform_indices = @transform_9, window_bounds = array<i64: 1, 128>}, {pipeline_mode = #tpu.pipeline_mode<synchronous>, transform_indices = @transform_10, window_bounds = array<i64: 1, 128>}, {pipeline_mode = #tpu.pipeline_mode<synchronous>, transform_indices = @transform_11, window_bounds = array<i64: 128, 256>}, {pipeline_mode = #tpu.pipeline_mode<synchronous>, transform_indices = @transform_12, window_bounds = array<i64: 1, 256>}, {pipeline_mode = #tpu.pipeline_mode<synchronous>, transform_indices = @transform_13, window_bounds = array<i64: 256, 128>}, {pipeline_mode = #tpu.pipeline_mode<synchronous>, transform_indices = @transform_14, window_bounds = array<i64: 1, 128>}, {pipeline_mode = #tpu.pipeline_mode<synchronous>, transform_indices = @transform_15, window_bounds = array<i64: 1, 128>}, {pipeline_mode = #tpu.pipeline_mode<synchronous>, transform_indices = @transform_16, window_bounds = array<i64: 1, 128>}, {pipeline_mode = #tpu.pipeline_mode<synchronous>, transform_indices = @transform_17, window_bounds = array<i64: 12, 128, 32>}, {pipeline_mode = #tpu.pipeline_mode<synchronous>, transform_indices = @transform_18, window_bounds = array<i64: 4, 1, 32>}, {pipeline_mode = #tpu.pipeline_mode<synchronous>, transform_indices = @transform_19, window_bounds = array<i64: 4, 1, 32>}, {pipeline_mode = #tpu.pipeline_mode<synchronous>, transform_indices = @transform_20, window_bounds = array<i64: 4, 8, 8, 32>}, {pipeline_mode = #tpu.pipeline_mode<synchronous>, transform_indices = @transform_21, window_bounds = array<i64: 4, 32, 128>}, {pipeline_mode = #tpu.pipeline_mode<synchronous>, transform_indices = @transform_22, window_bounds = array<i64: 1, 128>}, {pipeline_mode = #tpu.pipeline_mode<synchronous>, transform_indices = @transform_23, window_bounds = array<i64: 1, 128>}, {pipeline_mode = #tpu.pipeline_mode<synchronous>, transform_indices = @transform_24, window_bounds = array<i64: 128, 256>}, {pipeline_mode = #tpu.pipeline_mode<synchronous>, transform_indices = @transform_25, window_bounds = array<i64: 1, 256>}, {pipeline_mode = #tpu.pipeline_mode<synchronous>, transform_indices = @transform_26, window_bounds = array<i64: 256, 128>}, {pipeline_mode = #tpu.pipeline_mode<synchronous>, transform_indices = @transform_27, window_bounds = array<i64: 1, 128>}, {pipeline_mode = #tpu.pipeline_mode<synchronous>, transform_indices = @transform_28, window_bounds = array<i64: 1, 128>}, {pipeline_mode = #tpu.pipeline_mode<synchronous>, transform_indices = @transform_29, window_bounds = array<i64: 1, 128>}, {transform_indices = @transform_30, window_bounds = array<i64: 1, 8, 128>}]} {
    %c0 = arith.constant 0 : index
    %c0_0 = arith.constant 0 : index
    %c0_1 = arith.constant 0 : index
    %0 = vector.load %arg1[%c0, %c0_0, %c0_1] : memref<1x8x640xf32, #tpu.memory_space<vmem>>, vector<1x8x640xf32>
    %1 = vector.shape_cast %0 : vector<1x8x640xf32> to vector<8x640xf32>
    %c0_2 = arith.constant 0 : index
    %c0_3 = arith.constant 0 : index
    %2 = vector.load %arg3[%c0_2, %c0_3] : memref<640x128xf32, #tpu.memory_space<vmem>>, vector<640x128xf32>
    %cst = arith.constant dense<0.000000e+00> : vector<8x128xf32>
    %3 = tpu.matmul %1, %2, %cst {dimension_numbers = #tpu.dot_dimension_numbers<[1], [0], [0], [1], [0, 0, 1, 1], [], []>} : vector<8x640xf32>, vector<640x128xf32>, vector<8x128xf32> -> vector<8x128xf32>
    %c0_4 = arith.constant 0 : index
    %c0_5 = arith.constant 0 : index
    %4 = vector.load %arg4[%c0_4, %c0_5] : memref<1x128xf32, #tpu.memory_space<vmem>>, vector<1x128xf32>
    %5 = vector.broadcast %4 : vector<1x128xf32> to vector<8x128xf32>
    %6 = arith.addf %3, %5 : vector<8x128xf32>
    %7 = math.tanh %6 : vector<8x128xf32>
    %c0_6 = arith.constant 0 : index
    %c0_7 = arith.constant 0 : index
    %c0_8 = arith.constant 0 : index
    %8 = vector.load %arg2[%c0_6, %c0_7, %c0_8] : memref<1x8x8xf32, #tpu.memory_space<vmem>>, vector<1x8x8xf32>
    %9 = vector.shape_cast %8 : vector<1x8x8xf32> to vector<8x8xf32>
    %10 = vector.shape_cast %7 : vector<8x128xf32> to vector<1x8x128xf32>
    %11 = vector.shape_cast %10 : vector<1x8x128xf32> to vector<1x8x128xf32>
    %12 = vector.broadcast %11 : vector<1x8x128xf32> to vector<12x8x128xf32>
    %c0_9 = arith.constant 0 : index
    %c0_10 = arith.constant 0 : index
    %c0_11 = arith.constant 0 : index
    %13 = vector.load %arg5[%c0_9, %c0_10, %c0_11] : memref<12x128x32xf32, #tpu.memory_space<vmem>>, vector<12x128x32xf32>
    "tpu.trace_start"() <{level = 10 : i32, message = "hsd,hdk->hsk"}> : () -> ()
    %cst_12 = arith.constant dense<0.000000e+00> : vector<12x8x32xf32>
    %14 = tpu.matmul %12, %13, %cst_12 {dimension_numbers = #tpu.dot_dimension_numbers<[2], [1], [1], [2], [0, 0, 0, 1, 1, 2], [0], [0]>} : vector<12x8x128xf32>, vector<12x128x32xf32>, vector<12x8x32xf32> -> vector<12x8x32xf32>
    "tpu.trace_stop"() : () -> ()
    %15 = vector.extract_strided_slice %14 {offsets = [0, 0, 0], sizes = [4, 8, 32], strides = [1, 1, 1]} : vector<12x8x32xf32> to vector<4x8x32xf32>
    %16 = vector.extract_strided_slice %14 {offsets = [4, 0, 0], sizes = [4, 8, 32], strides = [1, 1, 1]} : vector<12x8x32xf32> to vector<4x8x32xf32>
    %17 = vector.extract_strided_slice %14 {offsets = [8, 0, 0], sizes = [4, 8, 32], strides = [1, 1, 1]} : vector<12x8x32xf32> to vector<4x8x32xf32>
    %c0_13 = arith.constant 0 : index
    %c0_14 = arith.constant 0 : index
    %c0_15 = arith.constant 0 : index
    %18 = vector.load %arg6[%c0_13, %c0_14, %c0_15] : memref<4x1x32xf32, #tpu.memory_space<vmem>>, vector<4x1x32xf32>
    %19 = vector.broadcast %18 : vector<4x1x32xf32> to vector<4x8x32xf32>
    %20 = arith.addf %15, %19 : vector<4x8x32xf32>
    "tpu.trace_start"() <{level = 10 : i32, message = "hsk,htk->hst"}> : () -> ()
    %cst_16 = arith.constant dense<0.000000e+00> : vector<4x8x8xf32>
    %21 = tpu.matmul %20, %16, %cst_16 {dimension_numbers = #tpu.dot_dimension_numbers<[2], [2], [1], [1], [0, 0, 0, 1, 1, 1], [0], [0]>} : vector<4x8x32xf32>, vector<4x8x32xf32>, vector<4x8x8xf32> -> vector<4x8x8xf32>
    "tpu.trace_stop"() : () -> ()
    %c0_17 = arith.constant 0 : index
    %c0_18 = arith.constant 0 : index
    %c0_19 = arith.constant 0 : index
    %22 = vector.load %arg7[%c0_17, %c0_18, %c0_19] : memref<4x1x32xf32, #tpu.memory_space<vmem>>, vector<4x1x32xf32>
    %23 = vector.broadcast %22 : vector<4x1x32xf32> to vector<4x8x32xf32>
    %24 = arith.addf %15, %23 : vector<4x8x32xf32>
    %25 = vector.shape_cast %24 : vector<4x8x32xf32> to vector<4x8x1x32xf32>
    %c0_20 = arith.constant 0 : index
    %c0_21 = arith.constant 0 : index
    %c0_22 = arith.constant 0 : index
    %c0_23 = arith.constant 0 : index
    %26 = vector.load %arg8[%c0_20, %c0_21, %c0_22, %c0_23] : memref<4x8x8x32xf32, #tpu.memory_space<vmem>>, vector<4x8x8x32xf32>
    %27 = vector.broadcast %25 : vector<4x8x1x32xf32> to vector<4x8x8x32xf32>
    %28 = arith.mulf %27, %26 : vector<4x8x8x32xf32>
    %cst_24 = arith.constant dense<0.000000e+00> : vector<4x8x8xf32>
    %29 = vector.multi_reduction <add>, %28, %cst_24 [3] : vector<4x8x8x32xf32> to vector<4x8x8xf32>
    %30 = arith.addf %21, %29 : vector<4x8x8xf32>
    %31 = vector.shape_cast %9 : vector<8x8xf32> to vector<1x8x8xf32>
    %32 = vector.broadcast %31 : vector<1x8x8xf32> to vector<4x8x8xf32>
    %33 = arith.addf %30, %32 : vector<4x8x8xf32>
    %cst_25 = arith.constant dense<0xFF800000> : vector<4x8xf32>
    %34 = vector.multi_reduction <maximumf>, %33, %cst_25 [2] : vector<4x8x8xf32> to vector<4x8xf32>
    %35 = vector.shape_cast %34 : vector<4x8xf32> to vector<4x8x1xf32>
    %36 = vector.broadcast %35 : vector<4x8x1xf32> to vector<4x8x8xf32>
    %37 = arith.subf %33, %36 : vector<4x8x8xf32>
    %38 = math.exp %37 : vector<4x8x8xf32>
    %cst_26 = arith.constant dense<0.000000e+00> : vector<4x8xf32>
    %39 = vector.multi_reduction <add>, %38, %cst_26 [2] : vector<4x8x8xf32> to vector<4x8xf32>
    %40 = vector.shape_cast %39 : vector<4x8xf32> to vector<4x8x1xf32>
    %41 = tpu.reciprocal %40 {approx = true} : vector<4x8x1xf32> -> vector<4x8x1xf32>
    %42 = vector.broadcast %41 : vector<4x8x1xf32> to vector<4x8x8xf32>
    %43 = arith.mulf %38, %42 : vector<4x8x8xf32>
    "tpu.trace_start"() <{level = 10 : i32, message = "hst,htk->hsk"}> : () -> ()
    %cst_27 = arith.constant dense<0.000000e+00> : vector<4x8x32xf32>
    %44 = tpu.matmul %43, %17, %cst_27 {dimension_numbers = #tpu.dot_dimension_numbers<[2], [1], [1], [2], [0, 0, 0, 1, 1, 2], [0], [0]>} : vector<4x8x8xf32>, vector<4x8x32xf32>, vector<4x8x32xf32> -> vector<4x8x32xf32>
    "tpu.trace_stop"() : () -> ()
    %c0_28 = arith.constant 0 : index
    %c0_29 = arith.constant 0 : index
    %c0_30 = arith.constant 0 : index
    %45 = vector.load %arg9[%c0_28, %c0_29, %c0_30] : memref<4x32x128xf32, #tpu.memory_space<vmem>>, vector<4x32x128xf32>
    "tpu.trace_start"() <{level = 10 : i32, message = "hsk,hkd->hsd"}> : () -> ()
    %cst_31 = arith.constant dense<0.000000e+00> : vector<4x8x128xf32>
    %46 = tpu.matmul %44, %45, %cst_31 {dimension_numbers = #tpu.dot_dimension_numbers<[2], [1], [1], [2], [0, 0, 0, 1, 1, 2], [0], [0]>} : vector<4x8x32xf32>, vector<4x32x128xf32>, vector<4x8x128xf32> -> vector<4x8x128xf32>
    "tpu.trace_stop"() : () -> ()
    %cst_32 = arith.constant dense<0.000000e+00> : vector<8x128xf32>
    %47 = vector.multi_reduction <add>, %46, %cst_32 [0] : vector<4x8x128xf32> to vector<8x128xf32>
    %48 = arith.addf %47, %7 : vector<8x128xf32>
    %c0_33 = arith.constant 0 : index
    %c0_34 = arith.constant 0 : index
    %49 = vector.load %arg10[%c0_33, %c0_34] : memref<1x128xf32, #tpu.memory_space<vmem>>, vector<1x128xf32>
    %c0_35 = arith.constant 0 : index
    %c0_36 = arith.constant 0 : index
    %50 = vector.load %arg11[%c0_35, %c0_36] : memref<1x128xf32, #tpu.memory_space<vmem>>, vector<1x128xf32>
    %cst_37 = arith.constant dense<0.000000e+00> : vector<8xf32>
    %51 = vector.multi_reduction <add>, %48, %cst_37 [1] : vector<8x128xf32> to vector<8xf32>
    %52 = vector.shape_cast %51 : vector<8xf32> to vector<8x1xf32>
    %cst_38 = arith.constant 1.280000e+02 : f32
    %53 = vector.broadcast %cst_38 : f32 to vector<8x1xf32>
    %54 = arith.divf %52, %53 : vector<8x1xf32>
    %55 = vector.broadcast %54 : vector<8x1xf32> to vector<8x128xf32>
    %56 = arith.subf %48, %55 : vector<8x128xf32>
    %57 = arith.mulf %56, %56 : vector<8x128xf32>
    %cst_39 = arith.constant dense<0.000000e+00> : vector<8xf32>
    %58 = vector.multi_reduction <add>, %57, %cst_39 [1] : vector<8x128xf32> to vector<8xf32>
    %59 = vector.shape_cast %58 : vector<8xf32> to vector<8x1xf32>
    %cst_40 = arith.constant 1.280000e+02 : f32
    %60 = vector.broadcast %cst_40 : f32 to vector<8x1xf32>
    %61 = arith.divf %59, %60 : vector<8x1xf32>
    %62 = vector.broadcast %54 : vector<8x1xf32> to vector<8x128xf32>
    %63 = arith.subf %48, %62 : vector<8x128xf32>
    %cst_41 = arith.constant 9.99999996E-13 : f32
    %64 = vector.broadcast %cst_41 : f32 to vector<8x1xf32>
    %65 = arith.addf %61, %64 : vector<8x1xf32>
    %66 = math.rsqrt %65 : vector<8x1xf32>
    %67 = vector.broadcast %66 : vector<8x1xf32> to vector<8x128xf32>
    %68 = arith.mulf %63, %67 : vector<8x128xf32>
    %69 = vector.broadcast %49 : vector<1x128xf32> to vector<8x128xf32>
    %70 = arith.mulf %68, %69 : vector<8x128xf32>
    %71 = vector.broadcast %50 : vector<1x128xf32> to vector<8x128xf32>
    %72 = arith.addf %70, %71 : vector<8x128xf32>
    %c0_42 = arith.constant 0 : index
    %c0_43 = arith.constant 0 : index
    %73 = vector.load %arg12[%c0_42, %c0_43] : memref<128x256xf32, #tpu.memory_space<vmem>>, vector<128x256xf32>
    %cst_44 = arith.constant dense<0.000000e+00> : vector<8x256xf32>
    %74 = tpu.matmul %72, %73, %cst_44 {dimension_numbers = #tpu.dot_dimension_numbers<[1], [0], [0], [1], [0, 0, 1, 1], [], []>} : vector<8x128xf32>, vector<128x256xf32>, vector<8x256xf32> -> vector<8x256xf32>
    %c0_45 = arith.constant 0 : index
    %c0_46 = arith.constant 0 : index
    %75 = vector.load %arg13[%c0_45, %c0_46] : memref<1x256xf32, #tpu.memory_space<vmem>>, vector<1x256xf32>
    %76 = vector.broadcast %75 : vector<1x256xf32> to vector<8x256xf32>
    %77 = arith.addf %74, %76 : vector<8x256xf32>
    %cst_47 = arith.constant 5.000000e-01 : f32
    %78 = vector.broadcast %cst_47 : f32 to vector<8x256xf32>
    %79 = arith.mulf %78, %77 : vector<8x256xf32>
    %cst_48 = arith.constant 0.707106769 : f32
    %80 = vector.broadcast %cst_48 : f32 to vector<8x256xf32>
    %81 = arith.mulf %77, %80 : vector<8x256xf32>
    %82 = math.erf %81 : vector<8x256xf32>
    %cst_49 = arith.constant 1.000000e+00 : f32
    %83 = vector.broadcast %cst_49 : f32 to vector<8x256xf32>
    %84 = arith.addf %83, %82 : vector<8x256xf32>
    %85 = arith.mulf %79, %84 : vector<8x256xf32>
    %c0_50 = arith.constant 0 : index
    %c0_51 = arith.constant 0 : index
    %86 = vector.load %arg14[%c0_50, %c0_51] : memref<256x128xf32, #tpu.memory_space<vmem>>, vector<256x128xf32>
    %cst_52 = arith.constant dense<0.000000e+00> : vector<8x128xf32>
    %87 = tpu.matmul %85, %86, %cst_52 {dimension_numbers = #tpu.dot_dimension_numbers<[1], [0], [0], [1], [0, 0, 1, 1], [], []>} : vector<8x256xf32>, vector<256x128xf32>, vector<8x128xf32> -> vector<8x128xf32>
    %c0_53 = arith.constant 0 : index
    %c0_54 = arith.constant 0 : index
    %88 = vector.load %arg15[%c0_53, %c0_54] : memref<1x128xf32, #tpu.memory_space<vmem>>, vector<1x128xf32>
    %89 = vector.broadcast %88 : vector<1x128xf32> to vector<8x128xf32>
    %90 = arith.addf %87, %89 : vector<8x128xf32>
    %91 = arith.addf %90, %72 : vector<8x128xf32>
    %c0_55 = arith.constant 0 : index
    %c0_56 = arith.constant 0 : index
    %92 = vector.load %arg16[%c0_55, %c0_56] : memref<1x128xf32, #tpu.memory_space<vmem>>, vector<1x128xf32>
    %c0_57 = arith.constant 0 : index
    %c0_58 = arith.constant 0 : index
    %93 = vector.load %arg17[%c0_57, %c0_58] : memref<1x128xf32, #tpu.memory_space<vmem>>, vector<1x128xf32>
    %cst_59 = arith.constant dense<0.000000e+00> : vector<8xf32>
    %94 = vector.multi_reduction <add>, %91, %cst_59 [1] : vector<8x128xf32> to vector<8xf32>
    %95 = vector.shape_cast %94 : vector<8xf32> to vector<8x1xf32>
    %cst_60 = arith.constant 1.280000e+02 : f32
    %96 = vector.broadcast %cst_60 : f32 to vector<8x1xf32>
    %97 = arith.divf %95, %96 : vector<8x1xf32>
    %98 = vector.broadcast %97 : vector<8x1xf32> to vector<8x128xf32>
    %99 = arith.subf %91, %98 : vector<8x128xf32>
    %100 = arith.mulf %99, %99 : vector<8x128xf32>
    %cst_61 = arith.constant dense<0.000000e+00> : vector<8xf32>
    %101 = vector.multi_reduction <add>, %100, %cst_61 [1] : vector<8x128xf32> to vector<8xf32>
    %102 = vector.shape_cast %101 : vector<8xf32> to vector<8x1xf32>
    %cst_62 = arith.constant 1.280000e+02 : f32
    %103 = vector.broadcast %cst_62 : f32 to vector<8x1xf32>
    %104 = arith.divf %102, %103 : vector<8x1xf32>
    %105 = vector.broadcast %97 : vector<8x1xf32> to vector<8x128xf32>
    %106 = arith.subf %91, %105 : vector<8x128xf32>
    %cst_63 = arith.constant 9.99999996E-13 : f32
    %107 = vector.broadcast %cst_63 : f32 to vector<8x1xf32>
    %108 = arith.addf %104, %107 : vector<8x1xf32>
    %109 = math.rsqrt %108 : vector<8x1xf32>
    %110 = vector.broadcast %109 : vector<8x1xf32> to vector<8x128xf32>
    %111 = arith.mulf %106, %110 : vector<8x128xf32>
    %112 = vector.broadcast %92 : vector<1x128xf32> to vector<8x128xf32>
    %113 = arith.mulf %111, %112 : vector<8x128xf32>
    %114 = vector.broadcast %93 : vector<1x128xf32> to vector<8x128xf32>
    %115 = arith.addf %113, %114 : vector<8x128xf32>
    %116 = vector.shape_cast %115 : vector<8x128xf32> to vector<1x8x128xf32>
    %117 = vector.shape_cast %116 : vector<1x8x128xf32> to vector<1x8x128xf32>
    %118 = vector.broadcast %117 : vector<1x8x128xf32> to vector<12x8x128xf32>
    %c0_64 = arith.constant 0 : index
    %c0_65 = arith.constant 0 : index
    %c0_66 = arith.constant 0 : index
    %119 = vector.load %arg18[%c0_64, %c0_65, %c0_66] : memref<12x128x32xf32, #tpu.memory_space<vmem>>, vector<12x128x32xf32>
    "tpu.trace_start"() <{level = 10 : i32, message = "hsd,hdk->hsk"}> : () -> ()
    %cst_67 = arith.constant dense<0.000000e+00> : vector<12x8x32xf32>
    %120 = tpu.matmul %118, %119, %cst_67 {dimension_numbers = #tpu.dot_dimension_numbers<[2], [1], [1], [2], [0, 0, 0, 1, 1, 2], [0], [0]>} : vector<12x8x128xf32>, vector<12x128x32xf32>, vector<12x8x32xf32> -> vector<12x8x32xf32>
    "tpu.trace_stop"() : () -> ()
    %121 = vector.extract_strided_slice %120 {offsets = [0, 0, 0], sizes = [4, 8, 32], strides = [1, 1, 1]} : vector<12x8x32xf32> to vector<4x8x32xf32>
    %122 = vector.extract_strided_slice %120 {offsets = [4, 0, 0], sizes = [4, 8, 32], strides = [1, 1, 1]} : vector<12x8x32xf32> to vector<4x8x32xf32>
    %123 = vector.extract_strided_slice %120 {offsets = [8, 0, 0], sizes = [4, 8, 32], strides = [1, 1, 1]} : vector<12x8x32xf32> to vector<4x8x32xf32>
    %c0_68 = arith.constant 0 : index
    %c0_69 = arith.constant 0 : index
    %c0_70 = arith.constant 0 : index
    %124 = vector.load %arg19[%c0_68, %c0_69, %c0_70] : memref<4x1x32xf32, #tpu.memory_space<vmem>>, vector<4x1x32xf32>
    %125 = vector.broadcast %124 : vector<4x1x32xf32> to vector<4x8x32xf32>
    %126 = arith.addf %121, %125 : vector<4x8x32xf32>
    "tpu.trace_start"() <{level = 10 : i32, message = "hsk,htk->hst"}> : () -> ()
    %cst_71 = arith.constant dense<0.000000e+00> : vector<4x8x8xf32>
    %127 = tpu.matmul %126, %122, %cst_71 {dimension_numbers = #tpu.dot_dimension_numbers<[2], [2], [1], [1], [0, 0, 0, 1, 1, 1], [0], [0]>} : vector<4x8x32xf32>, vector<4x8x32xf32>, vector<4x8x8xf32> -> vector<4x8x8xf32>
    "tpu.trace_stop"() : () -> ()
    %c0_72 = arith.constant 0 : index
    %c0_73 = arith.constant 0 : index
    %c0_74 = arith.constant 0 : index
    %128 = vector.load %arg20[%c0_72, %c0_73, %c0_74] : memref<4x1x32xf32, #tpu.memory_space<vmem>>, vector<4x1x32xf32>
    %129 = vector.broadcast %128 : vector<4x1x32xf32> to vector<4x8x32xf32>
    %130 = arith.addf %121, %129 : vector<4x8x32xf32>
    %131 = vector.shape_cast %130 : vector<4x8x32xf32> to vector<4x8x1x32xf32>
    %c0_75 = arith.constant 0 : index
    %c0_76 = arith.constant 0 : index
    %c0_77 = arith.constant 0 : index
    %c0_78 = arith.constant 0 : index
    %132 = vector.load %arg21[%c0_75, %c0_76, %c0_77, %c0_78] : memref<4x8x8x32xf32, #tpu.memory_space<vmem>>, vector<4x8x8x32xf32>
    %133 = vector.broadcast %131 : vector<4x8x1x32xf32> to vector<4x8x8x32xf32>
    %134 = arith.mulf %133, %132 : vector<4x8x8x32xf32>
    %cst_79 = arith.constant dense<0.000000e+00> : vector<4x8x8xf32>
    %135 = vector.multi_reduction <add>, %134, %cst_79 [3] : vector<4x8x8x32xf32> to vector<4x8x8xf32>
    %136 = arith.addf %127, %135 : vector<4x8x8xf32>
    %137 = vector.shape_cast %9 : vector<8x8xf32> to vector<1x8x8xf32>
    %138 = vector.broadcast %137 : vector<1x8x8xf32> to vector<4x8x8xf32>
    %139 = arith.addf %136, %138 : vector<4x8x8xf32>
    %cst_80 = arith.constant dense<0xFF800000> : vector<4x8xf32>
    %140 = vector.multi_reduction <maximumf>, %139, %cst_80 [2] : vector<4x8x8xf32> to vector<4x8xf32>
    %141 = vector.shape_cast %140 : vector<4x8xf32> to vector<4x8x1xf32>
    %142 = vector.broadcast %141 : vector<4x8x1xf32> to vector<4x8x8xf32>
    %143 = arith.subf %139, %142 : vector<4x8x8xf32>
    %144 = math.exp %143 : vector<4x8x8xf32>
    %cst_81 = arith.constant dense<0.000000e+00> : vector<4x8xf32>
    %145 = vector.multi_reduction <add>, %144, %cst_81 [2] : vector<4x8x8xf32> to vector<4x8xf32>
    %146 = vector.shape_cast %145 : vector<4x8xf32> to vector<4x8x1xf32>
    %147 = tpu.reciprocal %146 {approx = true} : vector<4x8x1xf32> -> vector<4x8x1xf32>
    %148 = vector.broadcast %147 : vector<4x8x1xf32> to vector<4x8x8xf32>
    %149 = arith.mulf %144, %148 : vector<4x8x8xf32>
    "tpu.trace_start"() <{level = 10 : i32, message = "hst,htk->hsk"}> : () -> ()
    %cst_82 = arith.constant dense<0.000000e+00> : vector<4x8x32xf32>
    %150 = tpu.matmul %149, %123, %cst_82 {dimension_numbers = #tpu.dot_dimension_numbers<[2], [1], [1], [2], [0, 0, 0, 1, 1, 2], [0], [0]>} : vector<4x8x8xf32>, vector<4x8x32xf32>, vector<4x8x32xf32> -> vector<4x8x32xf32>
    "tpu.trace_stop"() : () -> ()
    %c0_83 = arith.constant 0 : index
    %c0_84 = arith.constant 0 : index
    %c0_85 = arith.constant 0 : index
    %151 = vector.load %arg22[%c0_83, %c0_84, %c0_85] : memref<4x32x128xf32, #tpu.memory_space<vmem>>, vector<4x32x128xf32>
    "tpu.trace_start"() <{level = 10 : i32, message = "hsk,hkd->hsd"}> : () -> ()
    %cst_86 = arith.constant dense<0.000000e+00> : vector<4x8x128xf32>
    %152 = tpu.matmul %150, %151, %cst_86 {dimension_numbers = #tpu.dot_dimension_numbers<[2], [1], [1], [2], [0, 0, 0, 1, 1, 2], [0], [0]>} : vector<4x8x32xf32>, vector<4x32x128xf32>, vector<4x8x128xf32> -> vector<4x8x128xf32>
    "tpu.trace_stop"() : () -> ()
    %cst_87 = arith.constant dense<0.000000e+00> : vector<8x128xf32>
    %153 = vector.multi_reduction <add>, %152, %cst_87 [0] : vector<4x8x128xf32> to vector<8x128xf32>
    %154 = arith.addf %153, %115 : vector<8x128xf32>
    %c0_88 = arith.constant 0 : index
    %c0_89 = arith.constant 0 : index
    %155 = vector.load %arg23[%c0_88, %c0_89] : memref<1x128xf32, #tpu.memory_space<vmem>>, vector<1x128xf32>
    %c0_90 = arith.constant 0 : index
    %c0_91 = arith.constant 0 : index
    %156 = vector.load %arg24[%c0_90, %c0_91] : memref<1x128xf32, #tpu.memory_space<vmem>>, vector<1x128xf32>
    %cst_92 = arith.constant dense<0.000000e+00> : vector<8xf32>
    %157 = vector.multi_reduction <add>, %154, %cst_92 [1] : vector<8x128xf32> to vector<8xf32>
    %158 = vector.shape_cast %157 : vector<8xf32> to vector<8x1xf32>
    %cst_93 = arith.constant 1.280000e+02 : f32
    %159 = vector.broadcast %cst_93 : f32 to vector<8x1xf32>
    %160 = arith.divf %158, %159 : vector<8x1xf32>
    %161 = vector.broadcast %160 : vector<8x1xf32> to vector<8x128xf32>
    %162 = arith.subf %154, %161 : vector<8x128xf32>
    %163 = arith.mulf %162, %162 : vector<8x128xf32>
    %cst_94 = arith.constant dense<0.000000e+00> : vector<8xf32>
    %164 = vector.multi_reduction <add>, %163, %cst_94 [1] : vector<8x128xf32> to vector<8xf32>
    %165 = vector.shape_cast %164 : vector<8xf32> to vector<8x1xf32>
    %cst_95 = arith.constant 1.280000e+02 : f32
    %166 = vector.broadcast %cst_95 : f32 to vector<8x1xf32>
    %167 = arith.divf %165, %166 : vector<8x1xf32>
    %168 = vector.broadcast %160 : vector<8x1xf32> to vector<8x128xf32>
    %169 = arith.subf %154, %168 : vector<8x128xf32>
    %cst_96 = arith.constant 9.99999996E-13 : f32
    %170 = vector.broadcast %cst_96 : f32 to vector<8x1xf32>
    %171 = arith.addf %167, %170 : vector<8x1xf32>
    %172 = math.rsqrt %171 : vector<8x1xf32>
    %173 = vector.broadcast %172 : vector<8x1xf32> to vector<8x128xf32>
    %174 = arith.mulf %169, %173 : vector<8x128xf32>
    %175 = vector.broadcast %155 : vector<1x128xf32> to vector<8x128xf32>
    %176 = arith.mulf %174, %175 : vector<8x128xf32>
    %177 = vector.broadcast %156 : vector<1x128xf32> to vector<8x128xf32>
    %178 = arith.addf %176, %177 : vector<8x128xf32>
    %c0_97 = arith.constant 0 : index
    %c0_98 = arith.constant 0 : index
    %179 = vector.load %arg25[%c0_97, %c0_98] : memref<128x256xf32, #tpu.memory_space<vmem>>, vector<128x256xf32>
    %cst_99 = arith.constant dense<0.000000e+00> : vector<8x256xf32>
    %180 = tpu.matmul %178, %179, %cst_99 {dimension_numbers = #tpu.dot_dimension_numbers<[1], [0], [0], [1], [0, 0, 1, 1], [], []>} : vector<8x128xf32>, vector<128x256xf32>, vector<8x256xf32> -> vector<8x256xf32>
    %c0_100 = arith.constant 0 : index
    %c0_101 = arith.constant 0 : index
    %181 = vector.load %arg26[%c0_100, %c0_101] : memref<1x256xf32, #tpu.memory_space<vmem>>, vector<1x256xf32>
    %182 = vector.broadcast %181 : vector<1x256xf32> to vector<8x256xf32>
    %183 = arith.addf %180, %182 : vector<8x256xf32>
    %cst_102 = arith.constant 5.000000e-01 : f32
    %184 = vector.broadcast %cst_102 : f32 to vector<8x256xf32>
    %185 = arith.mulf %184, %183 : vector<8x256xf32>
    %cst_103 = arith.constant 0.707106769 : f32
    %186 = vector.broadcast %cst_103 : f32 to vector<8x256xf32>
    %187 = arith.mulf %183, %186 : vector<8x256xf32>
    %188 = math.erf %187 : vector<8x256xf32>
    %cst_104 = arith.constant 1.000000e+00 : f32
    %189 = vector.broadcast %cst_104 : f32 to vector<8x256xf32>
    %190 = arith.addf %189, %188 : vector<8x256xf32>
    %191 = arith.mulf %185, %190 : vector<8x256xf32>
    %c0_105 = arith.constant 0 : index
    %c0_106 = arith.constant 0 : index
    %192 = vector.load %arg27[%c0_105, %c0_106] : memref<256x128xf32, #tpu.memory_space<vmem>>, vector<256x128xf32>
    %cst_107 = arith.constant dense<0.000000e+00> : vector<8x128xf32>
    %193 = tpu.matmul %191, %192, %cst_107 {dimension_numbers = #tpu.dot_dimension_numbers<[1], [0], [0], [1], [0, 0, 1, 1], [], []>} : vector<8x256xf32>, vector<256x128xf32>, vector<8x128xf32> -> vector<8x128xf32>
    %c0_108 = arith.constant 0 : index
    %c0_109 = arith.constant 0 : index
    %194 = vector.load %arg28[%c0_108, %c0_109] : memref<1x128xf32, #tpu.memory_space<vmem>>, vector<1x128xf32>
    %195 = vector.broadcast %194 : vector<1x128xf32> to vector<8x128xf32>
    %196 = arith.addf %193, %195 : vector<8x128xf32>
    %197 = arith.addf %196, %178 : vector<8x128xf32>
    %c0_110 = arith.constant 0 : index
    %c0_111 = arith.constant 0 : index
    %198 = vector.load %arg29[%c0_110, %c0_111] : memref<1x128xf32, #tpu.memory_space<vmem>>, vector<1x128xf32>
    %c0_112 = arith.constant 0 : index
    %c0_113 = arith.constant 0 : index
    %199 = vector.load %arg30[%c0_112, %c0_113] : memref<1x128xf32, #tpu.memory_space<vmem>>, vector<1x128xf32>
    %cst_114 = arith.constant dense<0.000000e+00> : vector<8xf32>
    %200 = vector.multi_reduction <add>, %197, %cst_114 [1] : vector<8x128xf32> to vector<8xf32>
    %201 = vector.shape_cast %200 : vector<8xf32> to vector<8x1xf32>
    %cst_115 = arith.constant 1.280000e+02 : f32
    %202 = vector.broadcast %cst_115 : f32 to vector<8x1xf32>
    %203 = arith.divf %201, %202 : vector<8x1xf32>
    %204 = vector.broadcast %203 : vector<8x1xf32> to vector<8x128xf32>
    %205 = arith.subf %197, %204 : vector<8x128xf32>
    %206 = arith.mulf %205, %205 : vector<8x128xf32>
    %cst_116 = arith.constant dense<0.000000e+00> : vector<8xf32>
    %207 = vector.multi_reduction <add>, %206, %cst_116 [1] : vector<8x128xf32> to vector<8xf32>
    %208 = vector.shape_cast %207 : vector<8xf32> to vector<8x1xf32>
    %cst_117 = arith.constant 1.280000e+02 : f32
    %209 = vector.broadcast %cst_117 : f32 to vector<8x1xf32>
    %210 = arith.divf %208, %209 : vector<8x1xf32>
    %211 = vector.broadcast %203 : vector<8x1xf32> to vector<8x128xf32>
    %212 = arith.subf %197, %211 : vector<8x128xf32>
    %cst_118 = arith.constant 9.99999996E-13 : f32
    %213 = vector.broadcast %cst_118 : f32 to vector<8x1xf32>
    %214 = arith.addf %210, %213 : vector<8x1xf32>
    %215 = math.rsqrt %214 : vector<8x1xf32>
    %216 = vector.broadcast %215 : vector<8x1xf32> to vector<8x128xf32>
    %217 = arith.mulf %212, %216 : vector<8x128xf32>
    %218 = vector.broadcast %198 : vector<1x128xf32> to vector<8x128xf32>
    %219 = arith.mulf %217, %218 : vector<8x128xf32>
    %220 = vector.broadcast %199 : vector<1x128xf32> to vector<8x128xf32>
    %221 = arith.addf %219, %220 : vector<8x128xf32>
    %c0_119 = arith.constant 0 : index
    %c0_120 = arith.constant 0 : index
    %c0_121 = arith.constant 0 : index
    %222 = vector.load %arg31[%c0_119, %c0_120, %c0_121] : memref<1x8x128xf32, #tpu.memory_space<vmem>>, vector<1x8x128xf32>
    %223 = vector.shape_cast %222 : vector<1x8x128xf32> to vector<8x128xf32>
    %224 = vector.shape_cast %221 : vector<8x128xf32> to vector<1x8x128xf32>
    tpu.vector_store %arg31[%c0_119, %c0_120, %c0_121], %224 {strides = array<i32>} : memref<1x8x128xf32, #tpu.memory_space<vmem>>, vector<1x8x128xf32>,
    return
  }
  func.func @transform_0(%arg0: i32) -> (i32, i32, i32) {
    %c0_i32 = arith.constant 0 : i32
    %c0_i32_0 = arith.constant 0 : i32
    %c0_i32_1 = arith.constant 0 : i32
    return %arg0, %c0_i32, %c0_i32_0 : i32, i32, i32
  }
  func.func @transform_1(%arg0: i32) -> (i32, i32, i32) {
    %c0_i32 = arith.constant 0 : i32
    %c0_i32_0 = arith.constant 0 : i32
    %c0_i32_1 = arith.constant 0 : i32
    return %arg0, %c0_i32, %c0_i32_0 : i32, i32, i32
  }
  func.func @transform_2(%arg0: i32) -> (i32, i32) {
    %c0_i32 = arith.constant 0 : i32
    %c0_i32_0 = arith.constant 0 : i32
    %c0_i32_1 = arith.constant 0 : i32
    return %c0_i32, %c0_i32_0 : i32, i32
  }
  func.func @transform_3(%arg0: i32) -> (i32, i32) {
    %c0_i32 = arith.constant 0 : i32
    %c0_i32_0 = arith.constant 0 : i32
    %c0_i32_1 = arith.constant 0 : i32
    return %c0_i32, %c0_i32_0 : i32, i32
  }
  func.func @transform_4(%arg0: i32) -> (i32, i32, i32) {
    %c0_i32 = arith.constant 0 : i32
    %c0_i32_0 = arith.constant 0 : i32
    %c0_i32_1 = arith.constant 0 : i32
    %c0_i32_2 = arith.constant 0 : i32
    return %c0_i32, %c0_i32_0, %c0_i32_1 : i32, i32, i32
  }
  func.func @transform_5(%arg0: i32) -> (i32, i32, i32) {
    %c0_i32 = arith.constant 0 : i32
    %c0_i32_0 = arith.constant 0 : i32
    %c0_i32_1 = arith.constant 0 : i32
    %c0_i32_2 = arith.constant 0 : i32
    return %c0_i32, %c0_i32_0, %c0_i32_1 : i32, i32, i32
  }
  func.func @transform_6(%arg0: i32) -> (i32, i32, i32) {
    %c0_i32 = arith.constant 0 : i32
    %c0_i32_0 = arith.constant 0 : i32
    %c0_i32_1 = arith.constant 0 : i32
    %c0_i32_2 = arith.constant 0 : i32
    return %c0_i32, %c0_i32_0, %c0_i32_1 : i32, i32, i32
  }
  func.func @transform_7(%arg0: i32) -> (i32, i32, i32, i32) {
    %c0_i32 = arith.constant 0 : i32
    %c0_i32_0 = arith.constant 0 : i32
    %c0_i32_1 = arith.constant 0 : i32
    %c0_i32_2 = arith.constant 0 : i32
    %c0_i32_3 = arith.constant 0 : i32
    return %c0_i32, %c0_i32_0, %c0_i32_1, %c0_i32_2 : i32, i32, i32, i32
  }
  func.func @transform_8(%arg0: i32) -> (i32, i32, i32) {
    %c0_i32 = arith.constant 0 : i32
    %c0_i32_0 = arith.constant 0 : i32
    %c0_i32_1 = arith.constant 0 : i32
    %c0_i32_2 = arith.constant 0 : i32
    return %c0_i32, %c0_i32_0, %c0_i32_1 : i32, i32, i32
  }
  func.func @transform_9(%arg0: i32) -> (i32, i32) {
    %c0_i32 = arith.constant 0 : i32
    %c0_i32_0 = arith.constant 0 : i32
    %c0_i32_1 = arith.constant 0 : i32
    return %c0_i32, %c0_i32_0 : i32, i32
  }
  func.func @transform_10(%arg0: i32) -> (i32, i32) {
    %c0_i32 = arith.constant 0 : i32
    %c0_i32_0 = arith.constant 0 : i32
    %c0_i32_1 = arith.constant 0 : i32
    return %c0_i32, %c0_i32_0 : i32, i32
  }
  func.func @transform_11(%arg0: i32) -> (i32, i32) {
    %c0_i32 = arith.constant 0 : i32
    %c0_i32_0 = arith.constant 0 : i32
    %c0_i32_1 = arith.constant 0 : i32
    return %c0_i32, %c0_i32_0 : i32, i32
  }
  func.func @transform_12(%arg0: i32) -> (i32, i32) {
    %c0_i32 = arith.constant 0 : i32
    %c0_i32_0 = arith.constant 0 : i32
    %c0_i32_1 = arith.constant 0 : i32
    return %c0_i32, %c0_i32_0 : i32, i32
  }
  func.func @transform_13(%arg0: i32) -> (i32, i32) {
    %c0_i32 = arith.constant 0 : i32
    %c0_i32_0 = arith.constant 0 : i32
    %c0_i32_1 = arith.constant 0 : i32
    return %c0_i32, %c0_i32_0 : i32, i32
  }
  func.func @transform_14(%arg0: i32) -> (i32, i32) {
    %c0_i32 = arith.constant 0 : i32
    %c0_i32_0 = arith.constant 0 : i32
    %c0_i32_1 = arith.constant 0 : i32
    return %c0_i32, %c0_i32_0 : i32, i32
  }
  func.func @transform_15(%arg0: i32) -> (i32, i32) {
    %c0_i32 = arith.constant 0 : i32
    %c0_i32_0 = arith.constant 0 : i32
    %c0_i32_1 = arith.constant 0 : i32
    return %c0_i32, %c0_i32_0 : i32, i32
  }
  func.func @transform_16(%arg0: i32) -> (i32, i32) {
    %c0_i32 = arith.constant 0 : i32
    %c0_i32_0 = arith.constant 0 : i32
    %c0_i32_1 = arith.constant 0 : i32
    return %c0_i32, %c0_i32_0 : i32, i32
  }
  func.func @transform_17(%arg0: i32) -> (i32, i32, i32) {
    %c0_i32 = arith.constant 0 : i32
    %c0_i32_0 = arith.constant 0 : i32
    %c0_i32_1 = arith.constant 0 : i32
    %c0_i32_2 = arith.constant 0 : i32
    return %c0_i32, %c0_i32_0, %c0_i32_1 : i32, i32, i32
  }
  func.func @transform_18(%arg0: i32) -> (i32, i32, i32) {
    %c0_i32 = arith.constant 0 : i32
    %c0_i32_0 = arith.constant 0 : i32
    %c0_i32_1 = arith.constant 0 : i32
    %c0_i32_2 = arith.constant 0 : i32
    return %c0_i32, %c0_i32_0, %c0_i32_1 : i32, i32, i32
  }
  func.func @transform_19(%arg0: i32) -> (i32, i32, i32) {
    %c0_i32 = arith.constant 0 : i32
    %c0_i32_0 = arith.constant 0 : i32
    %c0_i32_1 = arith.constant 0 : i32
    %c0_i32_2 = arith.constant 0 : i32
    return %c0_i32, %c0_i32_0, %c0_i32_1 : i32, i32, i32
  }
  func.func @transform_20(%arg0: i32) -> (i32, i32, i32, i32) {
    %c0_i32 = arith.constant 0 : i32
    %c0_i32_0 = arith.constant 0 : i32
    %c0_i32_1 = arith.constant 0 : i32
    %c0_i32_2 = arith.constant 0 : i32
    %c0_i32_3 = arith.constant 0 : i32
    return %c0_i32, %c0_i32_0, %c0_i32_1, %c0_i32_2 : i32, i32, i32, i32
  }
  func.func @transform_21(%arg0: i32) -> (i32, i32, i32) {
    %c0_i32 = arith.constant 0 : i32
    %c0_i32_0 = arith.constant 0 : i32
    %c0_i32_1 = arith.constant 0 : i32
    %c0_i32_2 = arith.constant 0 : i32
    return %c0_i32, %c0_i32_0, %c0_i32_1 : i32, i32, i32
  }
  func.func @transform_22(%arg0: i32) -> (i32, i32) {
    %c0_i32 = arith.constant 0 : i32
    %c0_i32_0 = arith.constant 0 : i32
    %c0_i32_1 = arith.constant 0 : i32
    return %c0_i32, %c0_i32_0 : i32, i32
  }
  func.func @transform_23(%arg0: i32) -> (i32, i32) {
    %c0_i32 = arith.constant 0 : i32
    %c0_i32_0 = arith.constant 0 : i32
    %c0_i32_1 = arith.constant 0 : i32
    return %c0_i32, %c0_i32_0 : i32, i32
  }
  func.func @transform_24(%arg0: i32) -> (i32, i32) {
    %c0_i32 = arith.constant 0 : i32
    %c0_i32_0 = arith.constant 0 : i32
    %c0_i32_1 = arith.constant 0 : i32
    return %c0_i32, %c0_i32_0 : i32, i32
  }
  func.func @transform_25(%arg0: i32) -> (i32, i32) {
    %c0_i32 = arith.constant 0 : i32
    %c0_i32_0 = arith.constant 0 : i32
    %c0_i32_1 = arith.constant 0 : i32
    return %c0_i32, %c0_i32_0 : i32, i32
  }
  func.func @transform_26(%arg0: i32) -> (i32, i32) {
    %c0_i32 = arith.constant 0 : i32
    %c0_i32_0 = arith.constant 0 : i32
    %c0_i32_1 = arith.constant 0 : i32
    return %c0_i32, %c0_i32_0 : i32, i32
  }
  func.func @transform_27(%arg0: i32) -> (i32, i32) {
    %c0_i32 = arith.constant 0 : i32
    %c0_i32_0 = arith.constant 0 : i32
    %c0_i32_1 = arith.constant 0 : i32
    return %c0_i32, %c0_i32_0 : i32, i32
  }
  func.func @transform_28(%arg0: i32) -> (i32, i32) {
    %c0_i32 = arith.constant 0 : i32
    %c0_i32_0 = arith.constant 0 : i32
    %c0_i32_1 = arith.constant 0 : i32
    return %c0_i32, %c0_i32_0 : i32, i32
  }
  func.func @transform_29(%arg0: i32) -> (i32, i32) {
    %c0_i32 = arith.constant 0 : i32
    %c0_i32_0 = arith.constant 0 : i32
    %c0_i32_1 = arith.constant 0 : i32
    return %c0_i32, %c0_i32_0 : i32, i32
  }
  func.func @transform_30(%arg0: i32) -> (i32, i32, i32) {
    %c0_i32 = arith.constant 0 : i32
    %c0_i32_0 = arith.constant 0 : i32
    %c0_i32_1 = arith.constant 0 : i32
    return %arg0, %c0_i32, %c0_i32_0 : i32, i32, i32
  }
}

</mosaic_0001>

<llo_original>
// kernel: xlnet_lm_encoder_forward.1
$region0: #{xlnet_lm_encoder_forward.1}
  #allocation0 [shape = 'u32[]', space=smem, size = 0x4, offset = 0x4, fixed_abs, tag = 'smem constant byte address 0x4 - core index']
  #allocation1 [shape = 'u32[72,128]{1,0:T(1,128)}', space=vmem, size = 0x9000, scoped, tag = 'internal scratch']
  %s0 = inlined_call_operand.smem [shape: u32[31], index: -1, kind: input, shape index: {}]
  %s1 = sld [smem:[%s0]]
  %s2 = scalar_lea.smem %s0, 1
  %s3 = sld [smem:[%s2]]
  %s4 = scalar_lea.smem %s0, 2
  %s5 = sld [smem:[%s4]]
  %s6 = scalar_lea.smem %s0, 3
  %s7 = sld [smem:[%s6]]
  %s8 = scalar_lea.smem %s0, 4
  %s9 = sld [smem:[%s8]]
  %s10 = scalar_lea.smem %s0, 5
  %s11 = sld [smem:[%s10]]
  %s12 = scalar_lea.smem %s0, 6
  %s13 = sld [smem:[%s12]]
  %s14 = scalar_lea.smem %s0, 7
  %s15 = sld [smem:[%s14]]
  %s16 = scalar_lea.smem %s0, 8
  %s17 = sld [smem:[%s16]]
  %s18 = scalar_lea.smem %s0, 9
  %s19 = sld [smem:[%s18]]
  %s20 = scalar_lea.smem %s0, 10
  %s21 = sld [smem:[%s20]]
  %s22 = scalar_lea.smem %s0, 11
  %s23 = sld [smem:[%s22]]
  %s24 = scalar_lea.smem %s0, 12
  %s25 = sld [smem:[%s24]]
  %s26 = scalar_lea.smem %s0, 13
  %s27 = sld [smem:[%s26]]
  %s28 = scalar_lea.smem %s0, 14
  %s29 = sld [smem:[%s28]]
  %s30 = scalar_lea.smem %s0, 15
  %s31 = sld [smem:[%s30]]
  %s32 = scalar_lea.smem %s0, 16
  %s33 = sld [smem:[%s32]]
  %s34 = scalar_lea.smem %s0, 17
  %s35 = sld [smem:[%s34]]
  %s36 = scalar_lea.smem %s0, 18
  %s37 = sld [smem:[%s36]]
  %s38 = scalar_lea.smem %s0, 19
  %s39 = sld [smem:[%s38]]
  %s40 = scalar_lea.smem %s0, 20
  %s41 = sld [smem:[%s40]]
  %s42 = scalar_lea.smem %s0, 21
  %s43 = sld [smem:[%s42]]
  %s44 = scalar_lea.smem %s0, 22
  %s45 = sld [smem:[%s44]]
  %s46 = scalar_lea.smem %s0, 23
  %s47 = sld [smem:[%s46]]
  %s48 = scalar_lea.smem %s0, 24
  %s49 = sld [smem:[%s48]]
  %s50 = scalar_lea.smem %s0, 25
  %s51 = sld [smem:[%s50]]
  %s52 = scalar_lea.smem %s0, 26
  %s53 = sld [smem:[%s52]]
  %s54 = scalar_lea.smem %s0, 27
  %s55 = sld [smem:[%s54]]
  %s56 = scalar_lea.smem %s0, 28
  %s57 = sld [smem:[%s56]]
  %s58 = scalar_lea.smem %s0, 29
  %s59 = sld [smem:[%s58]]
  %s60 = scalar_lea.smem %s0, 30
  %s61 = sld [smem:[%s60]]
  %s62 = sld [smem:[#allocation0]]
  $region153: #{xlnet_lm_encoder_forward.1} parent=0
    _
  %s64 = ssub.s32 1, %s62
  %s65 = scalar_select 0, %s64, %s62
  $region1: #{xlnet_lm_encoder_forward.1} parent=0
    #allocation2 [shape = 'u8[8192]{0}', space=vmem, size = 0x2000, scoped, tag = 'output window, operand 0']
    #allocation3 [shape = 's32[2]{0}', space=sflag, size = 0x8, scoped, tag = 'scoped memory for xlnet_lm_encoder_forward.1']
    %66 = vsyncpa [#allocation3], 0
    %s67 = scalar_lea.sflag [#allocation3], 1
    %68 = vsyncpa %s67, 0
    loop: start=0, step=1, limit=4
    $region2: #{xlnet_lm_encoder_forward.1} parent=1 // loop_pre_header
      _
    $region3: #{xlnet_lm_encoder_forward.1} parent=1 // loop_header
      %s70 = sphi 0, %s74
      %p71 = scmp.ge.s32.totalorder %s70, 4
      %s80 = sphi 0, %s82
      %s83 = sphi 0, %s80
      %s84 = sphi 0, %s83
      %s100 = sphi 0, %s84
      %s106 = sphi 0, %s108
      %s109 = sphi 0, %s106
      %s110 = sphi 0, %s109
      %s126 = sphi 0, %s110
      %s130 = sphi 0, %s130
      %s132 = sphi 0, %s130
      %s133 = sphi 0, %s132
      %s147 = sphi 0, %s133
      %s151 = sphi 0, %s151
      %s153 = sphi 0, %s151
      %s154 = sphi 0, %s153
      %s168 = sphi 0, %s154
      %s172 = sphi 0, %s172
      %s174 = sphi 0, %s172
      %s175 = sphi 0, %s174
      %s189 = sphi 0, %s175
      %s193 = sphi 0, %s193
      %s195 = sphi 0, %s193
      %s196 = sphi 0, %s195
      %s210 = sphi 0, %s196
      %s214 = sphi 0, %s214
      %s216 = sphi 0, %s214
      %s217 = sphi 0, %s216
      %s231 = sphi 0, %s217
      %s235 = sphi 0, %s235
      %s237 = sphi 0, %s235
      %s238 = sphi 0, %s237
      %s252 = sphi 0, %s238
      %s256 = sphi 0, %s256
      %s258 = sphi 0, %s256
      %s259 = sphi 0, %s258
      %s273 = sphi 0, %s259
      %s277 = sphi 0, %s277
      %s279 = sphi 0, %s277
      %s280 = sphi 0, %s279
      %s294 = sphi 0, %s280
      %s298 = sphi 0, %s298
      %s300 = sphi 0, %s298
      %s301 = sphi 0, %s300
      %s315 = sphi 0, %s301
      %s319 = sphi 0, %s319
      %s321 = sphi 0, %s319
      %s322 = sphi 0, %s321
      %s336 = sphi 0, %s322
      %s340 = sphi 0, %s340
      %s342 = sphi 0, %s340
      %s343 = sphi 0, %s342
      %s357 = sphi 0, %s343
      %s361 = sphi 0, %s361
      %s363 = sphi 0, %s361
      %s364 = sphi 0, %s363
      %s378 = sphi 0, %s364
      %s382 = sphi 0, %s382
      %s384 = sphi 0, %s382
      %s385 = sphi 0, %s384
      %s399 = sphi 0, %s385
      %s403 = sphi 0, %s403
      %s405 = sphi 0, %s403
      %s406 = sphi 0, %s405
      %s420 = sphi 0, %s406
      %s424 = sphi 0, %s424
      %s426 = sphi 0, %s424
      %s427 = sphi 0, %s426
      %s441 = sphi 0, %s427
      %s445 = sphi 0, %s445
      %s447 = sphi 0, %s445
      %s448 = sphi 0, %s447
      %s462 = sphi 0, %s448
      %s466 = sphi 0, %s466
      %s468 = sphi 0, %s466
      %s469 = sphi 0, %s468
      %s483 = sphi 0, %s469
      %s487 = sphi 0, %s487
      %s489 = sphi 0, %s487
      %s490 = sphi 0, %s489
      %s504 = sphi 0, %s490
      %s508 = sphi 0, %s508
      %s510 = sphi 0, %s508
      %s511 = sphi 0, %s510
      %s525 = sphi 0, %s511
      %s529 = sphi 0, %s529
      %s531 = sphi 0, %s529
      %s532 = sphi 0, %s531
      %s546 = sphi 0, %s532
      %s550 = sphi 0, %s550
      %s552 = sphi 0, %s550
      %s553 = sphi 0, %s552
      %s567 = sphi 0, %s553
      %s571 = sphi 0, %s571
      %s573 = sphi 0, %s571
      %s574 = sphi 0, %s573
      %s588 = sphi 0, %s574
      %s592 = sphi 0, %s592
      %s594 = sphi 0, %s592
      %s595 = sphi 0, %s594
      %s609 = sphi 0, %s595
      %s613 = sphi 0, %s613
      %s615 = sphi 0, %s613
      %s616 = sphi 0, %s615
      %s630 = sphi 0, %s616
      %s634 = sphi 0, %s634
      %s636 = sphi 0, %s634
      %s637 = sphi 0, %s636
      %s651 = sphi 0, %s637
      %s655 = sphi 0, %s655
      %s657 = sphi 0, %s655
      %s658 = sphi 0, %s657
      %s672 = sphi 0, %s658
      %s676 = sphi 0, %s676
      %s678 = sphi 0, %s676
      %s679 = sphi 0, %s678
      %s693 = sphi 0, %s679
      %s697 = sphi 0, %s697
      %s699 = sphi 0, %s697
      %s700 = sphi 0, %s699
      %s714 = sphi 0, %s700
      %s720 = sphi 0, %s722
      %s723 = sphi 0, %s720
      %s724 = sphi 0, %s723
      %s740 = sphi 0, %s724
    $region4: #{xlnet_lm_encoder_forward.1} parent=1 // loop_header_branch
      %73 = sbr.rel (%p71) target = $region8
    $region5: #{xlnet_lm_encoder_forward.1} parent=1 // loop_body
      %s75 = ssub.s32 %s70, 1
      %s76 = ssub.s32 %s70, 2
      %s77 = sadd.s32 %s70, 1
      %s78 = ssub.s32 %s70, %s77
      %p79 = scmp.eq.s32.totalorder %s78, 0
      %s81 = sadd.s32 %s80, 1
      %s82 = scalar_select %p79, %s80, %s81
      %p85 = pneg %p79
      %p86 = scmp.eq.s32.totalorder %s70, 1
      %p87 = por %p85, %p86
      %p88 = scmp.ne.s32.totalorder %s80, %s83
      %p89 = scmp.eq.s32.totalorder %s70, 0
      %p90 = por %p88, %p89
      %p91 = scmp.ne.s32.totalorder %s80, %s83
      %p92 = scmp.eq.s32.totalorder %s75, 1
      %p93 = por %p91, %p92
      %p94 = scmp.ne.s32.totalorder %s83, %s84
      %p95 = scmp.eq.s32.totalorder %s75, 0
      %p96 = por %p94, %p95
      %p97 = scmp.ne.s32.totalorder %s83, %s84
      %p98 = scmp.eq.s32.totalorder %s76, 1
      %p99 = por %p97, %p98
      %p101 = scmp.ne.s32.totalorder %s84, %s100
      %p102 = scmp.eq.s32.totalorder %s76, 0
      %p103 = por %p101, %p102
      %s104 = ssub.s32 %s70, %s77
      %p105 = scmp.eq.s32.totalorder %s104, 0
      %s107 = sadd.s32 %s106, 1
      %s108 = scalar_select %p105, %s106, %s107
      %p111 = pneg %p105
      %p112 = scmp.eq.s32.totalorder %s70, 1
      %p113 = por %p111, %p112
      %p114 = scmp.ne.s32.totalorder %s106, %s109
      %p115 = scmp.eq.s32.totalorder %s70, 0
      %p116 = por %p114, %p115
      %p117 = scmp.ne.s32.totalorder %s106, %s109
      %p118 = scmp.eq.s32.totalorder %s75, 1
      %p119 = por %p117, %p118
      %p120 = scmp.ne.s32.totalorder %s109, %s110
      %p121 = scmp.eq.s32.totalorder %s75, 0
      %p122 = por %p120, %p121
      %p123 = scmp.ne.s32.totalorder %s109, %s110
      %p124 = scmp.eq.s32.totalorder %s76, 1
      %p125 = por %p123, %p124
      %p127 = scmp.ne.s32.totalorder %s110, %s126
      %p128 = scmp.eq.s32.totalorder %s76, 0
      %p129 = por %p127, %p128
      %s131 = sadd.s32 %s130, 1
      %p134 = scmp.eq.s32.totalorder %s70, 1
      %p135 = scmp.ne.s32.totalorder %s130, %s132
      %p136 = scmp.eq.s32.totalorder %s70, 0
      %p137 = por %p135, %p136
      %p138 = scmp.ne.s32.totalorder %s130, %s132
      %p139 = scmp.eq.s32.totalorder %s75, 1
      %p140 = por %p138, %p139
      %p141 = scmp.ne.s32.totalorder %s132, %s133
      %p142 = scmp.eq.s32.totalorder %s75, 0
      %p143 = por %p141, %p142
      %p144 = scmp.ne.s32.totalorder %s132, %s133
      %p145 = scmp.eq.s32.totalorder %s76, 1
      %p146 = por %p144, %p145
      %p148 = scmp.ne.s32.totalorder %s133, %s147
      %p149 = scmp.eq.s32.totalorder %s76, 0
      %p150 = por %p148, %p149
      %s152 = sadd.s32 %s151, 1
      %p155 = scmp.eq.s32.totalorder %s70, 1
      %p156 = scmp.ne.s32.totalorder %s151, %s153
      %p157 = scmp.eq.s32.totalorder %s70, 0
      %p158 = por %p156, %p157
      %p159 = scmp.ne.s32.totalorder %s151, %s153
      %p160 = scmp.eq.s32.totalorder %s75, 1
      %p161 = por %p159, %p160
      %p162 = scmp.ne.s32.totalorder %s153, %s154
      %p163 = scmp.eq.s32.totalorder %s75, 0
      %p164 = por %p162, %p163
      %p165 = scmp.ne.s32.totalorder %s153, %s154
      %p166 = scmp.eq.s32.totalorder %s76, 1
      %p167 = por %p165, %p166
      %p169 = scmp.ne.s32.totalorder %s154, %s168
      %p170 = scmp.eq.s32.totalorder %s76, 0
      %p171 = por %p169, %p170
      %s173 = sadd.s32 %s172, 1
      %p176 = scmp.eq.s32.totalorder %s70, 1
      %p177 = scmp.ne.s32.totalorder %s172, %s174
      %p178 = scmp.eq.s32.totalorder %s70, 0
      %p179 = por %p177, %p178
      %p180 = scmp.ne.s32.totalorder %s172, %s174
      %p181 = scmp.eq.s32.totalorder %s75, 1
      %p182 = por %p180, %p181
      %p183 = scmp.ne.s32.totalorder %s174, %s175
      %p184 = scmp.eq.s32.totalorder %s75, 0
      %p185 = por %p183, %p184
      %p186 = scmp.ne.s32.totalorder %s174, %s175
      %p187 = scmp.eq.s32.totalorder %s76, 1
      %p188 = por %p186, %p187
      %p190 = scmp.ne.s32.totalorder %s175, %s189
      %p191 = scmp.eq.s32.totalorder %s76, 0
      %p192 = por %p190, %p191
      %s194 = sadd.s32 %s193, 1
      %p197 = scmp.eq.s32.totalorder %s70, 1
      %p198 = scmp.ne.s32.totalorder %s193, %s195
      %p199 = scmp.eq.s32.totalorder %s70, 0
      %p200 = por %p198, %p199
      %p201 = scmp.ne.s32.totalorder %s193, %s195
      %p202 = scmp.eq.s32.totalorder %s75, 1
      %p203 = por %p201, %p202
      %p204 = scmp.ne.s32.totalorder %s195, %s196
      %p205 = scmp.eq.s32.totalorder %s75, 0
      %p206 = por %p204, %p205
      %p207 = scmp.ne.s32.totalorder %s195, %s196
      %p208 = scmp.eq.s32.totalorder %s76, 1
      %p209 = por %p207, %p208
      %p211 = scmp.ne.s32.totalorder %s196, %s210
      %p212 = scmp.eq.s32.totalorder %s76, 0
      %p213 = por %p211, %p212
      %s215 = sadd.s32 %s214, 1
      %p218 = scmp.eq.s32.totalorder %s70, 1
      %p219 = scmp.ne.s32.totalorder %s214, %s216
      %p220 = scmp.eq.s32.totalorder %s70, 0
      %p221 = por %p219, %p220
      %p222 = scmp.ne.s32.totalorder %s214, %s216
      %p223 = scmp.eq.s32.totalorder %s75, 1
      %p224 = por %p222, %p223
      %p225 = scmp.ne.s32.totalorder %s216, %s217
      %p226 = scmp.eq.s32.totalorder %s75, 0
      %p227 = por %p225, %p226
      %p228 = scmp.ne.s32.totalorder %s216, %s217
      %p229 = scmp.eq.s32.totalorder %s76, 1
      %p230 = por %p228, %p229
      %p232 = scmp.ne.s32.totalorder %s217, %s231
      %p233 = scmp.eq.s32.totalorder %s76, 0
      %p234 = por %p232, %p233
      %s236 = sadd.s32 %s235, 1
      %p239 = scmp.eq.s32.totalorder %s70, 1
      %p240 = scmp.ne.s32.totalorder %s235, %s237
      %p241 = scmp.eq.s32.totalorder %s70, 0
      %p242 = por %p240, %p241
      %p243 = scmp.ne.s32.totalorder %s235, %s237
      %p244 = scmp.eq.s32.totalorder %s75, 1
      %p245 = por %p243, %p244
      %p246 = scmp.ne.s32.totalorder %s237, %s238
      %p247 = scmp.eq.s32.totalorder %s75, 0
      %p248 = por %p246, %p247
      %p249 = scmp.ne.s32.totalorder %s237, %s238
      %p250 = scmp.eq.s32.totalorder %s76, 1
      %p251 = por %p249, %p250
      %p253 = scmp.ne.s32.totalorder %s238, %s252
      %p254 = scmp.eq.s32.totalorder %s76, 0
      %p255 = por %p253, %p254
      %s257 = sadd.s32 %s256, 1
      %p260 = scmp.eq.s32.totalorder %s70, 1
      %p261 = scmp.ne.s32.totalorder %s256, %s258
      %p262 = scmp.eq.s32.totalorder %s70, 0
      %p263 = por %p261, %p262
      %p264 = scmp.ne.s32.totalorder %s256, %s258
      %p265 = scmp.eq.s32.totalorder %s75, 1
      %p266 = por %p264, %p265
      %p267 = scmp.ne.s32.totalorder %s258, %s259
      %p268 = scmp.eq.s32.totalorder %s75, 0
      %p269 = por %p267, %p268
      %p270 = scmp.ne.s32.totalorder %s258, %s259
      %p271 = scmp.eq.s32.totalorder %s76, 1
      %p272 = por %p270, %p271
      %p274 = scmp.ne.s32.totalorder %s259, %s273
      %p275 = scmp.eq.s32.totalorder %s76, 0
      %p276 = por %p274, %p275
      %s278 = sadd.s32 %s277, 1
      %p281 = scmp.eq.s32.totalorder %s70, 1
      %p282 = scmp.ne.s32.totalorder %s277, %s279
      %p283 = scmp.eq.s32.totalorder %s70, 0
      %p284 = por %p282, %p283
      %p285 = scmp.ne.s32.totalorder %s277, %s279
      %p286 = scmp.eq.s32.totalorder %s75, 1
      %p287 = por %p285, %p286
      %p288 = scmp.ne.s32.totalorder %s279, %s280
      %p289 = scmp.eq.s32.totalorder %s75, 0
      %p290 = por %p288, %p289
      %p291 = scmp.ne.s32.totalorder %s279, %s280
      %p292 = scmp.eq.s32.totalorder %s76, 1
      %p293 = por %p291, %p292
      %p295 = scmp.ne.s32.totalorder %s280, %s294
      %p296 = scmp.eq.s32.totalorder %s76, 0
      %p297 = por %p295, %p296
      %s299 = sadd.s32 %s298, 1
      %p302 = scmp.eq.s32.totalorder %s70, 1
      %p303 = scmp.ne.s32.totalorder %s298, %s300
      %p304 = scmp.eq.s32.totalorder %s70, 0
      %p305 = por %p303, %p304
      %p306 = scmp.ne.s32.totalorder %s298, %s300
      %p307 = scmp.eq.s32.totalorder %s75, 1
      %p308 = por %p306, %p307
      %p309 = scmp.ne.s32.totalorder %s300, %s301
      %p310 = scmp.eq.s32.totalorder %s75, 0
      %p311 = por %p309, %p310
      %p312 = scmp.ne.s32.totalorder %s300, %s301
      %p313 = scmp.eq.s32.totalorder %s76, 1
      %p314 = por %p312, %p313
      %p316 = scmp.ne.s32.totalorder %s301, %s315
      %p317 = scmp.eq.s32.totalorder %s76, 0
      %p318 = por %p316, %p317
      %s320 = sadd.s32 %s319, 1
      %p323 = scmp.eq.s32.totalorder %s70, 1
      %p324 = scmp.ne.s32.totalorder %s319, %s321
      %p325 = scmp.eq.s32.totalorder %s70, 0
      %p326 = por %p324, %p325
      %p327 = scmp.ne.s32.totalorder %s319, %s321
      %p328 = scmp.eq.s32.totalorder %s75, 1
      %p329 = por %p327, %p328
      %p330 = scmp.ne.s32.totalorder %s321, %s322
      %p331 = scmp.eq.s32.totalorder %s75, 0
      %p332 = por %p330, %p331
      %p333 = scmp.ne.s32.totalorder %s321, %s322
      %p334 = scmp.eq.s32.totalorder %s76, 1
      %p335 = por %p333, %p334
      %p337 = scmp.ne.s32.totalorder %s322, %s336
      %p338 = scmp.eq.s32.totalorder %s76, 0
      %p339 = por %p337, %p338
      %s341 = sadd.s32 %s340, 1
      %p344 = scmp.eq.s32.totalorder %s70, 1
      %p345 = scmp.ne.s32.totalorder %s340, %s342
      %p346 = scmp.eq.s32.totalorder %s70, 0
      %p347 = por %p345, %p346
      %p348 = scmp.ne.s32.totalorder %s340, %s342
      %p349 = scmp.eq.s32.totalorder %s75, 1
      %p350 = por %p348, %p349
      %p351 = scmp.ne.s32.totalorder %s342, %s343
      %p352 = scmp.eq.s32.totalorder %s75, 0
      %p353 = por %p351, %p352
      %p354 = scmp.ne.s32.totalorder %s342, %s343
      %p355 = scmp.eq.s32.totalorder %s76, 1
      %p356 = por %p354, %p355
      %p358 = scmp.ne.s32.totalorder %s343, %s357
      %p359 = scmp.eq.s32.totalorder %s76, 0
      %p360 = por %p358, %p359
      %s362 = sadd.s32 %s361, 1
      %p365 = scmp.eq.s32.totalorder %s70, 1
      %p366 = scmp.ne.s32.totalorder %s361, %s363
      %p367 = scmp.eq.s32.totalorder %s70, 0
      %p368 = por %p366, %p367
      %p369 = scmp.ne.s32.totalorder %s361, %s363
      %p370 = scmp.eq.s32.totalorder %s75, 1
      %p371 = por %p369, %p370
      %p372 = scmp.ne.s32.totalorder %s363, %s364
      %p373 = scmp.eq.s32.totalorder %s75, 0
      %p374 = por %p372, %p373
      %p375 = scmp.ne.s32.totalorder %s363, %s364
      %p376 = scmp.eq.s32.totalorder %s76, 1
      %p377 = por %p375, %p376
      %p379 = scmp.ne.s32.totalorder %s364, %s378
      %p380 = scmp.eq.s32.totalorder %s76, 0
      %p381 = por %p379, %p380
      %s383 = sadd.s32 %s382, 1
      %p386 = scmp.eq.s32.totalorder %s70, 1
      %p387 = scmp.ne.s32.totalorder %s382, %s384
      %p388 = scmp.eq.s32.totalorder %s70, 0
      %p389 = por %p387, %p388
      %p390 = scmp.ne.s32.totalorder %s382, %s384
      %p391 = scmp.eq.s32.totalorder %s75, 1
      %p392 = por %p390, %p391
      %p393 = scmp.ne.s32.totalorder %s384, %s385
      %p394 = scmp.eq.s32.totalorder %s75, 0
      %p395 = por %p393, %p394
      %p396 = scmp.ne.s32.totalorder %s384, %s385
      %p397 = scmp.eq.s32.totalorder %s76, 1
      %p398 = por %p396, %p397
      %p400 = scmp.ne.s32.totalorder %s385, %s399
      %p401 = scmp.eq.s32.totalorder %s76, 0
      %p402 = por %p400, %p401
      %s404 = sadd.s32 %s403, 1
      %p407 = scmp.eq.s32.totalorder %s70, 1
      %p408 = scmp.ne.s32.totalorder %s403, %s405
      %p409 = scmp.eq.s32.totalorder %s70, 0
      %p410 = por %p408, %p409
      %p411 = scmp.ne.s32.totalorder %s403, %s405
      %p412 = scmp.eq.s32.totalorder %s75, 1
      %p413 = por %p411, %p412
      %p414 = scmp.ne.s32.totalorder %s405, %s406
      %p415 = scmp.eq.s32.totalorder %s75, 0
      %p416 = por %p414, %p415
      %p417 = scmp.ne.s32.totalorder %s405, %s406
      %p418 = scmp.eq.s32.totalorder %s76, 1
      %p419 = por %p417, %p418
      %p421 = scmp.ne.s32.totalorder %s406, %s420
      %p422 = scmp.eq.s32.totalorder %s76, 0
      %p423 = por %p421, %p422
      %s425 = sadd.s32 %s424, 1
      %p428 = scmp.eq.s32.totalorder %s70, 1
      %p429 = scmp.ne.s32.totalorder %s424, %s426
      %p430 = scmp.eq.s32.totalorder %s70, 0
      %p431 = por %p429, %p430
      %p432 = scmp.ne.s32.totalorder %s424, %s426
      %p433 = scmp.eq.s32.totalorder %s75, 1
      %p434 = por %p432, %p433
      %p435 = scmp.ne.s32.totalorder %s426, %s427
      %p436 = scmp.eq.s32.totalorder %s75, 0
      %p437 = por %p435, %p436
      %p438 = scmp.ne.s32.totalorder %s426, %s427
      %p439 = scmp.eq.s32.totalorder %s76, 1
      %p440 = por %p438, %p439
      %p442 = scmp.ne.s32.totalorder %s427, %s441
      %p443 = scmp.eq.s32.totalorder %s76, 0
      %p444 = por %p442, %p443
      %s446 = sadd.s32 %s445, 1
      %p449 = scmp.eq.s32.totalorder %s70, 1
      %p450 = scmp.ne.s32.totalorder %s445, %s447
      %p451 = scmp.eq.s32.totalorder %s70, 0
      %p452 = por %p450, %p451
      %p453 = scmp.ne.s32.totalorder %s445, %s447
      %p454 = scmp.eq.s32.totalorder %s75, 1
      %p455 = por %p453, %p454
      %p456 = scmp.ne.s32.totalorder %s447, %s448
      %p457 = scmp.eq.s32.totalorder %s75, 0
      %p458 = por %p456, %p457
      %p459 = scmp.ne.s32.totalorder %s447, %s448
      %p460 = scmp.eq.s32.totalorder %s76, 1
      %p461 = por %p459, %p460
      %p463 = scmp.ne.s32.totalorder %s448, %s462
      %p464 = scmp.eq.s32.totalorder %s76, 0
      %p465 = por %p463, %p464
      %s467 = sadd.s32 %s466, 1
      %p470 = scmp.eq.s32.totalorder %s70, 1
      %p471 = scmp.ne.s32.totalorder %s466, %s468
      %p472 = scmp.eq.s32.totalorder %s70, 0
      %p473 = por %p471, %p472
      %p474 = scmp.ne.s32.totalorder %s466, %s468
      %p475 = scmp.eq.s32.totalorder %s75, 1
      %p476 = por %p474, %p475
      %p477 = scmp.ne.s32.totalorder %s468, %s469
      %p478 = scmp.eq.s32.totalorder %s75, 0
      %p479 = por %p477, %p478
      %p480 = scmp.ne.s32.totalorder %s468, %s469
      %p481 = scmp.eq.s32.totalorder %s76, 1
      %p482 = por %p480, %p481
      %p484 = scmp.ne.s32.totalorder %s469, %s483
      %p485 = scmp.eq.s32.totalorder %s76, 0
      %p486 = por %p484, %p485
      %s488 = sadd.s32 %s487, 1
      %p491 = scmp.eq.s32.totalorder %s70, 1
      %p492 = scmp.ne.s32.totalorder %s487, %s489
      %p493 = scmp.eq.s32.totalorder %s70, 0
      %p494 = por %p492, %p493
      %p495 = scmp.ne.s32.totalorder %s487, %s489
      %p496 = scmp.eq.s32.totalorder %s75, 1
      %p497 = por %p495, %p496
      %p498 = scmp.ne.s32.totalorder %s489, %s490
      %p499 = scmp.eq.s32.totalorder %s75, 0
      %p500 = por %p498, %p499
      %p501 = scmp.ne.s32.totalorder %s489, %s490
      %p502 = scmp.eq.s32.totalorder %s76, 1
      %p503 = por %p501, %p502
      %p505 = scmp.ne.s32.totalorder %s490, %s504
      %p506 = scmp.eq.s32.totalorder %s76, 0
      %p507 = por %p505, %p506
      %s509 = sadd.s32 %s508, 1
      %p512 = scmp.eq.s32.totalorder %s70, 1
      %p513 = scmp.ne.s32.totalorder %s508, %s510
      %p514 = scmp.eq.s32.totalorder %s70, 0
      %p515 = por %p513, %p514
      %p516 = scmp.ne.s32.totalorder %s508, %s510
      %p517 = scmp.eq.s32.totalorder %s75, 1
      %p518 = por %p516, %p517
      %p519 = scmp.ne.s32.totalorder %s510, %s511
      %p520 = scmp.eq.s32.totalorder %s75, 0
      %p521 = por %p519, %p520
      %p522 = scmp.ne.s32.totalorder %s510, %s511
      %p523 = scmp.eq.s32.totalorder %s76, 1
      %p524 = por %p522, %p523
      %p526 = scmp.ne.s32.totalorder %s511, %s525
      %p527 = scmp.eq.s32.totalorder %s76, 0
      %p528 = por %p526, %p527
      %s530 = sadd.s32 %s529, 1
      %p533 = scmp.eq.s32.totalorder %s70, 1
      %p534 = scmp.ne.s32.totalorder %s529, %s531
      %p535 = scmp.eq.s32.totalorder %s70, 0
      %p536 = por %p534, %p535
      %p537 = scmp.ne.s32.totalorder %s529, %s531
      %p538 = scmp.eq.s32.totalorder %s75, 1
      %p539 = por %p537, %p538
      %p540 = scmp.ne.s32.totalorder %s531, %s532
      %p541 = scmp.eq.s32.totalorder %s75, 0
      %p542 = por %p540, %p541
      %p543 = scmp.ne.s32.totalorder %s531, %s532
      %p544 = scmp.eq.s32.totalorder %s76, 1
      %p545 = por %p543, %p544
      %p547 = scmp.ne.s32.totalorder %s532, %s546
      %p548 = scmp.eq.s32.totalorder %s76, 0
      %p549 = por %p547, %p548
      %s551 = sadd.s32 %s550, 1
      %p554 = scmp.eq.s32.totalorder %s70, 1
      %p555 = scmp.ne.s32.totalorder %s550, %s552
      %p556 = scmp.eq.s32.totalorder %s70, 0
      %p557 = por %p555, %p556
      %p558 = scmp.ne.s32.totalorder %s550, %s552
      %p559 = scmp.eq.s32.totalorder %s75, 1
      %p560 = por %p558, %p559
      %p561 = scmp.ne.s32.totalorder %s552, %s553
      %p562 = scmp.eq.s32.totalorder %s75, 0
      %p563 = por %p561, %p562
      %p564 = scmp.ne.s32.totalorder %s552, %s553
      %p565 = scmp.eq.s32.totalorder %s76, 1
      %p566 = por %p564, %p565
      %p568 = scmp.ne.s32.totalorder %s553, %s567
      %p569 = scmp.eq.s32.totalorder %s76, 0
      %p570 = por %p568, %p569
      %s572 = sadd.s32 %s571, 1
      %p575 = scmp.eq.s32.totalorder %s70, 1
      %p576 = scmp.ne.s32.totalorder %s571, %s573
      %p577 = scmp.eq.s32.totalorder %s70, 0
      %p578 = por %p576, %p577
      %p579 = scmp.ne.s32.totalorder %s571, %s573
      %p580 = scmp.eq.s32.totalorder %s75, 1
      %p581 = por %p579, %p580
      %p582 = scmp.ne.s32.totalorder %s573, %s574
      %p583 = scmp.eq.s32.totalorder %s75, 0
      %p584 = por %p582, %p583
      %p585 = scmp.ne.s32.totalorder %s573, %s574
      %p586 = scmp.eq.s32.totalorder %s76, 1
      %p587 = por %p585, %p586
      %p589 = scmp.ne.s32.totalorder %s574, %s588
      %p590 = scmp.eq.s32.totalorder %s76, 0
      %p591 = por %p589, %p590
      %s593 = sadd.s32 %s592, 1
      %p596 = scmp.eq.s32.totalorder %s70, 1
      %p597 = scmp.ne.s32.totalorder %s592, %s594
      %p598 = scmp.eq.s32.totalorder %s70, 0
      %p599 = por %p597, %p598
      %p600 = scmp.ne.s32.totalorder %s592, %s594
      %p601 = scmp.eq.s32.totalorder %s75, 1
      %p602 = por %p600, %p601
      %p603 = scmp.ne.s32.totalorder %s594, %s595
      %p604 = scmp.eq.s32.totalorder %s75, 0
      %p605 = por %p603, %p604
      %p606 = scmp.ne.s32.totalorder %s594, %s595
      %p607 = scmp.eq.s32.totalorder %s76, 1
      %p608 = por %p606, %p607
      %p610 = scmp.ne.s32.totalorder %s595, %s609
      %p611 = scmp.eq.s32.totalorder %s76, 0
      %p612 = por %p610, %p611
      %s614 = sadd.s32 %s613, 1
      %p617 = scmp.eq.s32.totalorder %s70, 1
      %p618 = scmp.ne.s32.totalorder %s613, %s615
      %p619 = scmp.eq.s32.totalorder %s70, 0
      %p620 = por %p618, %p619
      %p621 = scmp.ne.s32.totalorder %s613, %s615
      %p622 = scmp.eq.s32.totalorder %s75, 1
      %p623 = por %p621, %p622
      %p624 = scmp.ne.s32.totalorder %s615, %s616
      %p625 = scmp.eq.s32.totalorder %s75, 0
      %p626 = por %p624, %p625
      %p627 = scmp.ne.s32.totalorder %s615, %s616
      %p628 = scmp.eq.s32.totalorder %s76, 1
      %p629 = por %p627, %p628
      %p631 = scmp.ne.s32.totalorder %s616, %s630
      %p632 = scmp.eq.s32.totalorder %s76, 0
      %p633 = por %p631, %p632
      %s635 = sadd.s32 %s634, 1
      %p638 = scmp.eq.s32.totalorder %s70, 1
      %p639 = scmp.ne.s32.totalorder %s634, %s636
      %p640 = scmp.eq.s32.totalorder %s70, 0
      %p641 = por %p639, %p640
      %p642 = scmp.ne.s32.totalorder %s634, %s636
      %p643 = scmp.eq.s32.totalorder %s75, 1
      %p644 = por %p642, %p643
      %p645 = scmp.ne.s32.totalorder %s636, %s637
      %p646 = scmp.eq.s32.totalorder %s75, 0
      %p647 = por %p645, %p646
      %p648 = scmp.ne.s32.totalorder %s636, %s637
      %p649 = scmp.eq.s32.totalorder %s76, 1
      %p650 = por %p648, %p649
      %p652 = scmp.ne.s32.totalorder %s637, %s651
      %p653 = scmp.eq.s32.totalorder %s76, 0
      %p654 = por %p652, %p653
      %s656 = sadd.s32 %s655, 1
      %p659 = scmp.eq.s32.totalorder %s70, 1
      %p660 = scmp.ne.s32.totalorder %s655, %s657
      %p661 = scmp.eq.s32.totalorder %s70, 0
      %p662 = por %p660, %p661
      %p663 = scmp.ne.s32.totalorder %s655, %s657
      %p664 = scmp.eq.s32.totalorder %s75, 1
      %p665 = por %p663, %p664
      %p666 = scmp.ne.s32.totalorder %s657, %s658
      %p667 = scmp.eq.s32.totalorder %s75, 0
      %p668 = por %p666, %p667
      %p669 = scmp.ne.s32.totalorder %s657, %s658
      %p670 = scmp.eq.s32.totalorder %s76, 1
      %p671 = por %p669, %p670
      %p673 = scmp.ne.s32.totalorder %s658, %s672
      %p674 = scmp.eq.s32.totalorder %s76, 0
      %p675 = por %p673, %p674
      %s677 = sadd.s32 %s676, 1
      %p680 = scmp.eq.s32.totalorder %s70, 1
      %p681 = scmp.ne.s32.totalorder %s676, %s678
      %p682 = scmp.eq.s32.totalorder %s70, 0
      %p683 = por %p681, %p682
      %p684 = scmp.ne.s32.totalorder %s676, %s678
      %p685 = scmp.eq.s32.totalorder %s75, 1
      %p686 = por %p684, %p685
      %p687 = scmp.ne.s32.totalorder %s678, %s679
      %p688 = scmp.eq.s32.totalorder %s75, 0
      %p689 = por %p687, %p688
      %p690 = scmp.ne.s32.totalorder %s678, %s679
      %p691 = scmp.eq.s32.totalorder %s76, 1
      %p692 = por %p690, %p691
      %p694 = scmp.ne.s32.totalorder %s679, %s693
      %p695 = scmp.eq.s32.totalorder %s76, 0
      %p696 = por %p694, %p695
      %s698 = sadd.s32 %s697, 1
      %p701 = scmp.eq.s32.totalorder %s70, 1
      %p702 = scmp.ne.s32.totalorder %s697, %s699
      %p703 = scmp.eq.s32.totalorder %s70, 0
      %p704 = por %p702, %p703
      %p705 = scmp.ne.s32.totalorder %s697, %s699
      %p706 = scmp.eq.s32.totalorder %s75, 1
      %p707 = por %p705, %p706
      %p708 = scmp.ne.s32.totalorder %s699, %s700
      %p709 = scmp.eq.s32.totalorder %s75, 0
      %p710 = por %p708, %p709
      %p711 = scmp.ne.s32.totalorder %s699, %s700
      %p712 = scmp.eq.s32.totalorder %s76, 1
      %p713 = por %p711, %p712
      %p715 = scmp.ne.s32.totalorder %s700, %s714
      %p716 = scmp.eq.s32.totalorder %s76, 0
      %p717 = por %p715, %p716
      %s718 = ssub.s32 %s70, %s77
      %p719 = scmp.eq.s32.totalorder %s718, 0
      %s721 = sadd.s32 %s720, 1
      %s722 = scalar_select %p719, %s720, %s721
      %p725 = pneg %p719
      %p726 = scmp.eq.s32.totalorder %s70, 1
      %p727 = por %p725, %p726
      %p728 = scmp.ne.s32.totalorder %s720, %s723
      %p729 = scmp.eq.s32.totalorder %s70, 0
      %p730 = por %p728, %p729
      %p731 = scmp.ne.s32.totalorder %s720, %s723
      %p732 = scmp.eq.s32.totalorder %s75, 1
      %p733 = por %p731, %p732
      %p734 = scmp.ne.s32.totalorder %s723, %s724
      %p735 = scmp.eq.s32.totalorder %s75, 0
      %p736 = por %p734, %p735
      %p737 = scmp.ne.s32.totalorder %s723, %s724
      %p738 = scmp.eq.s32.totalorder %s76, 1
      %p739 = por %p737, %p738
      %p741 = scmp.ne.s32.totalorder %s724, %s740
      %p742 = scmp.eq.s32.totalorder %s76, 0
      %p743 = por %p741, %p742
      %p744 = scmp.le.s32.totalorder 1, %s70
      %p745 = scmp.lt.s32.totalorder %s70, 3
      %p746 = pnand %p744, %p745
      %p747 = pneg %p746
      // Predicated region
      $region9: #{xlnet_lm_encoder_forward.1} parent=5 // pred_check
        _
      $region10: #{xlnet_lm_encoder_forward.1} parent=5 // pred_check_branch
        %749 = sbr.rel (%p746) target = $region12
      $region11: #{xlnet_lm_encoder_forward.1} parent=5 // pred_region
        %s750 = ssub.s32 %s70, 1
        // Predicated region
        $region13: #{xlnet_lm_encoder_forward.1} parent=11 // pred_check
          %p751 = pneg %p143
        $region14: #{xlnet_lm_encoder_forward.1} parent=11 // pred_check_branch
          %753 = sbr.rel (%p751) target = $region16
        $region15: #{xlnet_lm_encoder_forward.1} parent=11 // pred_region
          _
        $region16: #{xlnet_lm_encoder_forward.1} parent=11 // pred_fallthru
          _
        // Predicated region
        $region17: #{xlnet_lm_encoder_forward.1} parent=11 // pred_check
          %p754 = pneg %p164
        $region18: #{xlnet_lm_encoder_forward.1} parent=11 // pred_check_branch
          %756 = sbr.rel (%p754) target = $region20
        $region19: #{xlnet_lm_encoder_forward.1} parent=11 // pred_region
          _
        $region20: #{xlnet_lm_encoder_forward.1} parent=11 // pred_fallthru
          _
        // Predicated region
        $region21: #{xlnet_lm_encoder_forward.1} parent=11 // pred_check
          %p757 = pneg %p185
        $region22: #{xlnet_lm_encoder_forward.1} parent=11 // pred_check_branch
          %759 = sbr.rel (%p757) target = $region24
        $region23: #{xlnet_lm_encoder_forward.1} parent=11 // pred_region
          _
        $region24: #{xlnet_lm_encoder_forward.1} parent=11 // pred_fallthru
          _
        // Predicated region
        $region25: #{xlnet_lm_encoder_forward.1} parent=11 // pred_check
          %p760 = pneg %p206
        $region26: #{xlnet_lm_encoder_forward.1} parent=11 // pred_check_branch
          %762 = sbr.rel (%p760) target = $region28
        $region27: #{xlnet_lm_encoder_forward.1} parent=11 // pred_region
          _
        $region28: #{xlnet_lm_encoder_forward.1} parent=11 // pred_fallthru
          _
        // Predicated region
        $region29: #{xlnet_lm_encoder_forward.1} parent=11 // pred_check
          %p763 = pneg %p227
        $region30: #{xlnet_lm_encoder_forward.1} parent=11 // pred_check_branch
          %765 = sbr.rel (%p763) target = $region32
        $region31: #{xlnet_lm_encoder_forward.1} parent=11 // pred_region
          _
        $region32: #{xlnet_lm_encoder_forward.1} parent=11 // pred_fallthru
          _
        // Predicated region
        $region33: #{xlnet_lm_encoder_forward.1} parent=11 // pred_check
          %p766 = pneg %p248
        $region34: #{xlnet_lm_encoder_forward.1} parent=11 // pred_check_branch
          %768 = sbr.rel (%p766) target = $region36
        $region35: #{xlnet_lm_encoder_forward.1} parent=11 // pred_region
          _
        $region36: #{xlnet_lm_encoder_forward.1} parent=11 // pred_fallthru
          _
        // Predicated region
        $region37: #{xlnet_lm_encoder_forward.1} parent=11 // pred_check
          %p769 = pneg %p269
        $region38: #{xlnet_lm_encoder_forward.1} parent=11 // pred_check_branch
          %771 = sbr.rel (%p769) target = $region40
        $region39: #{xlnet_lm_encoder_forward.1} parent=11 // pred_region
          _
        $region40: #{xlnet_lm_encoder_forward.1} parent=11 // pred_fallthru
          _
        // Predicated region
        $region41: #{xlnet_lm_encoder_forward.1} parent=11 // pred_check
          %p772 = pneg %p290
        $region42: #{xlnet_lm_encoder_forward.1} parent=11 // pred_check_branch
          %774 = sbr.rel (%p772) target = $region44
        $region43: #{xlnet_lm_encoder_forward.1} parent=11 // pred_region
          _
        $region44: #{xlnet_lm_encoder_forward.1} parent=11 // pred_fallthru
          _
        // Predicated region
        $region45: #{xlnet_lm_encoder_forward.1} parent=11 // pred_check
          %p775 = pneg %p311
        $region46: #{xlnet_lm_encoder_forward.1} parent=11 // pred_check_branch
          %777 = sbr.rel (%p775) target = $region48
        $region47: #{xlnet_lm_encoder_forward.1} parent=11 // pred_region
          _
        $region48: #{xlnet_lm_encoder_forward.1} parent=11 // pred_fallthru
          _
        // Predicated region
        $region49: #{xlnet_lm_encoder_forward.1} parent=11 // pred_check
          %p778 = pneg %p332
        $region50: #{xlnet_lm_encoder_forward.1} parent=11 // pred_check_branch
          %780 = sbr.rel (%p778) target = $region52
        $region51: #{xlnet_lm_encoder_forward.1} parent=11 // pred_region
          _
        $region52: #{xlnet_lm_encoder_forward.1} parent=11 // pred_fallthru
          _
        // Predicated region
        $region53: #{xlnet_lm_encoder_forward.1} parent=11 // pred_check
          %p781 = pneg %p353
        $region54: #{xlnet_lm_encoder_forward.1} parent=11 // pred_check_branch
          %783 = sbr.rel (%p781) target = $region56
        $region55: #{xlnet_lm_encoder_forward.1} parent=11 // pred_region
          _
        $region56: #{xlnet_lm_encoder_forward.1} parent=11 // pred_fallthru
          _
        // Predicated region
        $region57: #{xlnet_lm_encoder_forward.1} parent=11 // pred_check
          %p784 = pneg %p374
        $region58: #{xlnet_lm_encoder_forward.1} parent=11 // pred_check_branch
          %786 = sbr.rel (%p784) target = $region60
        $region59: #{xlnet_lm_encoder_forward.1} parent=11 // pred_region
          _
        $region60: #{xlnet_lm_encoder_forward.1} parent=11 // pred_fallthru
          _
        // Predicated region
        $region61: #{xlnet_lm_encoder_forward.1} parent=11 // pred_check
          %p787 = pneg %p395
        $region62: #{xlnet_lm_encoder_forward.1} parent=11 // pred_check_branch
          %789 = sbr.rel (%p787) target = $region64
        $region63: #{xlnet_lm_encoder_forward.1} parent=11 // pred_region
          _
        $region64: #{xlnet_lm_encoder_forward.1} parent=11 // pred_fallthru
          _
        // Predicated region
        $region65: #{xlnet_lm_encoder_forward.1} parent=11 // pred_check
          %p790 = pneg %p416
        $region66: #{xlnet_lm_encoder_forward.1} parent=11 // pred_check_branch
          %792 = sbr.rel (%p790) target = $region68
        $region67: #{xlnet_lm_encoder_forward.1} parent=11 // pred_region
          _
        $region68: #{xlnet_lm_encoder_forward.1} parent=11 // pred_fallthru
          _
        // Predicated region
        $region69: #{xlnet_lm_encoder_forward.1} parent=11 // pred_check
          %p793 = pneg %p437
        $region70: #{xlnet_lm_encoder_forward.1} parent=11 // pred_check_branch
          %795 = sbr.rel (%p793) target = $region72
        $region71: #{xlnet_lm_encoder_forward.1} parent=11 // pred_region
          _
        $region72: #{xlnet_lm_encoder_forward.1} parent=11 // pred_fallthru
          _
        // Predicated region
        $region73: #{xlnet_lm_encoder_forward.1} parent=11 // pred_check
          %p796 = pneg %p458
        $region74: #{xlnet_lm_encoder_forward.1} parent=11 // pred_check_branch
          %798 = sbr.rel (%p796) target = $region76
        $region75: #{xlnet_lm_encoder_forward.1} parent=11 // pred_region
          _
        $region76: #{xlnet_lm_encoder_forward.1} parent=11 // pred_fallthru
          _
        // Predicated region
        $region77: #{xlnet_lm_encoder_forward.1} parent=11 // pred_check
          %p799 = pneg %p479
        $region78: #{xlnet_lm_encoder_forward.1} parent=11 // pred_check_branch
          %801 = sbr.rel (%p799) target = $region80
        $region79: #{xlnet_lm_encoder_forward.1} parent=11 // pred_region
          _
        $region80: #{xlnet_lm_encoder_forward.1} parent=11 // pred_fallthru
          _
        // Predicated region
        $region81: #{xlnet_lm_encoder_forward.1} parent=11 // pred_check
          %p802 = pneg %p500
        $region82: #{xlnet_lm_encoder_forward.1} parent=11 // pred_check_branch
          %804 = sbr.rel (%p802) target = $region84
        $region83: #{xlnet_lm_encoder_forward.1} parent=11 // pred_region
          _
        $region84: #{xlnet_lm_encoder_forward.1} parent=11 // pred_fallthru
          _
        // Predicated region
        $region85: #{xlnet_lm_encoder_forward.1} parent=11 // pred_check
          %p805 = pneg %p521
        $region86: #{xlnet_lm_encoder_forward.1} parent=11 // pred_check_branch
          %807 = sbr.rel (%p805) target = $region88
        $region87: #{xlnet_lm_encoder_forward.1} parent=11 // pred_region
          _
        $region88: #{xlnet_lm_encoder_forward.1} parent=11 // pred_fallthru
          _
        // Predicated region
        $region89: #{xlnet_lm_encoder_forward.1} parent=11 // pred_check
          %p808 = pneg %p542
        $region90: #{xlnet_lm_encoder_forward.1} parent=11 // pred_check_branch
          %810 = sbr.rel (%p808) target = $region92
        $region91: #{xlnet_lm_encoder_forward.1} parent=11 // pred_region
          _
        $region92: #{xlnet_lm_encoder_forward.1} parent=11 // pred_fallthru
          _
        // Predicated region
        $region93: #{xlnet_lm_encoder_forward.1} parent=11 // pred_check
          %p811 = pneg %p563
        $region94: #{xlnet_lm_encoder_forward.1} parent=11 // pred_check_branch
          %813 = sbr.rel (%p811) target = $region96
        $region95: #{xlnet_lm_encoder_forward.1} parent=11 // pred_region
          _
        $region96: #{xlnet_lm_encoder_forward.1} parent=11 // pred_fallthru
          _
        // Predicated region
        $region97: #{xlnet_lm_encoder_forward.1} parent=11 // pred_check
          %p814 = pneg %p584
        $region98: #{xlnet_lm_encoder_forward.1} parent=11 // pred_check_branch
          %816 = sbr.rel (%p814) target = $region100
        $region99: #{xlnet_lm_encoder_forward.1} parent=11 // pred_region
          _
        $region100: #{xlnet_lm_encoder_forward.1} parent=11 // pred_fallthru
          _
        // Predicated region
        $region101: #{xlnet_lm_encoder_forward.1} parent=11 // pred_check
          %p817 = pneg %p605
        $region102: #{xlnet_lm_encoder_forward.1} parent=11 // pred_check_branch
          %819 = sbr.rel (%p817) target = $region104
        $region103: #{xlnet_lm_encoder_forward.1} parent=11 // pred_region
          _
        $region104: #{xlnet_lm_encoder_forward.1} parent=11 // pred_fallthru
          _
        // Predicated region
        $region105: #{xlnet_lm_encoder_forward.1} parent=11 // pred_check
          %p820 = pneg %p626
        $region106: #{xlnet_lm_encoder_forward.1} parent=11 // pred_check_branch
          %822 = sbr.rel (%p820) target = $region108
        $region107: #{xlnet_lm_encoder_forward.1} parent=11 // pred_region
          _
        $region108: #{xlnet_lm_encoder_forward.1} parent=11 // pred_fallthru
          _
        // Predicated region
        $region109: #{xlnet_lm_encoder_forward.1} parent=11 // pred_check
          %p823 = pneg %p647
        $region110: #{xlnet_lm_encoder_forward.1} parent=11 // pred_check_branch
          %825 = sbr.rel (%p823) target = $region112
        $region111: #{xlnet_lm_encoder_forward.1} parent=11 // pred_region
          _
        $region112: #{xlnet_lm_encoder_forward.1} parent=11 // pred_fallthru
          _
        // Predicated region
        $region113: #{xlnet_lm_encoder_forward.1} parent=11 // pred_check
          %p826 = pneg %p668
        $region114: #{xlnet_lm_encoder_forward.1} parent=11 // pred_check_branch
          %828 = sbr.rel (%p826) target = $region116
        $region115: #{xlnet_lm_encoder_forward.1} parent=11 // pred_region
          _
        $region116: #{xlnet_lm_encoder_forward.1} parent=11 // pred_fallthru
          _
        // Predicated region
        $region117: #{xlnet_lm_encoder_forward.1} parent=11 // pred_check
          %p829 = pneg %p689
        $region118: #{xlnet_lm_encoder_forward.1} parent=11 // pred_check_branch
          %831 = sbr.rel (%p829) target = $region120
        $region119: #{xlnet_lm_encoder_forward.1} parent=11 // pred_region
          _
        $region120: #{xlnet_lm_encoder_forward.1} parent=11 // pred_fallthru
          _
        // Predicated region
        $region121: #{xlnet_lm_encoder_forward.1} parent=11 // pred_check
          %p832 = pneg %p710
        $region122: #{xlnet_lm_encoder_forward.1} parent=11 // pred_check_branch
          %834 = sbr.rel (%p832) target = $region124
        $region123: #{xlnet_lm_encoder_forward.1} parent=11 // pred_region
          _
        $region124: #{xlnet_lm_encoder_forward.1} parent=11 // pred_fallthru
          _
      $region12: #{xlnet_lm_encoder_forward.1} parent=5 // pred_fallthru
        _
      %p835 = scmp.lt.s32.totalorder %s70, 2
      // Predicated region
      $region125: #{xlnet_lm_encoder_forward.1} parent=5 // pred_check
        %p836 = pneg %p835
      $region126: #{xlnet_lm_encoder_forward.1} parent=5 // pred_check_branch
        %838 = sbr.rel (%p836) target = $region128
      $region127: #{xlnet_lm_encoder_forward.1} parent=5 // pred_region
        // Predicated region
        $region129: #{xlnet_lm_encoder_forward.1} parent=127 // pred_check
          %p839 = pneg %p90
        $region130: #{xlnet_lm_encoder_forward.1} parent=127 // pred_check_branch
          %841 = sbr.rel (%p839) target = $region132
        $region131: #{xlnet_lm_encoder_forward.1} parent=127 // pred_region
          %p842 = scmp.lt.s32.totalorder %s70, 1
          %s843 = scalar_select %p842, %s70, 1
          %s844 = smul.addr %s843, 5
          %s845 = smul.addr %s844, 8
          %s846 = scalar_lea.vmem %s1, %s845
        $region132: #{xlnet_lm_encoder_forward.1} parent=127 // pred_fallthru
          _
        // Predicated region
        $region133: #{xlnet_lm_encoder_forward.1} parent=127 // pred_check
          %p847 = pneg %p116
        $region134: #{xlnet_lm_encoder_forward.1} parent=127 // pred_check_branch
          %849 = sbr.rel (%p847) target = $region136
        $region135: #{xlnet_lm_encoder_forward.1} parent=127 // pred_region
          %p850 = scmp.lt.s32.totalorder %s70, 1
          %s851 = scalar_select %p850, %s70, 1
          %s852 = smul.addr %s851, 8
          %s853 = scalar_lea.vmem %s3, %s852
        $region136: #{xlnet_lm_encoder_forward.1} parent=127 // pred_fallthru
          _
      $region128: #{xlnet_lm_encoder_forward.1} parent=5 // pred_fallthru
        _
      %p854 = scmp.le.s32.totalorder 1, %s70
      %p855 = scmp.lt.s32.totalorder %s70, 3
      %p856 = pnand %p854, %p855
      %p857 = pneg %p856
      // Predicated region
      $region137: #{xlnet_lm_encoder_forward.1} parent=5 // pred_check
        _
      $region138: #{xlnet_lm_encoder_forward.1} parent=5 // pred_check_branch
        %859 = sbr.rel (%p856) target = $region140
      $region139: #{xlnet_lm_encoder_forward.1} parent=5 // pred_region
        %s860 = ssub.s32 %s70, 1
        %p861 = scmp.lt.s32.totalorder %s75, 1
        %s862 = scalar_select %p861, %s75, 1
        %s863 = smul.addr %s862, 5
        %s864 = smul.addr %s863, 8
        %s865 = scalar_lea.vmem %s1, %s864
        %p866 = pneg %p96
        %p867 = pneg %p93
        %p868 = scmp.lt.s32.totalorder %s75, 1
        %s869 = scalar_select %p868, %s75, 1
        %s870 = smul.addr %s869, 8
        %s871 = scalar_lea.vmem %s3, %s870
        %p872 = pneg %p122
        %p873 = pneg %p119
        %p874 = pneg %p143
        %p875 = pneg %p140
        %p876 = pneg %p164
        %p877 = pneg %p161
        %p878 = pneg %p185
        %p879 = pneg %p182
        %p880 = pneg %p206
        %p881 = pneg %p203
        %p882 = pneg %p227
        %p883 = pneg %p224
        %p884 = pneg %p248
        %p885 = pneg %p245
        %p886 = pneg %p269
        %p887 = pneg %p266
        %p888 = pneg %p290
        %p889 = pneg %p287
        %p890 = pneg %p311
        %p891 = pneg %p308
        %p892 = pneg %p332
        %p893 = pneg %p329
        %p894 = pneg %p353
        %p895 = pneg %p350
        %p896 = pneg %p374
        %p897 = pneg %p371
        %p898 = pneg %p395
        %p899 = pneg %p392
        %p900 = pneg %p416
        %p901 = pneg %p413
        %p902 = pneg %p437
        %p903 = pneg %p434
        %p904 = pneg %p458
        %p905 = pneg %p455
        %p906 = pneg %p479
        %p907 = pneg %p476
        %p908 = pneg %p500
        %p909 = pneg %p497
        %p910 = pneg %p521
        %p911 = pneg %p518
        %p912 = pneg %p542
        %p913 = pneg %p539
        %p914 = pneg %p563
        %p915 = pneg %p560
        %p916 = pneg %p584
        %p917 = pneg %p581
        %p918 = pneg %p605
        %p919 = pneg %p602
        %p920 = pneg %p626
        %p921 = pneg %p623
        %p922 = pneg %p647
        %p923 = pneg %p644
        %p924 = pneg %p668
        %p925 = pneg %p665
        %p926 = pneg %p689
        %p927 = pneg %p686
        %p928 = pneg %p710
        %p929 = pneg %p707
        %p930 = pneg %p736
        %p931 = pneg %p733
        %s932 = sand.u32 %s723, 1
        %s933 = scalar_lea.sflag [#allocation3], %s932
        %s934 = sand.u32 %s723, 1
        %s935 = smul.addr %s934, 8
        %s936 = scalar_lea.vmem [#allocation2], %s935
        %p937 = scmp.lt.s32.totalorder %s75, 1
        %s938 = scalar_select %p937, %s75, 1
        %s939 = smul.addr %s938, 5
        %s940 = smul.addr %s939, 8
        %s941 = scalar_lea.vmem %s1, %s940
        %p942 = scmp.lt.s32.totalorder %s75, 1
        %s943 = scalar_select %p942, %s75, 1
        %s944 = smul.addr %s943, 8
        %s945 = scalar_lea.vmem %s3, %s944
        %v946 = vld [vmem:[%s941] sm:$0xff]
        %v947 = vld [vmem:[%s941 + $0x8] sm:$0xff]
        %v948 = vld [vmem:[%s941 + $0x10] sm:$0xff]
        %v949 = vld [vmem:[%s941 + $0x18] sm:$0xff]
        %v950 = vld [vmem:[%s941 + $0x20] sm:$0xff]
        %v951 = vld [vmem:[%s5] sm:$0xff]
        %v952 = vld [vmem:[%s5 + $0x8] sm:$0xff]
        %v953 = vld [vmem:[%s5 + $0x10] sm:$0xff]
        %v954 = vld [vmem:[%s5 + $0x18] sm:$0xff]
        %v955 = vld [vmem:[%s5 + $0x20] sm:$0xff]
        %v956 = vld [vmem:[%s5 + $0x28] sm:$0xff]
        %v957 = vld [vmem:[%s5 + $0x30] sm:$0xff]
        %v958 = vld [vmem:[%s5 + $0x38] sm:$0xff]
        %v959 = vld [vmem:[%s5 + $0x40] sm:$0xff]
        %v960 = vld [vmem:[%s5 + $0x48] sm:$0xff]
        %v961 = vld [vmem:[%s5 + $0x50] sm:$0xff]
        %v962 = vld [vmem:[%s5 + $0x58] sm:$0xff]
        %v963 = vld [vmem:[%s5 + $0x60] sm:$0xff]
        %v964 = vld [vmem:[%s5 + $0x68] sm:$0xff]
        %v965 = vld [vmem:[%s5 + $0x70] sm:$0xff]
        %v966 = vld [vmem:[%s5 + $0x78] sm:$0xff]
        %v967 = vld [vmem:[%s5 + $0x80] sm:$0xff]
        %v968 = vld [vmem:[%s5 + $0x88] sm:$0xff]
        %v969 = vld [vmem:[%s5 + $0x90] sm:$0xff]
        %v970 = vld [vmem:[%s5 + $0x98] sm:$0xff]
        %v971 = vld [vmem:[%s5 + $0xa0] sm:$0xff]
        %v972 = vld [vmem:[%s5 + $0xa8] sm:$0xff]
        %v973 = vld [vmem:[%s5 + $0xb0] sm:$0xff]
        %v974 = vld [vmem:[%s5 + $0xb8] sm:$0xff]
        %v975 = vld [vmem:[%s5 + $0xc0] sm:$0xff]
        %v976 = vld [vmem:[%s5 + $0xc8] sm:$0xff]
        %v977 = vld [vmem:[%s5 + $0xd0] sm:$0xff]
        %v978 = vld [vmem:[%s5 + $0xd8] sm:$0xff]
        %v979 = vld [vmem:[%s5 + $0xe0] sm:$0xff]
        %v980 = vld [vmem:[%s5 + $0xe8] sm:$0xff]
        %v981 = vld [vmem:[%s5 + $0xf0] sm:$0xff]
        %v982 = vld [vmem:[%s5 + $0xf8] sm:$0xff]
        %v983 = vld [vmem:[%s5 + $0x100] sm:$0xff]
        %v984 = vld [vmem:[%s5 + $0x108] sm:$0xff]
        %v985 = vld [vmem:[%s5 + $0x110] sm:$0xff]
        %v986 = vld [vmem:[%s5 + $0x118] sm:$0xff]
        %v987 = vld [vmem:[%s5 + $0x120] sm:$0xff]
        %v988 = vld [vmem:[%s5 + $0x128] sm:$0xff]
        %v989 = vld [vmem:[%s5 + $0x130] sm:$0xff]
        %v990 = vld [vmem:[%s5 + $0x138] sm:$0xff]
        %v991 = vld [vmem:[%s5 + $0x140] sm:$0xff]
        %v992 = vld [vmem:[%s5 + $0x148] sm:$0xff]
        %v993 = vld [vmem:[%s5 + $0x150] sm:$0xff]
        %v994 = vld [vmem:[%s5 + $0x158] sm:$0xff]
        %v995 = vld [vmem:[%s5 + $0x160] sm:$0xff]
        %v996 = vld [vmem:[%s5 + $0x168] sm:$0xff]
        %v997 = vld [vmem:[%s5 + $0x170] sm:$0xff]
        %v998 = vld [vmem:[%s5 + $0x178] sm:$0xff]
        %v999 = vld [vmem:[%s5 + $0x180] sm:$0xff]
        %v1000 = vld [vmem:[%s5 + $0x188] sm:$0xff]
        %v1001 = vld [vmem:[%s5 + $0x190] sm:$0xff]
        %v1002 = vld [vmem:[%s5 + $0x198] sm:$0xff]
        %v1003 = vld [vmem:[%s5 + $0x1a0] sm:$0xff]
        %v1004 = vld [vmem:[%s5 + $0x1a8] sm:$0xff]
        %v1005 = vld [vmem:[%s5 + $0x1b0] sm:$0xff]
        %v1006 = vld [vmem:[%s5 + $0x1b8] sm:$0xff]
        %v1007 = vld [vmem:[%s5 + $0x1c0] sm:$0xff]
        %v1008 = vld [vmem:[%s5 + $0x1c8] sm:$0xff]
        %v1009 = vld [vmem:[%s5 + $0x1d0] sm:$0xff]
        %v1010 = vld [vmem:[%s5 + $0x1d8] sm:$0xff]
        %v1011 = vld [vmem:[%s5 + $0x1e0] sm:$0xff]
        %v1012 = vld [vmem:[%s5 + $0x1e8] sm:$0xff]
        %v1013 = vld [vmem:[%s5 + $0x1f0] sm:$0xff]
        %v1014 = vld [vmem:[%s5 + $0x1f8] sm:$0xff]
        %v1015 = vld [vmem:[%s5 + $0x200] sm:$0xff]
        %v1016 = vld [vmem:[%s5 + $0x208] sm:$0xff]
        %v1017 = vld [vmem:[%s5 + $0x210] sm:$0xff]
        %v1018 = vld [vmem:[%s5 + $0x218] sm:$0xff]
        %v1019 = vld [vmem:[%s5 + $0x220] sm:$0xff]
        %v1020 = vld [vmem:[%s5 + $0x228] sm:$0xff]
        %v1021 = vld [vmem:[%s5 + $0x230] sm:$0xff]
        %v1022 = vld [vmem:[%s5 + $0x238] sm:$0xff]
        %v1023 = vld [vmem:[%s5 + $0x240] sm:$0xff]
        %v1024 = vld [vmem:[%s5 + $0x248] sm:$0xff]
        %v1025 = vld [vmem:[%s5 + $0x250] sm:$0xff]
        %v1026 = vld [vmem:[%s5 + $0x258] sm:$0xff]
        %v1027 = vld [vmem:[%s5 + $0x260] sm:$0xff]
        %v1028 = vld [vmem:[%s5 + $0x268] sm:$0xff]
        %v1029 = vld [vmem:[%s5 + $0x270] sm:$0xff]
        %v1030 = vld [vmem:[%s5 + $0x278] sm:$0xff]
        %v1031 = vld [vmem:[%s7] sm:$0x1]
        %v1033 = vperm.slane %v1031, 0
        %1035 = vmatpush.msra.mxu0 %v966
        %1036 = vmatpush.msra.mxu0 %v965
        %1037 = vmatpush.msra.mxu0 %v964
        %1038 = vmatpush.msra.mxu0 %v963
        %1039 = vmatpush.msra.mxu0 %v962
        %1040 = vmatpush.msra.mxu0 %v961
        %1041 = vmatpush.msra.mxu0 %v960
        %1042 = vmatpush.msra.mxu0 %v959
        %1043 = vmatpush.msra.mxu0 %v958
        %1044 = vmatpush.msra.mxu0 %v957
        %1045 = vmatpush.msra.mxu0 %v956
        %1046 = vmatpush.msra.mxu0 %v955
        %1047 = vmatpush.msra.mxu0 %v954
        %1048 = vmatpush.msra.mxu0 %v953
        %1049 = vmatpush.msra.mxu0 %v952
        %1050 = vmatpush.msra.mxu0 %v951
        %1051 = vmatmul.f32.gmra.mxu0 %v946
        %v1052 = vpop.f32.mrf.mxu0
        %v1053 = vadd.f32 %v1033, %v1052
        %1054 = vdwg.mxu0
        %1055 = vmatpush.msra.mxu0 %v982
        %1056 = vmatpush.msra.mxu0 %v981
        %1057 = vmatpush.msra.mxu0 %v980
        %1058 = vmatpush.msra.mxu0 %v979
        %1059 = vmatpush.msra.mxu0 %v978
        %1060 = vmatpush.msra.mxu0 %v977
        %1061 = vmatpush.msra.mxu0 %v976
        %1062 = vmatpush.msra.mxu0 %v975
        %1063 = vmatpush.msra.mxu0 %v974
        %1064 = vmatpush.msra.mxu0 %v973
        %1065 = vmatpush.msra.mxu0 %v972
        %1066 = vmatpush.msra.mxu0 %v971
        %1067 = vmatpush.msra.mxu0 %v970
        %1068 = vmatpush.msra.mxu0 %v969
        %1069 = vmatpush.msra.mxu0 %v968
        %1070 = vmatpush.msra.mxu0 %v967
        %1071 = vmatmul.f32.gmra.mxu0 %v947
        %v1072 = vpop.f32.mrf.mxu0
        %v1073 = vadd.f32 %v1053, %v1072
        %1074 = vdwg.mxu0
        %1075 = vmatpush.msra.mxu0 %v998
        %1076 = vmatpush.msra.mxu0 %v997
        %1077 = vmatpush.msra.mxu0 %v996
        %1078 = vmatpush.msra.mxu0 %v995
        %1079 = vmatpush.msra.mxu0 %v994
        %1080 = vmatpush.msra.mxu0 %v993
        %1081 = vmatpush.msra.mxu0 %v992
        %1082 = vmatpush.msra.mxu0 %v991
        %1083 = vmatpush.msra.mxu0 %v990
        %1084 = vmatpush.msra.mxu0 %v989
        %1085 = vmatpush.msra.mxu0 %v988
        %1086 = vmatpush.msra.mxu0 %v987
        %1087 = vmatpush.msra.mxu0 %v986
        %1088 = vmatpush.msra.mxu0 %v985
        %1089 = vmatpush.msra.mxu0 %v984
        %1090 = vmatpush.msra.mxu0 %v983
        %1091 = vmatmul.f32.gmra.mxu0 %v948
        %v1092 = vpop.f32.mrf.mxu0
        %v1093 = vadd.f32 %v1073, %v1092
        %1094 = vdwg.mxu0
        %1095 = vmatpush.msra.mxu0 %v1014
        %1096 = vmatpush.msra.mxu0 %v1013
        %1097 = vmatpush.msra.mxu0 %v1012
        %1098 = vmatpush.msra.mxu0 %v1011
        %1099 = vmatpush.msra.mxu0 %v1010
        %1100 = vmatpush.msra.mxu0 %v1009
        %1101 = vmatpush.msra.mxu0 %v1008
        %1102 = vmatpush.msra.mxu0 %v1007
        %1103 = vmatpush.msra.mxu0 %v1006
        %1104 = vmatpush.msra.mxu0 %v1005
        %1105 = vmatpush.msra.mxu0 %v1004
        %1106 = vmatpush.msra.mxu0 %v1003
        %1107 = vmatpush.msra.mxu0 %v1002
        %1108 = vmatpush.msra.mxu0 %v1001
        %1109 = vmatpush.msra.mxu0 %v1000
        %1110 = vmatpush.msra.mxu0 %v999
        %1111 = vmatmul.f32.gmra.mxu0 %v949
        %v1112 = vpop.f32.mrf.mxu0
        %v1113 = vadd.f32 %v1093, %v1112
        %1114 = vdwg.mxu0
        %1115 = vmatpush.msra.mxu0 %v1030
        %1116 = vmatpush.msra.mxu0 %v1029
        %1117 = vmatpush.msra.mxu0 %v1028
        %1118 = vmatpush.msra.mxu0 %v1027
        %1119 = vmatpush.msra.mxu0 %v1026
        %1120 = vmatpush.msra.mxu0 %v1025
        %1121 = vmatpush.msra.mxu0 %v1024
        %1122 = vmatpush.msra.mxu0 %v1023
        %1123 = vmatpush.msra.mxu0 %v1022
        %1124 = vmatpush.msra.mxu0 %v1021
        %1125 = vmatpush.msra.mxu0 %v1020
        %1126 = vmatpush.msra.mxu0 %v1019
        %1127 = vmatpush.msra.mxu0 %v1018
        %1128 = vmatpush.msra.mxu0 %v1017
        %1129 = vmatpush.msra.mxu0 %v1016
        %1130 = vmatpush.msra.mxu0 %v1015
        %1131 = vmatmul.f32.gmra.mxu0 %v950
        %v1132 = vpop.f32.mrf.mxu0
        %v1133 = vadd.f32 %v1113, %v1132
        %1134 = vdwg.mxu0
        %v1135 = vtanh.pop %v1133
        %v1136 = vld [vmem:[%s945] sm:$0xff]
        %v1137 = vld [vmem:[%s9] sm:$0xff]
        %v1138 = vld [vmem:[%s9 + $0x8] sm:$0xff]
        %v1139 = vld [vmem:[%s9 + $0x10] sm:$0xff]
        %v1140 = vld [vmem:[%s9 + $0x18] sm:$0xff]
        %v1141 = vld [vmem:[%s9 + $0x20] sm:$0xff]
        %v1142 = vld [vmem:[%s9 + $0x28] sm:$0xff]
        %v1143 = vld [vmem:[%s9 + $0x30] sm:$0xff]
        %v1144 = vld [vmem:[%s9 + $0x38] sm:$0xff]
        %v1145 = vld [vmem:[%s9 + $0x40] sm:$0xff]
        %v1146 = vld [vmem:[%s9 + $0x48] sm:$0xff]
        %v1147 = vld [vmem:[%s9 + $0x50] sm:$0xff]
        %v1148 = vld [vmem:[%s9 + $0x58] sm:$0xff]
        %v1149 = vld [vmem:[%s9 + $0x60] sm:$0xff]
        %v1150 = vld [vmem:[%s9 + $0x68] sm:$0xff]
        %v1151 = vld [vmem:[%s9 + $0x70] sm:$0xff]
        %v1152 = vld [vmem:[%s9 + $0x78] sm:$0xff]
        %v1153 = vld [vmem:[%s9 + $0x80] sm:$0xff]
        %v1154 = vld [vmem:[%s9 + $0x88] sm:$0xff]
        %v1155 = vld [vmem:[%s9 + $0x90] sm:$0xff]
        %v1156 = vld [vmem:[%s9 + $0x98] sm:$0xff]
        %v1157 = vld [vmem:[%s9 + $0xa0] sm:$0xff]
        %v1158 = vld [vmem:[%s9 + $0xa8] sm:$0xff]
        %v1159 = vld [vmem:[%s9 + $0xb0] sm:$0xff]
        %v1160 = vld [vmem:[%s9 + $0xb8] sm:$0xff]
        %v1161 = vld [vmem:[%s9 + $0xc0] sm:$0xff]
        %v1162 = vld [vmem:[%s9 + $0xc8] sm:$0xff]
        %v1163 = vld [vmem:[%s9 + $0xd0] sm:$0xff]
        %v1164 = vld [vmem:[%s9 + $0xd8] sm:$0xff]
        %v1165 = vld [vmem:[%s9 + $0xe0] sm:$0xff]
        %v1166 = vld [vmem:[%s9 + $0xe8] sm:$0xff]
        %v1167 = vld [vmem:[%s9 + $0xf0] sm:$0xff]
        %v1168 = vld [vmem:[%s9 + $0xf8] sm:$0xff]
        %v1169 = vld [vmem:[%s9 + $0x100] sm:$0xff]
        %v1170 = vld [vmem:[%s9 + $0x108] sm:$0xff]
        %v1171 = vld [vmem:[%s9 + $0x110] sm:$0xff]
        %v1172 = vld [vmem:[%s9 + $0x118] sm:$0xff]
        %v1173 = vld [vmem:[%s9 + $0x120] sm:$0xff]
        %v1174 = vld [vmem:[%s9 + $0x128] sm:$0xff]
        %v1175 = vld [vmem:[%s9 + $0x130] sm:$0xff]
        %v1176 = vld [vmem:[%s9 + $0x138] sm:$0xff]
        %v1177 = vld [vmem:[%s9 + $0x140] sm:$0xff]
        %v1178 = vld [vmem:[%s9 + $0x148] sm:$0xff]
        %v1179 = vld [vmem:[%s9 + $0x150] sm:$0xff]
        %v1180 = vld [vmem:[%s9 + $0x158] sm:$0xff]
        %v1181 = vld [vmem:[%s9 + $0x160] sm:$0xff]
        %v1182 = vld [vmem:[%s9 + $0x168] sm:$0xff]
        %v1183 = vld [vmem:[%s9 + $0x170] sm:$0xff]
        %v1184 = vld [vmem:[%s9 + $0x178] sm:$0xff]
        %v1185 = vld [vmem:[%s9 + $0x180] sm:$0xff]
        %v1186 = vld [vmem:[%s9 + $0x188] sm:$0xff]
        %v1187 = vld [vmem:[%s9 + $0x190] sm:$0xff]
        %v1188 = vld [vmem:[%s9 + $0x198] sm:$0xff]
        %v1189 = vld [vmem:[%s9 + $0x1a0] sm:$0xff]
        %v1190 = vld [vmem:[%s9 + $0x1a8] sm:$0xff]
        %v1191 = vld [vmem:[%s9 + $0x1b0] sm:$0xff]
        %v1192 = vld [vmem:[%s9 + $0x1b8] sm:$0xff]
        %v1193 = vld [vmem:[%s9 + $0x1c0] sm:$0xff]
        %v1194 = vld [vmem:[%s9 + $0x1c8] sm:$0xff]
        %v1195 = vld [vmem:[%s9 + $0x1d0] sm:$0xff]
        %v1196 = vld [vmem:[%s9 + $0x1d8] sm:$0xff]
        %v1197 = vld [vmem:[%s9 + $0x1e0] sm:$0xff]
        %v1198 = vld [vmem:[%s9 + $0x1e8] sm:$0xff]
        %v1199 = vld [vmem:[%s9 + $0x1f0] sm:$0xff]
        %v1200 = vld [vmem:[%s9 + $0x1f8] sm:$0xff]
        %v1201 = vld [vmem:[%s9 + $0x200] sm:$0xff]
        %v1202 = vld [vmem:[%s9 + $0x208] sm:$0xff]
        %v1203 = vld [vmem:[%s9 + $0x210] sm:$0xff]
        %v1204 = vld [vmem:[%s9 + $0x218] sm:$0xff]
        %v1205 = vld [vmem:[%s9 + $0x220] sm:$0xff]
        %v1206 = vld [vmem:[%s9 + $0x228] sm:$0xff]
        %v1207 = vld [vmem:[%s9 + $0x230] sm:$0xff]
        %v1208 = vld [vmem:[%s9 + $0x238] sm:$0xff]
        %v1209 = vld [vmem:[%s9 + $0x240] sm:$0xff]
        %v1210 = vld [vmem:[%s9 + $0x248] sm:$0xff]
        %v1211 = vld [vmem:[%s9 + $0x250] sm:$0xff]
        %v1212 = vld [vmem:[%s9 + $0x258] sm:$0xff]
        %v1213 = vld [vmem:[%s9 + $0x260] sm:$0xff]
        %v1214 = vld [vmem:[%s9 + $0x268] sm:$0xff]
        %v1215 = vld [vmem:[%s9 + $0x270] sm:$0xff]
        %v1216 = vld [vmem:[%s9 + $0x278] sm:$0xff]
        %v1217 = vld [vmem:[%s9 + $0x280] sm:$0xff]
        %v1218 = vld [vmem:[%s9 + $0x288] sm:$0xff]
        %v1219 = vld [vmem:[%s9 + $0x290] sm:$0xff]
        %v1220 = vld [vmem:[%s9 + $0x298] sm:$0xff]
        %v1221 = vld [vmem:[%s9 + $0x2a0] sm:$0xff]
        %v1222 = vld [vmem:[%s9 + $0x2a8] sm:$0xff]
        %v1223 = vld [vmem:[%s9 + $0x2b0] sm:$0xff]
        %v1224 = vld [vmem:[%s9 + $0x2b8] sm:$0xff]
        %v1225 = vld [vmem:[%s9 + $0x2c0] sm:$0xff]
        %v1226 = vld [vmem:[%s9 + $0x2c8] sm:$0xff]
        %v1227 = vld [vmem:[%s9 + $0x2d0] sm:$0xff]
        %v1228 = vld [vmem:[%s9 + $0x2d8] sm:$0xff]
        %v1229 = vld [vmem:[%s9 + $0x2e0] sm:$0xff]
        %v1230 = vld [vmem:[%s9 + $0x2e8] sm:$0xff]
        %v1231 = vld [vmem:[%s9 + $0x2f0] sm:$0xff]
        %v1232 = vld [vmem:[%s9 + $0x2f8] sm:$0xff]
        %v1233 = vld [vmem:[%s9 + $0x300] sm:$0xff]
        %v1234 = vld [vmem:[%s9 + $0x308] sm:$0xff]
        %v1235 = vld [vmem:[%s9 + $0x310] sm:$0xff]
        %v1236 = vld [vmem:[%s9 + $0x318] sm:$0xff]
        %v1237 = vld [vmem:[%s9 + $0x320] sm:$0xff]
        %v1238 = vld [vmem:[%s9 + $0x328] sm:$0xff]
        %v1239 = vld [vmem:[%s9 + $0x330] sm:$0xff]
        %v1240 = vld [vmem:[%s9 + $0x338] sm:$0xff]
        %v1241 = vld [vmem:[%s9 + $0x340] sm:$0xff]
        %v1242 = vld [vmem:[%s9 + $0x348] sm:$0xff]
        %v1243 = vld [vmem:[%s9 + $0x350] sm:$0xff]
        %v1244 = vld [vmem:[%s9 + $0x358] sm:$0xff]
        %v1245 = vld [vmem:[%s9 + $0x360] sm:$0xff]
        %v1246 = vld [vmem:[%s9 + $0x368] sm:$0xff]
        %v1247 = vld [vmem:[%s9 + $0x370] sm:$0xff]
        %v1248 = vld [vmem:[%s9 + $0x378] sm:$0xff]
        %v1249 = vld [vmem:[%s9 + $0x380] sm:$0xff]
        %v1250 = vld [vmem:[%s9 + $0x388] sm:$0xff]
        %v1251 = vld [vmem:[%s9 + $0x390] sm:$0xff]
        %v1252 = vld [vmem:[%s9 + $0x398] sm:$0xff]
        %v1253 = vld [vmem:[%s9 + $0x3a0] sm:$0xff]
        %v1254 = vld [vmem:[%s9 + $0x3a8] sm:$0xff]
        %v1255 = vld [vmem:[%s9 + $0x3b0] sm:$0xff]
        %v1256 = vld [vmem:[%s9 + $0x3b8] sm:$0xff]
        %v1257 = vld [vmem:[%s9 + $0x3c0] sm:$0xff]
        %v1258 = vld [vmem:[%s9 + $0x3c8] sm:$0xff]
        %v1259 = vld [vmem:[%s9 + $0x3d0] sm:$0xff]
        %v1260 = vld [vmem:[%s9 + $0x3d8] sm:$0xff]
        %v1261 = vld [vmem:[%s9 + $0x3e0] sm:$0xff]
        %v1262 = vld [vmem:[%s9 + $0x3e8] sm:$0xff]
        %v1263 = vld [vmem:[%s9 + $0x3f0] sm:$0xff]
        %v1264 = vld [vmem:[%s9 + $0x3f8] sm:$0xff]
        %v1265 = vld [vmem:[%s9 + $0x400] sm:$0xff]
        %v1266 = vld [vmem:[%s9 + $0x408] sm:$0xff]
        %v1267 = vld [vmem:[%s9 + $0x410] sm:$0xff]
        %v1268 = vld [vmem:[%s9 + $0x418] sm:$0xff]
        %v1269 = vld [vmem:[%s9 + $0x420] sm:$0xff]
        %v1270 = vld [vmem:[%s9 + $0x428] sm:$0xff]
        %v1271 = vld [vmem:[%s9 + $0x430] sm:$0xff]
        %v1272 = vld [vmem:[%s9 + $0x438] sm:$0xff]
        %v1273 = vld [vmem:[%s9 + $0x440] sm:$0xff]
        %v1274 = vld [vmem:[%s9 + $0x448] sm:$0xff]
        %v1275 = vld [vmem:[%s9 + $0x450] sm:$0xff]
        %v1276 = vld [vmem:[%s9 + $0x458] sm:$0xff]
        %v1277 = vld [vmem:[%s9 + $0x460] sm:$0xff]
        %v1278 = vld [vmem:[%s9 + $0x468] sm:$0xff]
        %v1279 = vld [vmem:[%s9 + $0x470] sm:$0xff]
        %v1280 = vld [vmem:[%s9 + $0x478] sm:$0xff]
        %v1281 = vld [vmem:[%s9 + $0x480] sm:$0xff]
        %v1282 = vld [vmem:[%s9 + $0x488] sm:$0xff]
        %v1283 = vld [vmem:[%s9 + $0x490] sm:$0xff]
        %v1284 = vld [vmem:[%s9 + $0x498] sm:$0xff]
        %v1285 = vld [vmem:[%s9 + $0x4a0] sm:$0xff]
        %v1286 = vld [vmem:[%s9 + $0x4a8] sm:$0xff]
        %v1287 = vld [vmem:[%s9 + $0x4b0] sm:$0xff]
        %v1288 = vld [vmem:[%s9 + $0x4b8] sm:$0xff]
        %v1289 = vld [vmem:[%s9 + $0x4c0] sm:$0xff]
        %v1290 = vld [vmem:[%s9 + $0x4c8] sm:$0xff]
        %v1291 = vld [vmem:[%s9 + $0x4d0] sm:$0xff]
        %v1292 = vld [vmem:[%s9 + $0x4d8] sm:$0xff]
        %v1293 = vld [vmem:[%s9 + $0x4e0] sm:$0xff]
        %v1294 = vld [vmem:[%s9 + $0x4e8] sm:$0xff]
        %v1295 = vld [vmem:[%s9 + $0x4f0] sm:$0xff]
        %v1296 = vld [vmem:[%s9 + $0x4f8] sm:$0xff]
        %v1297 = vld [vmem:[%s9 + $0x500] sm:$0xff]
        %v1298 = vld [vmem:[%s9 + $0x508] sm:$0xff]
        %v1299 = vld [vmem:[%s9 + $0x510] sm:$0xff]
        %v1300 = vld [vmem:[%s9 + $0x518] sm:$0xff]
        %v1301 = vld [vmem:[%s9 + $0x520] sm:$0xff]
        %v1302 = vld [vmem:[%s9 + $0x528] sm:$0xff]
        %v1303 = vld [vmem:[%s9 + $0x530] sm:$0xff]
        %v1304 = vld [vmem:[%s9 + $0x538] sm:$0xff]
        %v1305 = vld [vmem:[%s9 + $0x540] sm:$0xff]
        %v1306 = vld [vmem:[%s9 + $0x548] sm:$0xff]
        %v1307 = vld [vmem:[%s9 + $0x550] sm:$0xff]
        %v1308 = vld [vmem:[%s9 + $0x558] sm:$0xff]
        %v1309 = vld [vmem:[%s9 + $0x560] sm:$0xff]
        %v1310 = vld [vmem:[%s9 + $0x568] sm:$0xff]
        %v1311 = vld [vmem:[%s9 + $0x570] sm:$0xff]
        %v1312 = vld [vmem:[%s9 + $0x578] sm:$0xff]
        %v1313 = vld [vmem:[%s9 + $0x580] sm:$0xff]
        %v1314 = vld [vmem:[%s9 + $0x588] sm:$0xff]
        %v1315 = vld [vmem:[%s9 + $0x590] sm:$0xff]
        %v1316 = vld [vmem:[%s9 + $0x598] sm:$0xff]
        %v1317 = vld [vmem:[%s9 + $0x5a0] sm:$0xff]
        %v1318 = vld [vmem:[%s9 + $0x5a8] sm:$0xff]
        %v1319 = vld [vmem:[%s9 + $0x5b0] sm:$0xff]
        %v1320 = vld [vmem:[%s9 + $0x5b8] sm:$0xff]
        %v1321 = vld [vmem:[%s9 + $0x5c0] sm:$0xff]
        %v1322 = vld [vmem:[%s9 + $0x5c8] sm:$0xff]
        %v1323 = vld [vmem:[%s9 + $0x5d0] sm:$0xff]
        %v1324 = vld [vmem:[%s9 + $0x5d8] sm:$0xff]
        %v1325 = vld [vmem:[%s9 + $0x5e0] sm:$0xff]
        %v1326 = vld [vmem:[%s9 + $0x5e8] sm:$0xff]
        %v1327 = vld [vmem:[%s9 + $0x5f0] sm:$0xff]
        %v1328 = vld [vmem:[%s9 + $0x5f8] sm:$0xff]
        %1329 = vmatpush.msra.mxu0 %v1152
        %1330 = vmatpush.msra.mxu0 %v1151
        %1331 = vmatpush.msra.mxu0 %v1150
        %1332 = vmatpush.msra.mxu0 %v1149
        %1333 = vmatpush.msra.mxu0 %v1148
        %1334 = vmatpush.msra.mxu0 %v1147
        %1335 = vmatpush.msra.mxu0 %v1146
        %1336 = vmatpush.msra.mxu0 %v1145
        %1337 = vmatpush.msra.mxu0 %v1144
        %1338 = vmatpush.msra.mxu0 %v1143
        %1339 = vmatpush.msra.mxu0 %v1142
        %1340 = vmatpush.msra.mxu0 %v1141
        %1341 = vmatpush.msra.mxu0 %v1140
        %1342 = vmatpush.msra.mxu0 %v1139
        %1343 = vmatpush.msra.mxu0 %v1138
        %1344 = vmatpush.msra.mxu0 %v1137
        %1345 = vmatmul.f32.gmra.mxu0 %v1135
        %v1346 = vpop.f32.mrf.mxu0
        %v1347 = vadd.f32 0.0, %v1346
        %1348 = vdwg.mxu0
        %1349 = vmatpush.msra.mxu0 %v1168
        %1350 = vmatpush.msra.mxu0 %v1167
        %1351 = vmatpush.msra.mxu0 %v1166
        %1352 = vmatpush.msra.mxu0 %v1165
        %1353 = vmatpush.msra.mxu0 %v1164
        %1354 = vmatpush.msra.mxu0 %v1163
        %1355 = vmatpush.msra.mxu0 %v1162
        %1356 = vmatpush.msra.mxu0 %v1161
        %1357 = vmatpush.msra.mxu0 %v1160
        %1358 = vmatpush.msra.mxu0 %v1159
        %1359 = vmatpush.msra.mxu0 %v1158
        %1360 = vmatpush.msra.mxu0 %v1157
        %1361 = vmatpush.msra.mxu0 %v1156
        %1362 = vmatpush.msra.mxu0 %v1155
        %1363 = vmatpush.msra.mxu0 %v1154
        %1364 = vmatpush.msra.mxu0 %v1153
        %1365 = vmatmul.f32.gmra.mxu0 %v1135
        %v1366 = vpop.f32.mrf.mxu0
        %v1367 = vadd.f32 0.0, %v1366
        %1368 = vdwg.mxu0
        %1369 = vmatpush.msra.mxu0 %v1184
        %1370 = vmatpush.msra.mxu0 %v1183
        %1371 = vmatpush.msra.mxu0 %v1182
        %1372 = vmatpush.msra.mxu0 %v1181
        %1373 = vmatpush.msra.mxu0 %v1180
        %1374 = vmatpush.msra.mxu0 %v1179
        %1375 = vmatpush.msra.mxu0 %v1178
        %1376 = vmatpush.msra.mxu0 %v1177
        %1377 = vmatpush.msra.mxu0 %v1176
        %1378 = vmatpush.msra.mxu0 %v1175
        %1379 = vmatpush.msra.mxu0 %v1174
        %1380 = vmatpush.msra.mxu0 %v1173
        %1381 = vmatpush.msra.mxu0 %v1172
        %1382 = vmatpush.msra.mxu0 %v1171
        %1383 = vmatpush.msra.mxu0 %v1170
        %1384 = vmatpush.msra.mxu0 %v1169
        %1385 = vmatmul.f32.gmra.mxu0 %v1135
        %v1386 = vpop.f32.mrf.mxu0
        %v1387 = vadd.f32 0.0, %v1386
        %1388 = vdwg.mxu0
        %1389 = vmatpush.msra.mxu0 %v1200
        %1390 = vmatpush.msra.mxu0 %v1199
        %1391 = vmatpush.msra.mxu0 %v1198
        %1392 = vmatpush.msra.mxu0 %v1197
        %1393 = vmatpush.msra.mxu0 %v1196
        %1394 = vmatpush.msra.mxu0 %v1195
        %1395 = vmatpush.msra.mxu0 %v1194
        %1396 = vmatpush.msra.mxu0 %v1193
        %1397 = vmatpush.msra.mxu0 %v1192
        %1398 = vmatpush.msra.mxu0 %v1191
        %1399 = vmatpush.msra.mxu0 %v1190
        %1400 = vmatpush.msra.mxu0 %v1189
        %1401 = vmatpush.msra.mxu0 %v1188
        %1402 = vmatpush.msra.mxu0 %v1187
        %1403 = vmatpush.msra.mxu0 %v1186
        %1404 = vmatpush.msra.mxu0 %v1185
        %1405 = vmatmul.f32.gmra.mxu0 %v1135
        %v1406 = vpop.f32.mrf.mxu0
        %v1407 = vadd.f32 0.0, %v1406
        %1408 = vdwg.mxu0
        %1409 = vmatpush.msra.mxu0 %v1216
        %1410 = vmatpush.msra.mxu0 %v1215
        %1411 = vmatpush.msra.mxu0 %v1214
        %1412 = vmatpush.msra.mxu0 %v1213
        %1413 = vmatpush.msra.mxu0 %v1212
        %1414 = vmatpush.msra.mxu0 %v1211
        %1415 = vmatpush.msra.mxu0 %v1210
        %1416 = vmatpush.msra.mxu0 %v1209
        %1417 = vmatpush.msra.mxu0 %v1208
        %1418 = vmatpush.msra.mxu0 %v1207
        %1419 = vmatpush.msra.mxu0 %v1206
        %1420 = vmatpush.msra.mxu0 %v1205
        %1421 = vmatpush.msra.mxu0 %v1204
        %1422 = vmatpush.msra.mxu0 %v1203
        %1423 = vmatpush.msra.mxu0 %v1202
        %1424 = vmatpush.msra.mxu0 %v1201
        %1425 = vmatmul.f32.gmra.mxu0 %v1135
        %v1426 = vpop.f32.mrf.mxu0
        %v1427 = vadd.f32 0.0, %v1426
        %1428 = vdwg.mxu0
        %1429 = vmatpush.msra.mxu0 %v1232
        %1430 = vmatpush.msra.mxu0 %v1231
        %1431 = vmatpush.msra.mxu0 %v1230
        %1432 = vmatpush.msra.mxu0 %v1229
        %1433 = vmatpush.msra.mxu0 %v1228
        %1434 = vmatpush.msra.mxu0 %v1227
        %1435 = vmatpush.msra.mxu0 %v1226
        %1436 = vmatpush.msra.mxu0 %v1225
        %1437 = vmatpush.msra.mxu0 %v1224
        %1438 = vmatpush.msra.mxu0 %v1223
        %1439 = vmatpush.msra.mxu0 %v1222
        %1440 = vmatpush.msra.mxu0 %v1221
        %1441 = vmatpush.msra.mxu0 %v1220
        %1442 = vmatpush.msra.mxu0 %v1219
        %1443 = vmatpush.msra.mxu0 %v1218
        %1444 = vmatpush.msra.mxu0 %v1217
        %1445 = vmatmul.f32.gmra.mxu0 %v1135
        %v1446 = vpop.f32.mrf.mxu0
        %v1447 = vadd.f32 0.0, %v1446
        %1448 = vdwg.mxu0
        %1449 = vmatpush.msra.mxu0 %v1248
        %1450 = vmatpush.msra.mxu0 %v1247
        %1451 = vmatpush.msra.mxu0 %v1246
        %1452 = vmatpush.msra.mxu0 %v1245
        %1453 = vmatpush.msra.mxu0 %v1244
        %1454 = vmatpush.msra.mxu0 %v1243
        %1455 = vmatpush.msra.mxu0 %v1242
        %1456 = vmatpush.msra.mxu0 %v1241
        %1457 = vmatpush.msra.mxu0 %v1240
        %1458 = vmatpush.msra.mxu0 %v1239
        %1459 = vmatpush.msra.mxu0 %v1238
        %1460 = vmatpush.msra.mxu0 %v1237
        %1461 = vmatpush.msra.mxu0 %v1236
        %1462 = vmatpush.msra.mxu0 %v1235
        %1463 = vmatpush.msra.mxu0 %v1234
        %1464 = vmatpush.msra.mxu0 %v1233
        %1465 = vmatmul.f32.gmra.mxu0 %v1135
        %v1466 = vpop.f32.mrf.mxu0
        %v1467 = vadd.f32 0.0, %v1466
        %1468 = vdwg.mxu0
        %1469 = vmatpush.msra.mxu0 %v1264
        %1470 = vmatpush.msra.mxu0 %v1263
        %1471 = vmatpush.msra.mxu0 %v1262
        %1472 = vmatpush.msra.mxu0 %v1261
        %1473 = vmatpush.msra.mxu0 %v1260
        %1474 = vmatpush.msra.mxu0 %v1259
        %1475 = vmatpush.msra.mxu0 %v1258
        %1476 = vmatpush.msra.mxu0 %v1257
        %1477 = vmatpush.msra.mxu0 %v1256
        %1478 = vmatpush.msra.mxu0 %v1255
        %1479 = vmatpush.msra.mxu0 %v1254
        %1480 = vmatpush.msra.mxu0 %v1253
        %1481 = vmatpush.msra.mxu0 %v1252
        %1482 = vmatpush.msra.mxu0 %v1251
        %1483 = vmatpush.msra.mxu0 %v1250
        %1484 = vmatpush.msra.mxu0 %v1249
        %1485 = vmatmul.f32.gmra.mxu0 %v1135
        %v1486 = vpop.f32.mrf.mxu0
        %v1487 = vadd.f32 0.0, %v1486
        %1488 = vdwg.mxu0
        %1489 = vmatpush.msra.mxu0 %v1280
        %1490 = vmatpush.msra.mxu0 %v1279
        %1491 = vmatpush.msra.mxu0 %v1278
        %1492 = vmatpush.msra.mxu0 %v1277
        %1493 = vmatpush.msra.mxu0 %v1276
        %1494 = vmatpush.msra.mxu0 %v1275
        %1495 = vmatpush.msra.mxu0 %v1274
        %1496 = vmatpush.msra.mxu0 %v1273
        %1497 = vmatpush.msra.mxu0 %v1272
        %1498 = vmatpush.msra.mxu0 %v1271
        %1499 = vmatpush.msra.mxu0 %v1270
        %1500 = vmatpush.msra.mxu0 %v1269
        %1501 = vmatpush.msra.mxu0 %v1268
        %1502 = vmatpush.msra.mxu0 %v1267
        %1503 = vmatpush.msra.mxu0 %v1266
        %1504 = vmatpush.msra.mxu0 %v1265
        %1505 = vmatmul.f32.gmra.mxu0 %v1135
        %v1506 = vpop.f32.mrf.mxu0
        %v1507 = vadd.f32 0.0, %v1506
        %1508 = vdwg.mxu0
        %1509 = vmatpush.msra.mxu0 %v1296
        %1510 = vmatpush.msra.mxu0 %v1295
        %1511 = vmatpush.msra.mxu0 %v1294
        %1512 = vmatpush.msra.mxu0 %v1293
        %1513 = vmatpush.msra.mxu0 %v1292
        %1514 = vmatpush.msra.mxu0 %v1291
        %1515 = vmatpush.msra.mxu0 %v1290
        %1516 = vmatpush.msra.mxu0 %v1289
        %1517 = vmatpush.msra.mxu0 %v1288
        %1518 = vmatpush.msra.mxu0 %v1287
        %1519 = vmatpush.msra.mxu0 %v1286
        %1520 = vmatpush.msra.mxu0 %v1285
        %1521 = vmatpush.msra.mxu0 %v1284
        %1522 = vmatpush.msra.mxu0 %v1283
        %1523 = vmatpush.msra.mxu0 %v1282
        %1524 = vmatpush.msra.mxu0 %v1281
        %1525 = vmatmul.f32.gmra.mxu0 %v1135
        %v1526 = vpop.f32.mrf.mxu0
        %v1527 = vadd.f32 0.0, %v1526
        %1528 = vdwg.mxu0
        %1529 = vmatpush.msra.mxu0 %v1312
        %1530 = vmatpush.msra.mxu0 %v1311
        %1531 = vmatpush.msra.mxu0 %v1310
        %1532 = vmatpush.msra.mxu0 %v1309
        %1533 = vmatpush.msra.mxu0 %v1308
        %1534 = vmatpush.msra.mxu0 %v1307
        %1535 = vmatpush.msra.mxu0 %v1306
        %1536 = vmatpush.msra.mxu0 %v1305
        %1537 = vmatpush.msra.mxu0 %v1304
        %1538 = vmatpush.msra.mxu0 %v1303
        %1539 = vmatpush.msra.mxu0 %v1302
        %1540 = vmatpush.msra.mxu0 %v1301
        %1541 = vmatpush.msra.mxu0 %v1300
        %1542 = vmatpush.msra.mxu0 %v1299
        %1543 = vmatpush.msra.mxu0 %v1298
        %1544 = vmatpush.msra.mxu0 %v1297
        %1545 = vmatmul.f32.gmra.mxu0 %v1135
        %v1546 = vpop.f32.mrf.mxu0
        %v1547 = vadd.f32 0.0, %v1546
        %1548 = vdwg.mxu0
        %1549 = vmatpush.msra.mxu0 %v1328
        %1550 = vmatpush.msra.mxu0 %v1327
        %1551 = vmatpush.msra.mxu0 %v1326
        %1552 = vmatpush.msra.mxu0 %v1325
        %1553 = vmatpush.msra.mxu0 %v1324
        %1554 = vmatpush.msra.mxu0 %v1323
        %1555 = vmatpush.msra.mxu0 %v1322
        %1556 = vmatpush.msra.mxu0 %v1321
        %1557 = vmatpush.msra.mxu0 %v1320
        %1558 = vmatpush.msra.mxu0 %v1319
        %1559 = vmatpush.msra.mxu0 %v1318
        %1560 = vmatpush.msra.mxu0 %v1317
        %1561 = vmatpush.msra.mxu0 %v1316
        %1562 = vmatpush.msra.mxu0 %v1315
        %1563 = vmatpush.msra.mxu0 %v1314
        %1564 = vmatpush.msra.mxu0 %v1313
        %1565 = vmatmul.f32.gmra.mxu0 %v1135
        %v1566 = vpop.f32.mrf.mxu0
        %v1567 = vadd.f32 0.0, %v1566
        %1568 = vdwg.mxu0
        %v1569 = vld [vmem:[%s11] sm:$0x1]
        %v1570 = vld [vmem:[%s11 + $0x1] sm:$0x1]
        %v1571 = vld [vmem:[%s11 + $0x2] sm:$0x1]
        %v1572 = vld [vmem:[%s11 + $0x3] sm:$0x1]
        %v1577 = vperm.slane %v1569, 0
        %v1578 = vperm.slane %v1570, 0
        %v1579 = vperm.slane %v1571, 0
        %v1580 = vperm.slane %v1572, 0
        %v1585 = vadd.f32 %v1347, %v1577
        %v1586 = vadd.f32 %v1367, %v1578
        %v1587 = vadd.f32 %v1387, %v1579
        %v1588 = vadd.f32 %v1407, %v1580
        %v1589 = vld [vmem:[%s13] sm:$0x1]
        %v1590 = vld [vmem:[%s13 + $0x1] sm:$0x1]
        %v1591 = vld [vmem:[%s13 + $0x2] sm:$0x1]
        %v1592 = vld [vmem:[%s13 + $0x3] sm:$0x1]
        %v1597 = vperm.slane %v1589, 0
        %v1598 = vperm.slane %v1590, 0
        %v1599 = vperm.slane %v1591, 0
        %v1600 = vperm.slane %v1592, 0
        %v1605 = vadd.f32 %v1347, %v1597
        %v1606 = vadd.f32 %v1367, %v1598
        %v1607 = vadd.f32 %v1387, %v1599
        %v1608 = vadd.f32 %v1407, %v1600
        %v1613 = vrot.slane %v1605, 1
        %v1614 = vrot.slane %v1605, 2
        %v1615 = vrot.slane %v1605, 3
        %v1616 = vrot.slane %v1605, 4
        %v1617 = vrot.slane %v1605, 5
        %v1618 = vrot.slane %v1605, 6
        %v1619 = vrot.slane %v1605, 7
        %v1620 = vrot.slane %v1606, 1
        %v1621 = vrot.slane %v1606, 2
        %v1622 = vrot.slane %v1606, 3
        %v1623 = vrot.slane %v1606, 4
        %v1624 = vrot.slane %v1606, 5
        %v1625 = vrot.slane %v1606, 6
        %v1626 = vrot.slane %v1606, 7
        %v1627 = vrot.slane %v1607, 1
        %v1628 = vrot.slane %v1607, 2
        %v1629 = vrot.slane %v1607, 3
        %v1630 = vrot.slane %v1607, 4
        %v1631 = vrot.slane %v1607, 5
        %v1632 = vrot.slane %v1607, 6
        %v1633 = vrot.slane %v1607, 7
        %v1634 = vrot.slane %v1608, 1
        %v1635 = vrot.slane %v1608, 2
        %v1636 = vrot.slane %v1608, 3
        %v1637 = vrot.slane %v1608, 4
        %v1638 = vrot.slane %v1608, 5
        %v1639 = vrot.slane %v1608, 6
        %v1640 = vrot.slane %v1608, 7
        %v1641 = vld [vmem:[%s15] sm:$0xff]
        %v1642 = vld [vmem:[%s15 + $0x8] sm:$0xff]
        %v1643 = vld [vmem:[%s15 + $0x10] sm:$0xff]
        %v1644 = vld [vmem:[%s15 + $0x18] sm:$0xff]
        %v1645 = vld [vmem:[%s15 + $0x20] sm:$0xff]
        %v1646 = vld [vmem:[%s15 + $0x28] sm:$0xff]
        %v1647 = vld [vmem:[%s15 + $0x30] sm:$0xff]
        %v1648 = vld [vmem:[%s15 + $0x38] sm:$0xff]
        %v1649 = vld [vmem:[%s15 + $0x40] sm:$0xff]
        %v1650 = vld [vmem:[%s15 + $0x48] sm:$0xff]
        %v1651 = vld [vmem:[%s15 + $0x50] sm:$0xff]
        %v1652 = vld [vmem:[%s15 + $0x58] sm:$0xff]
        %v1653 = vld [vmem:[%s15 + $0x60] sm:$0xff]
        %v1654 = vld [vmem:[%s15 + $0x68] sm:$0xff]
        %v1655 = vld [vmem:[%s15 + $0x70] sm:$0xff]
        %v1656 = vld [vmem:[%s15 + $0x78] sm:$0xff]
        %v1657 = vld [vmem:[%s15 + $0x80] sm:$0xff]
        %v1658 = vld [vmem:[%s15 + $0x88] sm:$0xff]
        %v1659 = vld [vmem:[%s15 + $0x90] sm:$0xff]
        %v1660 = vld [vmem:[%s15 + $0x98] sm:$0xff]
        %v1661 = vld [vmem:[%s15 + $0xa0] sm:$0xff]
        %v1662 = vld [vmem:[%s15 + $0xa8] sm:$0xff]
        %v1663 = vld [vmem:[%s15 + $0xb0] sm:$0xff]
        %v1664 = vld [vmem:[%s15 + $0xb8] sm:$0xff]
        %v1665 = vld [vmem:[%s15 + $0xc0] sm:$0xff]
        %v1666 = vld [vmem:[%s15 + $0xc8] sm:$0xff]
        %v1667 = vld [vmem:[%s15 + $0xd0] sm:$0xff]
        %v1668 = vld [vmem:[%s15 + $0xd8] sm:$0xff]
        %v1669 = vld [vmem:[%s15 + $0xe0] sm:$0xff]
        %v1670 = vld [vmem:[%s15 + $0xe8] sm:$0xff]
        %v1671 = vld [vmem:[%s15 + $0xf0] sm:$0xff]
        %v1672 = vld [vmem:[%s15 + $0xf8] sm:$0xff]
        %v1673 = vperm.slane %v1605, 0
        %v1674 = vperm.slane %v1613, 0
        %v1675 = vperm.slane %v1614, 0
        %v1676 = vperm.slane %v1615, 0
        %v1677 = vperm.slane %v1616, 0
        %v1678 = vperm.slane %v1617, 0
        %v1679 = vperm.slane %v1618, 0
        %v1680 = vperm.slane %v1619, 0
        %v1681 = vperm.slane %v1606, 0
        %v1682 = vperm.slane %v1620, 0
        %v1683 = vperm.slane %v1621, 0
        %v1684 = vperm.slane %v1622, 0
        %v1685 = vperm.slane %v1623, 0
        %v1686 = vperm.slane %v1624, 0
        %v1687 = vperm.slane %v1625, 0
        %v1688 = vperm.slane %v1626, 0
        %v1689 = vperm.slane %v1607, 0
        %v1690 = vperm.slane %v1627, 0
        %v1691 = vperm.slane %v1628, 0
        %v1692 = vperm.slane %v1629, 0
        %v1693 = vperm.slane %v1630, 0
        %v1694 = vperm.slane %v1631, 0
        %v1695 = vperm.slane %v1632, 0
        %v1696 = vperm.slane %v1633, 0
        %v1697 = vperm.slane %v1608, 0
        %v1698 = vperm.slane %v1634, 0
        %v1699 = vperm.slane %v1635, 0
        %v1700 = vperm.slane %v1636, 0
        %v1701 = vperm.slane %v1637, 0
        %v1702 = vperm.slane %v1638, 0
        %v1703 = vperm.slane %v1639, 0
        %v1704 = vperm.slane %v1640, 0
        %v1737 = vmul.f32 %v1673, %v1641
        %v1738 = vmul.f32 %v1674, %v1642
        %v1739 = vmul.f32 %v1675, %v1643
        %v1740 = vmul.f32 %v1676, %v1644
        %v1741 = vmul.f32 %v1677, %v1645
        %v1742 = vmul.f32 %v1678, %v1646
        %v1743 = vmul.f32 %v1679, %v1647
        %v1744 = vmul.f32 %v1680, %v1648
        %v1745 = vmul.f32 %v1681, %v1649
        %v1746 = vmul.f32 %v1682, %v1650
        %v1747 = vmul.f32 %v1683, %v1651
        %v1748 = vmul.f32 %v1684, %v1652
        %v1749 = vmul.f32 %v1685, %v1653
        %v1750 = vmul.f32 %v1686, %v1654
        %v1751 = vmul.f32 %v1687, %v1655
        %v1752 = vmul.f32 %v1688, %v1656
        %v1753 = vmul.f32 %v1689, %v1657
        %v1754 = vmul.f32 %v1690, %v1658
        %v1755 = vmul.f32 %v1691, %v1659
        %v1756 = vmul.f32 %v1692, %v1660
        %v1757 = vmul.f32 %v1693, %v1661
        %v1758 = vmul.f32 %v1694, %v1662
        %v1759 = vmul.f32 %v1695, %v1663
        %v1760 = vmul.f32 %v1696, %v1664
        %v1761 = vmul.f32 %v1697, %v1665
        %v1762 = vmul.f32 %v1698, %v1666
        %v1763 = vmul.f32 %v1699, %v1667
        %v1764 = vmul.f32 %v1700, %v1668
        %v1765 = vmul.f32 %v1701, %v1669
        %v1766 = vmul.f32 %v1702, %v1670
        %v1767 = vmul.f32 %v1703, %v1671
        %v1768 = vmul.f32 %v1704, %v1672
        %vm1769 = vcmask 261120
        %v1770 = vsel %vm1769, %v1737, 0.0
        %1771 = vadd.xlane.f32.xlu0 %v1770
        %v1772 = vpop.xlane.xlu0 %1771
        %v1773 = vsel %vm1769, %v1738, 0.0
        %1774 = vadd.xlane.f32.xlu0 %v1773
        %v1775 = vpop.xlane.xlu0 %1774
        %v1776 = vsel %vm1769, %v1739, 0.0
        %1777 = vadd.xlane.f32.xlu0 %v1776
        %v1778 = vpop.xlane.xlu0 %1777
        %v1779 = vsel %vm1769, %v1740, 0.0
        %1780 = vadd.xlane.f32.xlu0 %v1779
        %v1781 = vpop.xlane.xlu0 %1780
        %v1782 = vsel %vm1769, %v1741, 0.0
        %1783 = vadd.xlane.f32.xlu0 %v1782
        %v1784 = vpop.xlane.xlu0 %1783
        %v1785 = vsel %vm1769, %v1742, 0.0
        %1786 = vadd.xlane.f32.xlu0 %v1785
        %v1787 = vpop.xlane.xlu0 %1786
        %v1788 = vsel %vm1769, %v1743, 0.0
        %1789 = vadd.xlane.f32.xlu0 %v1788
        %v1790 = vpop.xlane.xlu0 %1789
        %v1791 = vsel %vm1769, %v1744, 0.0
        %1792 = vadd.xlane.f32.xlu0 %v1791
        %v1793 = vpop.xlane.xlu0 %1792
        %v1794 = vsel %vm1769, %v1745, 0.0
        %1795 = vadd.xlane.f32.xlu0 %v1794
        %v1796 = vpop.xlane.xlu0 %1795
        %v1797 = vsel %vm1769, %v1746, 0.0
        %1798 = vadd.xlane.f32.xlu0 %v1797
        %v1799 = vpop.xlane.xlu0 %1798
        %v1800 = vsel %vm1769, %v1747, 0.0
        %1801 = vadd.xlane.f32.xlu0 %v1800
        %v1802 = vpop.xlane.xlu0 %1801
        %v1803 = vsel %vm1769, %v1748, 0.0
        %1804 = vadd.xlane.f32.xlu0 %v1803
        %v1805 = vpop.xlane.xlu0 %1804
        %v1806 = vsel %vm1769, %v1749, 0.0
        %1807 = vadd.xlane.f32.xlu0 %v1806
        %v1808 = vpop.xlane.xlu0 %1807
        %v1809 = vsel %vm1769, %v1750, 0.0
        %1810 = vadd.xlane.f32.xlu0 %v1809
        %v1811 = vpop.xlane.xlu0 %1810
        %v1812 = vsel %vm1769, %v1751, 0.0
        %1813 = vadd.xlane.f32.xlu0 %v1812
        %v1814 = vpop.xlane.xlu0 %1813
        %v1815 = vsel %vm1769, %v1752, 0.0
        %1816 = vadd.xlane.f32.xlu0 %v1815
        %v1817 = vpop.xlane.xlu0 %1816
        %v1818 = vsel %vm1769, %v1753, 0.0
        %1819 = vadd.xlane.f32.xlu0 %v1818
        %v1820 = vpop.xlane.xlu0 %1819
        %v1821 = vsel %vm1769, %v1754, 0.0
        %1822 = vadd.xlane.f32.xlu0 %v1821
        %v1823 = vpop.xlane.xlu0 %1822
        %v1824 = vsel %vm1769, %v1755, 0.0
        %1825 = vadd.xlane.f32.xlu0 %v1824
        %v1826 = vpop.xlane.xlu0 %1825
        %v1827 = vsel %vm1769, %v1756, 0.0
        %1828 = vadd.xlane.f32.xlu0 %v1827
        %v1829 = vpop.xlane.xlu0 %1828
        %v1830 = vsel %vm1769, %v1757, 0.0
        %1831 = vadd.xlane.f32.xlu0 %v1830
        %v1832 = vpop.xlane.xlu0 %1831
        %v1833 = vsel %vm1769, %v1758, 0.0
        %1834 = vadd.xlane.f32.xlu0 %v1833
        %v1835 = vpop.xlane.xlu0 %1834
        %v1836 = vsel %vm1769, %v1759, 0.0
        %1837 = vadd.xlane.f32.xlu0 %v1836
        %v1838 = vpop.xlane.xlu0 %1837
        %v1839 = vsel %vm1769, %v1760, 0.0
        %1840 = vadd.xlane.f32.xlu0 %v1839
        %v1841 = vpop.xlane.xlu0 %1840
        %v1842 = vsel %vm1769, %v1761, 0.0
        %1843 = vadd.xlane.f32.xlu0 %v1842
        %v1844 = vpop.xlane.xlu0 %1843
        %v1845 = vsel %vm1769, %v1762, 0.0
        %1846 = vadd.xlane.f32.xlu0 %v1845
        %v1847 = vpop.xlane.xlu0 %1846
        %v1848 = vsel %vm1769, %v1763, 0.0
        %1849 = vadd.xlane.f32.xlu0 %v1848
        %v1850 = vpop.xlane.xlu0 %1849
        %v1851 = vsel %vm1769, %v1764, 0.0
        %1852 = vadd.xlane.f32.xlu0 %v1851
        %v1853 = vpop.xlane.xlu0 %1852
        %v1854 = vsel %vm1769, %v1765, 0.0
        %1855 = vadd.xlane.f32.xlu0 %v1854
        %v1856 = vpop.xlane.xlu0 %1855
        %v1857 = vsel %vm1769, %v1766, 0.0
        %1858 = vadd.xlane.f32.xlu0 %v1857
        %v1859 = vpop.xlane.xlu0 %1858
        %v1860 = vsel %vm1769, %v1767, 0.0
        %1861 = vadd.xlane.f32.xlu0 %v1860
        %v1862 = vpop.xlane.xlu0 %1861
        %v1863 = vsel %vm1769, %v1768, 0.0
        %1864 = vadd.xlane.f32.xlu0 %v1863
        %v1865 = vpop.xlane.xlu0 %1864
        %v1874 = vlaneseq
        %v1875 = vand.u32 %v1874, 127
        %v1876 = vperm.slane %v1772, %v1875
        %v1877 = vperm.slane %v1775, %v1875
        %v1878 = vperm.slane %v1778, %v1875
        %v1879 = vperm.slane %v1781, %v1875
        %v1880 = vperm.slane %v1784, %v1875
        %v1881 = vperm.slane %v1787, %v1875
        %v1882 = vperm.slane %v1790, %v1875
        %v1883 = vperm.slane %v1793, %v1875
        %vm1884 = vcmask 1041409
        %v1885 = vsel %vm1884, %v1877, %v1876
        %vm1886 = vcmask 1042434
        %v1887 = vsel %vm1886, %v1878, %v1885
        %vm1888 = vcmask 1043459
        %v1889 = vsel %vm1888, %v1879, %v1887
        %vm1890 = vcmask 1044484
        %v1891 = vsel %vm1890, %v1880, %v1889
        %vm1892 = vcmask 1045509
        %v1893 = vsel %vm1892, %v1881, %v1891
        %vm1894 = vcmask 1046534
        %v1895 = vsel %vm1894, %v1882, %v1893
        %vm1896 = vcmask 1047559
        %v1897 = vsel %vm1896, %v1883, %v1895
        %v1900 = vsel %vm1769, %v1585, 0
        %v1903 = vsel %vm1769, %v1427, 0
        %1905 = vmatpush.xpose.msra.mxu0 0.0
        %1906 = vmatpush.xpose.msra.mxu0 0.0
        %1907 = vmatpush.xpose.msra.mxu0 0.0
        %1908 = vmatpush.xpose.msra.mxu0 0.0
        %1909 = vmatpush.xpose.msra.mxu0 0.0
        %1910 = vmatpush.xpose.msra.mxu0 0.0
        %1911 = vmatpush.xpose.msra.mxu0 0.0
        %1912 = vmatpush.xpose.msra.mxu0 0.0
        %1913 = vmatpush.xpose.msra.mxu0 0.0
        %1914 = vmatpush.xpose.msra.mxu0 0.0
        %1915 = vmatpush.xpose.msra.mxu0 0.0
        %1916 = vmatpush.xpose.msra.mxu0 0.0
        %1917 = vmatpush.xpose.msra.mxu0 0.0
        %1918 = vmatpush.xpose.msra.mxu0 0.0
        %1919 = vmatpush.xpose.msra.mxu0 0.0
        %1920 = vmatpush.xpose.msra.mxu0 %v1903
        %1921 = vmatmul.f32.gmra.mxu0 %v1900
        %v1922 = vpop.f32.mrf.mxu0
        %v1923 = vadd.f32 %v1897, %v1922
        %1924 = vdwg.mxu0
        %v1933 = vperm.slane %v1796, %v1875
        %v1934 = vperm.slane %v1799, %v1875
        %v1935 = vperm.slane %v1802, %v1875
        %v1936 = vperm.slane %v1805, %v1875
        %v1937 = vperm.slane %v1808, %v1875
        %v1938 = vperm.slane %v1811, %v1875
        %v1939 = vperm.slane %v1814, %v1875
        %v1940 = vperm.slane %v1817, %v1875
        %v1941 = vsel %vm1884, %v1934, %v1933
        %v1942 = vsel %vm1886, %v1935, %v1941
        %v1943 = vsel %vm1888, %v1936, %v1942
        %v1944 = vsel %vm1890, %v1937, %v1943
        %v1945 = vsel %vm1892, %v1938, %v1944
        %v1946 = vsel %vm1894, %v1939, %v1945
        %v1947 = vsel %vm1896, %v1940, %v1946
        %v1950 = vsel %vm1769, %v1586, 0
        %v1953 = vsel %vm1769, %v1447, 0
        %1955 = vmatpush.xpose.msra.mxu0 0.0
        %1956 = vmatpush.xpose.msra.mxu0 0.0
        %1957 = vmatpush.xpose.msra.mxu0 0.0
        %1958 = vmatpush.xpose.msra.mxu0 0.0
        %1959 = vmatpush.xpose.msra.mxu0 0.0
        %1960 = vmatpush.xpose.msra.mxu0 0.0
        %1961 = vmatpush.xpose.msra.mxu0 0.0
        %1962 = vmatpush.xpose.msra.mxu0 0.0
        %1963 = vmatpush.xpose.msra.mxu0 0.0
        %1964 = vmatpush.xpose.msra.mxu0 0.0
        %1965 = vmatpush.xpose.msra.mxu0 0.0
        %1966 = vmatpush.xpose.msra.mxu0 0.0
        %1967 = vmatpush.xpose.msra.mxu0 0.0
        %1968 = vmatpush.xpose.msra.mxu0 0.0
        %1969 = vmatpush.xpose.msra.mxu0 0.0
        %1970 = vmatpush.xpose.msra.mxu0 %v1953
        %1971 = vmatmul.f32.gmra.mxu0 %v1950
        %v1972 = vpop.f32.mrf.mxu0
        %v1973 = vadd.f32 %v1947, %v1972
        %1974 = vdwg.mxu0
        %v1983 = vperm.slane %v1820, %v1875
        %v1984 = vperm.slane %v1823, %v1875
        %v1985 = vperm.slane %v1826, %v1875
        %v1986 = vperm.slane %v1829, %v1875
        %v1987 = vperm.slane %v1832, %v1875
        %v1988 = vperm.slane %v1835, %v1875
        %v1989 = vperm.slane %v1838, %v1875
        %v1990 = vperm.slane %v1841, %v1875
        %v1991 = vsel %vm1884, %v1984, %v1983
        %v1992 = vsel %vm1886, %v1985, %v1991
        %v1993 = vsel %vm1888, %v1986, %v1992
        %v1994 = vsel %vm1890, %v1987, %v1993
        %v1995 = vsel %vm1892, %v1988, %v1994
        %v1996 = vsel %vm1894, %v1989, %v1995
        %v1997 = vsel %vm1896, %v1990, %v1996
        %v2000 = vsel %vm1769, %v1587, 0
        %v2003 = vsel %vm1769, %v1467, 0
        %2005 = vmatpush.xpose.msra.mxu0 0.0
        %2006 = vmatpush.xpose.msra.mxu0 0.0
        %2007 = vmatpush.xpose.msra.mxu0 0.0
        %2008 = vmatpush.xpose.msra.mxu0 0.0
        %2009 = vmatpush.xpose.msra.mxu0 0.0
        %2010 = vmatpush.xpose.msra.mxu0 0.0
        %2011 = vmatpush.xpose.msra.mxu0 0.0
        %2012 = vmatpush.xpose.msra.mxu0 0.0
        %2013 = vmatpush.xpose.msra.mxu0 0.0
        %2014 = vmatpush.xpose.msra.mxu0 0.0
        %2015 = vmatpush.xpose.msra.mxu0 0.0
        %2016 = vmatpush.xpose.msra.mxu0 0.0
        %2017 = vmatpush.xpose.msra.mxu0 0.0
        %2018 = vmatpush.xpose.msra.mxu0 0.0
        %2019 = vmatpush.xpose.msra.mxu0 0.0
        %2020 = vmatpush.xpose.msra.mxu0 %v2003
        %2021 = vmatmul.f32.gmra.mxu0 %v2000
        %v2022 = vpop.f32.mrf.mxu0
        %v2023 = vadd.f32 %v1997, %v2022
        %2024 = vdwg.mxu0
        %v2033 = vperm.slane %v1844, %v1875
        %v2034 = vperm.slane %v1847, %v1875
        %v2035 = vperm.slane %v1850, %v1875
        %v2036 = vperm.slane %v1853, %v1875
        %v2037 = vperm.slane %v1856, %v1875
        %v2038 = vperm.slane %v1859, %v1875
        %v2039 = vperm.slane %v1862, %v1875
        %v2040 = vperm.slane %v1865, %v1875
        %v2041 = vsel %vm1884, %v2034, %v2033
        %v2042 = vsel %vm1886, %v2035, %v2041
        %v2043 = vsel %vm1888, %v2036, %v2042
        %v2044 = vsel %vm1890, %v2037, %v2043
        %v2045 = vsel %vm1892, %v2038, %v2044
        %v2046 = vsel %vm1894, %v2039, %v2045
        %v2047 = vsel %vm1896, %v2040, %v2046
        %v2050 = vsel %vm1769, %v1588, 0
        %v2053 = vsel %vm1769, %v1487, 0
        %2055 = vmatpush.xpose.msra.mxu0 0.0
        %2056 = vmatpush.xpose.msra.mxu0 0.0
        %2057 = vmatpush.xpose.msra.mxu0 0.0
        %2058 = vmatpush.xpose.msra.mxu0 0.0
        %2059 = vmatpush.xpose.msra.mxu0 0.0
        %2060 = vmatpush.xpose.msra.mxu0 0.0
        %2061 = vmatpush.xpose.msra.mxu0 0.0
        %2062 = vmatpush.xpose.msra.mxu0 0.0
        %2063 = vmatpush.xpose.msra.mxu0 0.0
        %2064 = vmatpush.xpose.msra.mxu0 0.0
        %2065 = vmatpush.xpose.msra.mxu0 0.0
        %2066 = vmatpush.xpose.msra.mxu0 0.0
        %2067 = vmatpush.xpose.msra.mxu0 0.0
        %2068 = vmatpush.xpose.msra.mxu0 0.0
        %2069 = vmatpush.xpose.msra.mxu0 0.0
        %2070 = vmatpush.xpose.msra.mxu0 %v2053
        %2071 = vmatmul.f32.gmra.mxu0 %v2050
        %v2072 = vpop.f32.mrf.mxu0
        %v2073 = vadd.f32 %v2047, %v2072
        %2074 = vdwg.mxu0
        %v2075 = vadd.f32 %v1923, %v1136
        %v2076 = vadd.f32 %v1973, %v1136
        %v2077 = vadd.f32 %v2023, %v1136
        %v2078 = vadd.f32 %v2073, %v1136
        %vm2079 = vcmask 64512
        %v2080 = vsel %vm2079, %v2075, -inf
        %2081 = vmax.xlane.f32.xlu0 %v2080
        %v2082 = vpop.xlane.xlu0 %2081
        %v2083 = vsel %vm2079, %v2076, -inf
        %2084 = vmax.xlane.f32.xlu0 %v2083
        %v2085 = vpop.xlane.xlu0 %2084
        %v2086 = vsel %vm2079, %v2077, -inf
        %2087 = vmax.xlane.f32.xlu0 %v2086
        %v2088 = vpop.xlane.xlu0 %2087
        %v2089 = vsel %vm2079, %v2078, -inf
        %2090 = vmax.xlane.f32.xlu0 %v2089
        %v2091 = vpop.xlane.xlu0 %2090
        %v2092 = vsub.f32 %v2075, %v2082
        %v2093 = vsub.f32 %v2076, %v2085
        %v2094 = vsub.f32 %v2077, %v2088
        %v2095 = vsub.f32 %v2078, %v2091
        %v2096 = vmul.f32 %v2092, 1.442695
        %v2097 = vpow.pop %v2096
        %v2098 = vmul.f32 %v2093, 1.442695
        %v2099 = vpow.pop %v2098
        %v2100 = vmul.f32 %v2094, 1.442695
        %v2101 = vpow.pop %v2100
        %v2102 = vmul.f32 %v2095, 1.442695
        %v2103 = vpow.pop %v2102
        %v2104 = vsel %vm2079, %v2097, 0.0
        %2105 = vadd.xlane.f32.xlu0 %v2104
        %v2106 = vpop.xlane.xlu0 %2105
        %v2107 = vsel %vm2079, %v2099, 0.0
        %2108 = vadd.xlane.f32.xlu0 %v2107
        %v2109 = vpop.xlane.xlu0 %2108
        %v2110 = vsel %vm2079, %v2101, 0.0
        %2111 = vadd.xlane.f32.xlu0 %v2110
        %v2112 = vpop.xlane.xlu0 %2111
        %v2113 = vsel %vm2079, %v2103, 0.0
        %2114 = vadd.xlane.f32.xlu0 %v2113
        %v2115 = vpop.xlane.xlu0 %2114
        %v2116 = vrcp.pop %v2106
        %v2117 = vrcp.pop %v2109
        %v2118 = vrcp.pop %v2112
        %v2119 = vrcp.pop %v2115
        %v2120 = vmul.f32 %v2097, %v2116
        %v2121 = vmul.f32 %v2099, %v2117
        %v2122 = vmul.f32 %v2101, %v2118
        %v2123 = vmul.f32 %v2103, %v2119
        %v2125 = vsel %vm2079, %v2120, 0
        %2127 = vmatpush.msra.mxu0 0.0
        %2128 = vmatpush.msra.mxu0 0.0
        %2129 = vmatpush.msra.mxu0 0.0
        %2130 = vmatpush.msra.mxu0 0.0
        %2131 = vmatpush.msra.mxu0 0.0
        %2132 = vmatpush.msra.mxu0 0.0
        %2133 = vmatpush.msra.mxu0 0.0
        %2134 = vmatpush.msra.mxu0 0.0
        %2135 = vmatpush.msra.mxu0 0.0
        %2136 = vmatpush.msra.mxu0 0.0
        %2137 = vmatpush.msra.mxu0 0.0
        %2138 = vmatpush.msra.mxu0 0.0
        %2139 = vmatpush.msra.mxu0 0.0
        %2140 = vmatpush.msra.mxu0 0.0
        %2141 = vmatpush.msra.mxu0 0.0
        %2142 = vmatpush.msra.mxu0 %v1507
        %2143 = vmatmul.f32.gmra.mxu0 %v2125
        %v2144 = vpop.f32.mrf.mxu0
        %v2145 = vadd.f32 0.0, %v2144
        %2146 = vdwg.mxu0
        %v2148 = vsel %vm2079, %v2121, 0
        %2150 = vmatpush.msra.mxu0 0.0
        %2151 = vmatpush.msra.mxu0 0.0
        %2152 = vmatpush.msra.mxu0 0.0
        %2153 = vmatpush.msra.mxu0 0.0
        %2154 = vmatpush.msra.mxu0 0.0
        %2155 = vmatpush.msra.mxu0 0.0
        %2156 = vmatpush.msra.mxu0 0.0
        %2157 = vmatpush.msra.mxu0 0.0
        %2158 = vmatpush.msra.mxu0 0.0
        %2159 = vmatpush.msra.mxu0 0.0
        %2160 = vmatpush.msra.mxu0 0.0
        %2161 = vmatpush.msra.mxu0 0.0
        %2162 = vmatpush.msra.mxu0 0.0
        %2163 = vmatpush.msra.mxu0 0.0
        %2164 = vmatpush.msra.mxu0 0.0
        %2165 = vmatpush.msra.mxu0 %v1527
        %2166 = vmatmul.f32.gmra.mxu0 %v2148
        %v2167 = vpop.f32.mrf.mxu0
        %v2168 = vadd.f32 0.0, %v2167
        %2169 = vdwg.mxu0
        %v2171 = vsel %vm2079, %v2122, 0
        %2173 = vmatpush.msra.mxu0 0.0
        %2174 = vmatpush.msra.mxu0 0.0
        %2175 = vmatpush.msra.mxu0 0.0
        %2176 = vmatpush.msra.mxu0 0.0
        %2177 = vmatpush.msra.mxu0 0.0
        %2178 = vmatpush.msra.mxu0 0.0
        %2179 = vmatpush.msra.mxu0 0.0
        %2180 = vmatpush.msra.mxu0 0.0
        %2181 = vmatpush.msra.mxu0 0.0
        %2182 = vmatpush.msra.mxu0 0.0
        %2183 = vmatpush.msra.mxu0 0.0
        %2184 = vmatpush.msra.mxu0 0.0
        %2185 = vmatpush.msra.mxu0 0.0
        %2186 = vmatpush.msra.mxu0 0.0
        %2187 = vmatpush.msra.mxu0 0.0
        %2188 = vmatpush.msra.mxu0 %v1547
        %2189 = vmatmul.f32.gmra.mxu0 %v2171
        %v2190 = vpop.f32.mrf.mxu0
        %v2191 = vadd.f32 0.0, %v2190
        %2192 = vdwg.mxu0
        %v2194 = vsel %vm2079, %v2123, 0
        %2196 = vmatpush.msra.mxu0 0.0
        %2197 = vmatpush.msra.mxu0 0.0
        %2198 = vmatpush.msra.mxu0 0.0
        %2199 = vmatpush.msra.mxu0 0.0
        %2200 = vmatpush.msra.mxu0 0.0
        %2201 = vmatpush.msra.mxu0 0.0
        %2202 = vmatpush.msra.mxu0 0.0
        %2203 = vmatpush.msra.mxu0 0.0
        %2204 = vmatpush.msra.mxu0 0.0
        %2205 = vmatpush.msra.mxu0 0.0
        %2206 = vmatpush.msra.mxu0 0.0
        %2207 = vmatpush.msra.mxu0 0.0
        %2208 = vmatpush.msra.mxu0 0.0
        %2209 = vmatpush.msra.mxu0 0.0
        %2210 = vmatpush.msra.mxu0 0.0
        %2211 = vmatpush.msra.mxu0 %v1567
        %2212 = vmatmul.f32.gmra.mxu0 %v2194
        %v2213 = vpop.f32.mrf.mxu0
        %v2214 = vadd.f32 0.0, %v2213
        %2215 = vdwg.mxu0
        %v2216 = vld [vmem:[%s17] sm:$0xff]
        %v2217 = vld [vmem:[%s17 + $0x8] sm:$0xff]
        %v2218 = vld [vmem:[%s17 + $0x10] sm:$0xff]
        %v2219 = vld [vmem:[%s17 + $0x18] sm:$0xff]
        %v2220 = vld [vmem:[%s17 + $0x20] sm:$0xff]
        %v2221 = vld [vmem:[%s17 + $0x28] sm:$0xff]
        %v2222 = vld [vmem:[%s17 + $0x30] sm:$0xff]
        %v2223 = vld [vmem:[%s17 + $0x38] sm:$0xff]
        %v2224 = vld [vmem:[%s17 + $0x40] sm:$0xff]
        %v2225 = vld [vmem:[%s17 + $0x48] sm:$0xff]
        %v2226 = vld [vmem:[%s17 + $0x50] sm:$0xff]
        %v2227 = vld [vmem:[%s17 + $0x58] sm:$0xff]
        %v2228 = vld [vmem:[%s17 + $0x60] sm:$0xff]
        %v2229 = vld [vmem:[%s17 + $0x68] sm:$0xff]
        %v2230 = vld [vmem:[%s17 + $0x70] sm:$0xff]
        %v2231 = vld [vmem:[%s17 + $0x78] sm:$0xff]
        %v2233 = vsel %vm1769, %v2145, 0
        %2235 = vmatpush.msra.mxu0 0.0
        %2236 = vmatpush.msra.mxu0 0.0
        %2237 = vmatpush.msra.mxu0 0.0
        %2238 = vmatpush.msra.mxu0 0.0
        %2239 = vmatpush.msra.mxu0 0.0
        %2240 = vmatpush.msra.mxu0 0.0
        %2241 = vmatpush.msra.mxu0 0.0
        %2242 = vmatpush.msra.mxu0 0.0
        %2243 = vmatpush.msra.mxu0 0.0
        %2244 = vmatpush.msra.mxu0 0.0
        %2245 = vmatpush.msra.mxu0 0.0
        %2246 = vmatpush.msra.mxu0 0.0
        %2247 = vmatpush.msra.mxu0 %v2219
        %2248 = vmatpush.msra.mxu0 %v2218
        %2249 = vmatpush.msra.mxu0 %v2217
        %2250 = vmatpush.msra.mxu0 %v2216
        %2251 = vmatmul.f32.gmra.mxu0 %v2233
        %v2252 = vpop.f32.mrf.mxu0
        %v2253 = vadd.f32 0.0, %v2252
        %2254 = vdwg.mxu0
        %v2256 = vsel %vm1769, %v2168, 0
        %2258 = vmatpush.msra.mxu0 0.0
        %2259 = vmatpush.msra.mxu0 0.0
        %2260 = vmatpush.msra.mxu0 0.0
        %2261 = vmatpush.msra.mxu0 0.0
        %2262 = vmatpush.msra.mxu0 0.0
        %2263 = vmatpush.msra.mxu0 0.0
        %2264 = vmatpush.msra.mxu0 0.0
        %2265 = vmatpush.msra.mxu0 0.0
        %2266 = vmatpush.msra.mxu0 0.0
        %2267 = vmatpush.msra.mxu0 0.0
        %2268 = vmatpush.msra.mxu0 0.0
        %2269 = vmatpush.msra.mxu0 0.0
        %2270 = vmatpush.msra.mxu0 %v2223
        %2271 = vmatpush.msra.mxu0 %v2222
        %2272 = vmatpush.msra.mxu0 %v2221
        %2273 = vmatpush.msra.mxu0 %v2220
        %2274 = vmatmul.f32.gmra.mxu0 %v2256
        %v2275 = vpop.f32.mrf.mxu0
        %v2276 = vadd.f32 0.0, %v2275
        %2277 = vdwg.mxu0
        %v2279 = vsel %vm1769, %v2191, 0
        %2281 = vmatpush.msra.mxu0 0.0
        %2282 = vmatpush.msra.mxu0 0.0
        %2283 = vmatpush.msra.mxu0 0.0
        %2284 = vmatpush.msra.mxu0 0.0
        %2285 = vmatpush.msra.mxu0 0.0
        %2286 = vmatpush.msra.mxu0 0.0
        %2287 = vmatpush.msra.mxu0 0.0
        %2288 = vmatpush.msra.mxu0 0.0
        %2289 = vmatpush.msra.mxu0 0.0
        %2290 = vmatpush.msra.mxu0 0.0
        %2291 = vmatpush.msra.mxu0 0.0
        %2292 = vmatpush.msra.mxu0 0.0
        %2293 = vmatpush.msra.mxu0 %v2227
        %2294 = vmatpush.msra.mxu0 %v2226
        %2295 = vmatpush.msra.mxu0 %v2225
        %2296 = vmatpush.msra.mxu0 %v2224
        %2297 = vmatmul.f32.gmra.mxu0 %v2279
        %v2298 = vpop.f32.mrf.mxu0
        %v2299 = vadd.f32 0.0, %v2298
        %2300 = vdwg.mxu0
        %v2302 = vsel %vm1769, %v2214, 0
        %2304 = vmatpush.msra.mxu0 0.0
        %2305 = vmatpush.msra.mxu0 0.0
        %2306 = vmatpush.msra.mxu0 0.0
        %2307 = vmatpush.msra.mxu0 0.0
        %2308 = vmatpush.msra.mxu0 0.0
        %2309 = vmatpush.msra.mxu0 0.0
        %2310 = vmatpush.msra.mxu0 0.0
        %2311 = vmatpush.msra.mxu0 0.0
        %2312 = vmatpush.msra.mxu0 0.0
        %2313 = vmatpush.msra.mxu0 0.0
        %2314 = vmatpush.msra.mxu0 0.0
        %2315 = vmatpush.msra.mxu0 0.0
        %2316 = vmatpush.msra.mxu0 %v2231
        %2317 = vmatpush.msra.mxu0 %v2230
        %2318 = vmatpush.msra.mxu0 %v2229
        %2319 = vmatpush.msra.mxu0 %v2228
        %2320 = vmatmul.f32.gmra.mxu0 %v2302
        %v2321 = vpop.f32.mrf.mxu0
        %v2322 = vadd.f32 0.0, %v2321
        %2323 = vdwg.mxu0
        %v2324 = vadd.f32 %v2253, %v2276
        %v2325 = vadd.f32 %v2324, %v2299
        %v2326 = vadd.f32 %v2325, %v2322
        %v2327 = vadd.f32 %v2326, %v1135
        %v2328 = vld [vmem:[%s19] sm:$0x1]
        %v2329 = vld [vmem:[%s21] sm:$0x1]
        %2330 = vadd.xlane.f32.xlu0 %v2327
        %v2331 = vpop.xlane.xlu0 %2330
        %v2332 = vrcp.pop 128.0
        %v2333 = vmul.f32 128.0, %v2332
        %v2334 = vsub.f32 1.0, %v2333
        %v2335 = vmul.f32 %v2332, %v2334
        %v2336 = vadd.f32 %v2332, %v2335
        %vm2337 = vweird.f32 %v2332
        %v2338 = vsel %vm2337, %v2332, %v2336
        %v2339 = vmul.f32 %v2331, %v2338
        %v2340 = vsub.f32 %v2327, %v2339
        %v2341 = vmul.f32 %v2340, %v2340
        %2342 = vadd.xlane.f32.xlu0 %v2341
        %v2343 = vpop.xlane.xlu0 %2342
        %v2344 = vmul.f32 %v2343, %v2338
        %v2345 = vadd.f32 %v2344, 1e-12
        %v2346 = vrsqrt.pop %v2345
        %v2347 = vmul.f32 %v2346, %v2345
        %v2348 = vmul.f32 %v2347, %v2346
        %v2349 = vmul.f32 0.5, %v2348
        %v2350 = vsub.f32 1.5, %v2349
        %v2351 = vmul.f32 %v2346, %v2350
        %vm2352 = vweird.f32 %v2345
        %vm2353 = vweird.f32 %v2346
        %vm2354 = vmor %vm2352, %vm2353
        %v2355 = vsel %vm2354, %v2346, %v2351
        %v2356 = vmul.f32 %v2340, %v2355
        %v2358 = vperm.slane %v2328, 0
        %v2360 = vmul.f32 %v2356, %v2358
        %v2362 = vperm.slane %v2329, 0
        %v2364 = vadd.f32 %v2360, %v2362
        %v2365 = vld [vmem:[%s23] sm:$0xff]
        %v2366 = vld [vmem:[%s23 + $0x8] sm:$0xff]
        %v2367 = vld [vmem:[%s23 + $0x10] sm:$0xff]
        %v2368 = vld [vmem:[%s23 + $0x18] sm:$0xff]
        %v2369 = vld [vmem:[%s23 + $0x20] sm:$0xff]
        %v2370 = vld [vmem:[%s23 + $0x28] sm:$0xff]
        %v2371 = vld [vmem:[%s23 + $0x30] sm:$0xff]
        %v2372 = vld [vmem:[%s23 + $0x38] sm:$0xff]
        %v2373 = vld [vmem:[%s23 + $0x40] sm:$0xff]
        %v2374 = vld [vmem:[%s23 + $0x48] sm:$0xff]
        %v2375 = vld [vmem:[%s23 + $0x50] sm:$0xff]
        %v2376 = vld [vmem:[%s23 + $0x58] sm:$0xff]
        %v2377 = vld [vmem:[%s23 + $0x60] sm:$0xff]
        %v2378 = vld [vmem:[%s23 + $0x68] sm:$0xff]
        %v2379 = vld [vmem:[%s23 + $0x70] sm:$0xff]
        %v2380 = vld [vmem:[%s23 + $0x78] sm:$0xff]
        %v2381 = vld [vmem:[%s23 + $0x80] sm:$0xff]
        %v2382 = vld [vmem:[%s23 + $0x88] sm:$0xff]
        %v2383 = vld [vmem:[%s23 + $0x90] sm:$0xff]
        %v2384 = vld [vmem:[%s23 + $0x98] sm:$0xff]
        %v2385 = vld [vmem:[%s23 + $0xa0] sm:$0xff]
        %v2386 = vld [vmem:[%s23 + $0xa8] sm:$0xff]
        %v2387 = vld [vmem:[%s23 + $0xb0] sm:$0xff]
        %v2388 = vld [vmem:[%s23 + $0xb8] sm:$0xff]
        %v2389 = vld [vmem:[%s23 + $0xc0] sm:$0xff]
        %v2390 = vld [vmem:[%s23 + $0xc8] sm:$0xff]
        %v2391 = vld [vmem:[%s23 + $0xd0] sm:$0xff]
        %v2392 = vld [vmem:[%s23 + $0xd8] sm:$0xff]
        %v2393 = vld [vmem:[%s23 + $0xe0] sm:$0xff]
        %v2394 = vld [vmem:[%s23 + $0xe8] sm:$0xff]
        %v2395 = vld [vmem:[%s23 + $0xf0] sm:$0xff]
        %v2396 = vld [vmem:[%s23 + $0xf8] sm:$0xff]
        %v2397 = vld [vmem:[%s25] sm:$0x3]
        %v2399 = vperm.slane %v2397, 0
        %v2400 = vperm.slane %v2397, 1
        %2403 = vmatpush.msra.mxu0 %v2395
        %2404 = vmatpush.msra.mxu0 %v2393
        %2405 = vmatpush.msra.mxu0 %v2391
        %2406 = vmatpush.msra.mxu0 %v2389
        %2407 = vmatpush.msra.mxu0 %v2387
        %2408 = vmatpush.msra.mxu0 %v2385
        %2409 = vmatpush.msra.mxu0 %v2383
        %2410 = vmatpush.msra.mxu0 %v2381
        %2411 = vmatpush.msra.mxu0 %v2379
        %2412 = vmatpush.msra.mxu0 %v2377
        %2413 = vmatpush.msra.mxu0 %v2375
        %2414 = vmatpush.msra.mxu0 %v2373
        %2415 = vmatpush.msra.mxu0 %v2371
        %2416 = vmatpush.msra.mxu0 %v2369
        %2417 = vmatpush.msra.mxu0 %v2367
        %2418 = vmatpush.msra.mxu0 %v2365
        %2419 = vmatmul.f32.gmra.mxu0 %v2364
        %v2420 = vpop.f32.mrf.mxu0
        %v2421 = vadd.f32 %v2399, %v2420
        %2422 = vdwg.mxu0
        %2423 = vmatpush.msra.mxu0 %v2396
        %2424 = vmatpush.msra.mxu0 %v2394
        %2425 = vmatpush.msra.mxu0 %v2392
        %2426 = vmatpush.msra.mxu0 %v2390
        %2427 = vmatpush.msra.mxu0 %v2388
        %2428 = vmatpush.msra.mxu0 %v2386
        %2429 = vmatpush.msra.mxu0 %v2384
        %2430 = vmatpush.msra.mxu0 %v2382
        %2431 = vmatpush.msra.mxu0 %v2380
        %2432 = vmatpush.msra.mxu0 %v2378
        %2433 = vmatpush.msra.mxu0 %v2376
        %2434 = vmatpush.msra.mxu0 %v2374
        %2435 = vmatpush.msra.mxu0 %v2372
        %2436 = vmatpush.msra.mxu0 %v2370
        %2437 = vmatpush.msra.mxu0 %v2368
        %2438 = vmatpush.msra.mxu0 %v2366
        %2439 = vmatmul.f32.gmra.mxu0 %v2364
        %v2440 = vpop.f32.mrf.mxu0
        %v2441 = vadd.f32 %v2400, %v2440
        %2442 = vdwg.mxu0
        %v2443 = vmul.f32 %v2421, 0.5
        %v2444 = vmul.f32 %v2441, 0.5
        %v2445 = vmul.f32 %v2421, 0.70710677
        %v2446 = vmul.f32 %v2441, 0.70710677
        %v2447 = vmul.f32 %v2445, %v2445
        %v2448 = vmin.f32 16.0, %v2447
        %v2449 = vmul.f32 %v2448, 2.1237322e-06
        %v2450 = vadd.f32 %v2449, 0.00028619796
        %v2451 = vmul.f32 %v2448, %v2450
        %v2452 = vadd.f32 %v2451, 0.0036580483
        %v2453 = vmul.f32 %v2448, %v2452
        %v2454 = vadd.f32 %v2453, 0.05243302
        %v2455 = vmul.f32 %v2448, %v2454
        %v2456 = vadd.f32 %v2455, 0.18741608
        %v2457 = vmul.f32 %v2448, %v2456
        %v2458 = vadd.f32 %v2457, 1.1283791
        %v2459 = vmul.f32 %v2445, %v2458
        %v2460 = vmul.f32 %v2448, 3.8918573e-05
        %v2461 = vadd.f32 %v2460, 0.001143296
        %v2462 = vmul.f32 %v2448, %v2461
        %v2463 = vadd.f32 %v2462, 0.014752088
        %v2464 = vmul.f32 %v2448, %v2463
        %v2465 = vadd.f32 %v2464, 0.112945676
        %v2466 = vmul.f32 %v2448, %v2465
        %v2467 = vadd.f32 %v2466, 0.4994258
        %v2468 = vmul.f32 %v2448, %v2467
        %v2469 = vadd.f32 %v2468, 1.0
        %v2470 = vrcp.pop %v2469
        %v2471 = vmul.f32 %v2469, %v2470
        %v2472 = vsub.f32 1.0, %v2471
        %v2473 = vmul.f32 %v2470, %v2472
        %v2474 = vadd.f32 %v2470, %v2473
        %vm2475 = vweird.f32 %v2469
        %vm2476 = vweird.f32 %v2470
        %vm2477 = vmor %vm2475, %vm2476
        %v2478 = vsel %vm2477, %v2470, %v2474
        %v2479 = vand.u32 2147483647, %v2469
        %vm2480 = vcmp.eq.f32.partialorder %v2479, 8.507059e+37
        %v2481 = vand.u32 %v2469, 2147483648
        %v2482 = vor.u32 1.1754944e-38, %v2481
        %v2483 = vsel %vm2480, %v2482, %v2478
        %v2484 = vmul.f32 %v2459, %v2483
        %v2485 = vmin.f32 %v2484, 1.0
        %v2486 = vmax.f32 %v2485, -1.0
        %v2487 = vmul.f32 %v2446, %v2446
        %v2488 = vmin.f32 16.0, %v2487
        %v2489 = vmul.f32 %v2488, 2.1237322e-06
        %v2490 = vadd.f32 %v2489, 0.00028619796
        %v2491 = vmul.f32 %v2488, %v2490
        %v2492 = vadd.f32 %v2491, 0.0036580483
        %v2493 = vmul.f32 %v2488, %v2492
        %v2494 = vadd.f32 %v2493, 0.05243302
        %v2495 = vmul.f32 %v2488, %v2494
        %v2496 = vadd.f32 %v2495, 0.18741608
        %v2497 = vmul.f32 %v2488, %v2496
        %v2498 = vadd.f32 %v2497, 1.1283791
        %v2499 = vmul.f32 %v2446, %v2498
        %v2500 = vmul.f32 %v2488, 3.8918573e-05
        %v2501 = vadd.f32 %v2500, 0.001143296
        %v2502 = vmul.f32 %v2488, %v2501
        %v2503 = vadd.f32 %v2502, 0.014752088
        %v2504 = vmul.f32 %v2488, %v2503
        %v2505 = vadd.f32 %v2504, 0.112945676
        %v2506 = vmul.f32 %v2488, %v2505
        %v2507 = vadd.f32 %v2506, 0.4994258
        %v2508 = vmul.f32 %v2488, %v2507
        %v2509 = vadd.f32 %v2508, 1.0
        %v2510 = vrcp.pop %v2509
        %v2511 = vmul.f32 %v2509, %v2510
        %v2512 = vsub.f32 1.0, %v2511
        %v2513 = vmul.f32 %v2510, %v2512
        %v2514 = vadd.f32 %v2510, %v2513
        %vm2515 = vweird.f32 %v2509
        %vm2516 = vweird.f32 %v2510
        %vm2517 = vmor %vm2515, %vm2516
        %v2518 = vsel %vm2517, %v2510, %v2514
        %v2519 = vand.u32 2147483647, %v2509
        %vm2520 = vcmp.eq.f32.partialorder %v2519, 8.507059e+37
        %v2521 = vand.u32 %v2509, 2147483648
        %v2522 = vor.u32 1.1754944e-38, %v2521
        %v2523 = vsel %vm2520, %v2522, %v2518
        %v2524 = vmul.f32 %v2499, %v2523
        %v2525 = vmin.f32 %v2524, 1.0
        %v2526 = vmax.f32 %v2525, -1.0
        %v2527 = vadd.f32 %v2486, 1.0
        %v2528 = vadd.f32 %v2526, 1.0
        %v2529 = vmul.f32 %v2443, %v2527
        %v2530 = vmul.f32 %v2444, %v2528
        %v2531 = vld [vmem:[%s27] sm:$0xff]
        %v2532 = vld [vmem:[%s27 + $0x8] sm:$0xff]
        %v2533 = vld [vmem:[%s27 + $0x10] sm:$0xff]
        %v2534 = vld [vmem:[%s27 + $0x18] sm:$0xff]
        %v2535 = vld [vmem:[%s27 + $0x20] sm:$0xff]
        %v2536 = vld [vmem:[%s27 + $0x28] sm:$0xff]
        %v2537 = vld [vmem:[%s27 + $0x30] sm:$0xff]
        %v2538 = vld [vmem:[%s27 + $0x38] sm:$0xff]
        %v2539 = vld [vmem:[%s27 + $0x40] sm:$0xff]
        %v2540 = vld [vmem:[%s27 + $0x48] sm:$0xff]
        %v2541 = vld [vmem:[%s27 + $0x50] sm:$0xff]
        %v2542 = vld [vmem:[%s27 + $0x58] sm:$0xff]
        %v2543 = vld [vmem:[%s27 + $0x60] sm:$0xff]
        %v2544 = vld [vmem:[%s27 + $0x68] sm:$0xff]
        %v2545 = vld [vmem:[%s27 + $0x70] sm:$0xff]
        %v2546 = vld [vmem:[%s27 + $0x78] sm:$0xff]
        %v2547 = vld [vmem:[%s27 + $0x80] sm:$0xff]
        %v2548 = vld [vmem:[%s27 + $0x88] sm:$0xff]
        %v2549 = vld [vmem:[%s27 + $0x90] sm:$0xff]
        %v2550 = vld [vmem:[%s27 + $0x98] sm:$0xff]
        %v2551 = vld [vmem:[%s27 + $0xa0] sm:$0xff]
        %v2552 = vld [vmem:[%s27 + $0xa8] sm:$0xff]
        %v2553 = vld [vmem:[%s27 + $0xb0] sm:$0xff]
        %v2554 = vld [vmem:[%s27 + $0xb8] sm:$0xff]
        %v2555 = vld [vmem:[%s27 + $0xc0] sm:$0xff]
        %v2556 = vld [vmem:[%s27 + $0xc8] sm:$0xff]
        %v2557 = vld [vmem:[%s27 + $0xd0] sm:$0xff]
        %v2558 = vld [vmem:[%s27 + $0xd8] sm:$0xff]
        %v2559 = vld [vmem:[%s27 + $0xe0] sm:$0xff]
        %v2560 = vld [vmem:[%s27 + $0xe8] sm:$0xff]
        %v2561 = vld [vmem:[%s27 + $0xf0] sm:$0xff]
        %v2562 = vld [vmem:[%s27 + $0xf8] sm:$0xff]
        %v2563 = vld [vmem:[%s29] sm:$0x1]
        %v2565 = vperm.slane %v2563, 0
        %2567 = vmatpush.msra.mxu0 %v2546
        %2568 = vmatpush.msra.mxu0 %v2545
        %2569 = vmatpush.msra.mxu0 %v2544
        %2570 = vmatpush.msra.mxu0 %v2543
        %2571 = vmatpush.msra.mxu0 %v2542
        %2572 = vmatpush.msra.mxu0 %v2541
        %2573 = vmatpush.msra.mxu0 %v2540
        %2574 = vmatpush.msra.mxu0 %v2539
        %2575 = vmatpush.msra.mxu0 %v2538
        %2576 = vmatpush.msra.mxu0 %v2537
        %2577 = vmatpush.msra.mxu0 %v2536
        %2578 = vmatpush.msra.mxu0 %v2535
        %2579 = vmatpush.msra.mxu0 %v2534
        %2580 = vmatpush.msra.mxu0 %v2533
        %2581 = vmatpush.msra.mxu0 %v2532
        %2582 = vmatpush.msra.mxu0 %v2531
        %2583 = vmatmul.f32.gmra.mxu0 %v2529
        %v2584 = vpop.f32.mrf.mxu0
        %v2585 = vadd.f32 %v2565, %v2584
        %2586 = vdwg.mxu0
        %2587 = vmatpush.msra.mxu0 %v2562
        %2588 = vmatpush.msra.mxu0 %v2561
        %2589 = vmatpush.msra.mxu0 %v2560
        %2590 = vmatpush.msra.mxu0 %v2559
        %2591 = vmatpush.msra.mxu0 %v2558
        %2592 = vmatpush.msra.mxu0 %v2557
        %2593 = vmatpush.msra.mxu0 %v2556
        %2594 = vmatpush.msra.mxu0 %v2555
        %2595 = vmatpush.msra.mxu0 %v2554
        %2596 = vmatpush.msra.mxu0 %v2553
        %2597 = vmatpush.msra.mxu0 %v2552
        %2598 = vmatpush.msra.mxu0 %v2551
        %2599 = vmatpush.msra.mxu0 %v2550
        %2600 = vmatpush.msra.mxu0 %v2549
        %2601 = vmatpush.msra.mxu0 %v2548
        %2602 = vmatpush.msra.mxu0 %v2547
        %2603 = vmatmul.f32.gmra.mxu0 %v2530
        %v2604 = vpop.f32.mrf.mxu0
        %v2605 = vadd.f32 %v2585, %v2604
        %2606 = vdwg.mxu0
        %v2607 = vadd.f32 %v2605, %v2364
        %v2608 = vld [vmem:[%s31] sm:$0x1]
        %v2609 = vld [vmem:[%s33] sm:$0x1]
        %2610 = vadd.xlane.f32.xlu0 %v2607
        %v2611 = vpop.xlane.xlu0 %2610
        %v2612 = vmul.f32 %v2611, %v2338
        %v2613 = vsub.f32 %v2607, %v2612
        %v2614 = vmul.f32 %v2613, %v2613
        %2615 = vadd.xlane.f32.xlu0 %v2614
        %v2616 = vpop.xlane.xlu0 %2615
        %v2617 = vmul.f32 %v2616, %v2338
        %v2618 = vadd.f32 %v2617, 1e-12
        %v2619 = vrsqrt.pop %v2618
        %v2620 = vmul.f32 %v2619, %v2618
        %v2621 = vmul.f32 %v2620, %v2619
        %v2622 = vmul.f32 0.5, %v2621
        %v2623 = vsub.f32 1.5, %v2622
        %v2624 = vmul.f32 %v2619, %v2623
        %vm2625 = vweird.f32 %v2618
        %vm2626 = vweird.f32 %v2619
        %vm2627 = vmor %vm2625, %vm2626
        %v2628 = vsel %vm2627, %v2619, %v2624
        %v2629 = vmul.f32 %v2613, %v2628
        %v2631 = vperm.slane %v2608, 0
        %v2633 = vmul.f32 %v2629, %v2631
        %v2635 = vperm.slane %v2609, 0
        %v2637 = vadd.f32 %v2633, %v2635
        %v2638 = vld [vmem:[%s35] sm:$0xff]
        %v2639 = vld [vmem:[%s35 + $0x8] sm:$0xff]
        %v2640 = vld [vmem:[%s35 + $0x10] sm:$0xff]
        %v2641 = vld [vmem:[%s35 + $0x18] sm:$0xff]
        %v2642 = vld [vmem:[%s35 + $0x20] sm:$0xff]
        %v2643 = vld [vmem:[%s35 + $0x28] sm:$0xff]
        %v2644 = vld [vmem:[%s35 + $0x30] sm:$0xff]
        %v2645 = vld [vmem:[%s35 + $0x38] sm:$0xff]
        %v2646 = vld [vmem:[%s35 + $0x40] sm:$0xff]
        %v2647 = vld [vmem:[%s35 + $0x48] sm:$0xff]
        %v2648 = vld [vmem:[%s35 + $0x50] sm:$0xff]
        %v2649 = vld [vmem:[%s35 + $0x58] sm:$0xff]
        %v2650 = vld [vmem:[%s35 + $0x60] sm:$0xff]
        %v2651 = vld [vmem:[%s35 + $0x68] sm:$0xff]
        %v2652 = vld [vmem:[%s35 + $0x70] sm:$0xff]
        %v2653 = vld [vmem:[%s35 + $0x78] sm:$0xff]
        %v2654 = vld [vmem:[%s35 + $0x80] sm:$0xff]
        %v2655 = vld [vmem:[%s35 + $0x88] sm:$0xff]
        %v2656 = vld [vmem:[%s35 + $0x90] sm:$0xff]
        %v2657 = vld [vmem:[%s35 + $0x98] sm:$0xff]
        %v2658 = vld [vmem:[%s35 + $0xa0] sm:$0xff]
        %v2659 = vld [vmem:[%s35 + $0xa8] sm:$0xff]
        %v2660 = vld [vmem:[%s35 + $0xb0] sm:$0xff]
        %v2661 = vld [vmem:[%s35 + $0xb8] sm:$0xff]
        %v2662 = vld [vmem:[%s35 + $0xc0] sm:$0xff]
        %v2663 = vld [vmem:[%s35 + $0xc8] sm:$0xff]
        %v2664 = vld [vmem:[%s35 + $0xd0] sm:$0xff]
        %v2665 = vld [vmem:[%s35 + $0xd8] sm:$0xff]
        %v2666 = vld [vmem:[%s35 + $0xe0] sm:$0xff]
        %v2667 = vld [vmem:[%s35 + $0xe8] sm:$0xff]
        %v2668 = vld [vmem:[%s35 + $0xf0] sm:$0xff]
        %v2669 = vld [vmem:[%s35 + $0xf8] sm:$0xff]
        %v2670 = vld [vmem:[%s35 + $0x100] sm:$0xff]
        %v2671 = vld [vmem:[%s35 + $0x108] sm:$0xff]
        %v2672 = vld [vmem:[%s35 + $0x110] sm:$0xff]
        %v2673 = vld [vmem:[%s35 + $0x118] sm:$0xff]
        %v2674 = vld [vmem:[%s35 + $0x120] sm:$0xff]
        %v2675 = vld [vmem:[%s35 + $0x128] sm:$0xff]
        %v2676 = vld [vmem:[%s35 + $0x130] sm:$0xff]
        %v2677 = vld [vmem:[%s35 + $0x138] sm:$0xff]
        %v2678 = vld [vmem:[%s35 + $0x140] sm:$0xff]
        %v2679 = vld [vmem:[%s35 + $0x148] sm:$0xff]
        %v2680 = vld [vmem:[%s35 + $0x150] sm:$0xff]
        %v2681 = vld [vmem:[%s35 + $0x158] sm:$0xff]
        %v2682 = vld [vmem:[%s35 + $0x160] sm:$0xff]
        %v2683 = vld [vmem:[%s35 + $0x168] sm:$0xff]
        %v2684 = vld [vmem:[%s35 + $0x170] sm:$0xff]
        %v2685 = vld [vmem:[%s35 + $0x178] sm:$0xff]
        %v2686 = vld [vmem:[%s35 + $0x180] sm:$0xff]
        %v2687 = vld [vmem:[%s35 + $0x188] sm:$0xff]
        %v2688 = vld [vmem:[%s35 + $0x190] sm:$0xff]
        %v2689 = vld [vmem:[%s35 + $0x198] sm:$0xff]
        %v2690 = vld [vmem:[%s35 + $0x1a0] sm:$0xff]
        %v2691 = vld [vmem:[%s35 + $0x1a8] sm:$0xff]
        %v2692 = vld [vmem:[%s35 + $0x1b0] sm:$0xff]
        %v2693 = vld [vmem:[%s35 + $0x1b8] sm:$0xff]
        %v2694 = vld [vmem:[%s35 + $0x1c0] sm:$0xff]
        %v2695 = vld [vmem:[%s35 + $0x1c8] sm:$0xff]
        %v2696 = vld [vmem:[%s35 + $0x1d0] sm:$0xff]
        %v2697 = vld [vmem:[%s35 + $0x1d8] sm:$0xff]
        %v2698 = vld [vmem:[%s35 + $0x1e0] sm:$0xff]
        %v2699 = vld [vmem:[%s35 + $0x1e8] sm:$0xff]
        %v2700 = vld [vmem:[%s35 + $0x1f0] sm:$0xff]
        %v2701 = vld [vmem:[%s35 + $0x1f8] sm:$0xff]
        %v2702 = vld [vmem:[%s35 + $0x200] sm:$0xff]
        %v2703 = vld [vmem:[%s35 + $0x208] sm:$0xff]
        %v2704 = vld [vmem:[%s35 + $0x210] sm:$0xff]
        %v2705 = vld [vmem:[%s35 + $0x218] sm:$0xff]
        %v2706 = vld [vmem:[%s35 + $0x220] sm:$0xff]
        %v2707 = vld [vmem:[%s35 + $0x228] sm:$0xff]
        %v2708 = vld [vmem:[%s35 + $0x230] sm:$0xff]
        %v2709 = vld [vmem:[%s35 + $0x238] sm:$0xff]
        %v2710 = vld [vmem:[%s35 + $0x240] sm:$0xff]
        %v2711 = vld [vmem:[%s35 + $0x248] sm:$0xff]
        %v2712 = vld [vmem:[%s35 + $0x250] sm:$0xff]
        %v2713 = vld [vmem:[%s35 + $0x258] sm:$0xff]
        %v2714 = vld [vmem:[%s35 + $0x260] sm:$0xff]
        %v2715 = vld [vmem:[%s35 + $0x268] sm:$0xff]
        %v2716 = vld [vmem:[%s35 + $0x270] sm:$0xff]
        %v2717 = vld [vmem:[%s35 + $0x278] sm:$0xff]
        %v2718 = vld [vmem:[%s35 + $0x280] sm:$0xff]
        %v2719 = vld [vmem:[%s35 + $0x288] sm:$0xff]
        %v2720 = vld [vmem:[%s35 + $0x290] sm:$0xff]
        %v2721 = vld [vmem:[%s35 + $0x298] sm:$0xff]
        %v2722 = vld [vmem:[%s35 + $0x2a0] sm:$0xff]
        %v2723 = vld [vmem:[%s35 + $0x2a8] sm:$0xff]
        %v2724 = vld [vmem:[%s35 + $0x2b0] sm:$0xff]
        %v2725 = vld [vmem:[%s35 + $0x2b8] sm:$0xff]
        %v2726 = vld [vmem:[%s35 + $0x2c0] sm:$0xff]
        %v2727 = vld [vmem:[%s35 + $0x2c8] sm:$0xff]
        %v2728 = vld [vmem:[%s35 + $0x2d0] sm:$0xff]
        %v2729 = vld [vmem:[%s35 + $0x2d8] sm:$0xff]
        %v2730 = vld [vmem:[%s35 + $0x2e0] sm:$0xff]
        %v2731 = vld [vmem:[%s35 + $0x2e8] sm:$0xff]
        %v2732 = vld [vmem:[%s35 + $0x2f0] sm:$0xff]
        %v2733 = vld [vmem:[%s35 + $0x2f8] sm:$0xff]
        %v2734 = vld [vmem:[%s35 + $0x300] sm:$0xff]
        %v2735 = vld [vmem:[%s35 + $0x308] sm:$0xff]
        %v2736 = vld [vmem:[%s35 + $0x310] sm:$0xff]
        %v2737 = vld [vmem:[%s35 + $0x318] sm:$0xff]
        %v2738 = vld [vmem:[%s35 + $0x320] sm:$0xff]
        %v2739 = vld [vmem:[%s35 + $0x328] sm:$0xff]
        %v2740 = vld [vmem:[%s35 + $0x330] sm:$0xff]
        %v2741 = vld [vmem:[%s35 + $0x338] sm:$0xff]
        %v2742 = vld [vmem:[%s35 + $0x340] sm:$0xff]
        %v2743 = vld [vmem:[%s35 + $0x348] sm:$0xff]
        %v2744 = vld [vmem:[%s35 + $0x350] sm:$0xff]
        %v2745 = vld [vmem:[%s35 + $0x358] sm:$0xff]
        %v2746 = vld [vmem:[%s35 + $0x360] sm:$0xff]
        %v2747 = vld [vmem:[%s35 + $0x368] sm:$0xff]
        %v2748 = vld [vmem:[%s35 + $0x370] sm:$0xff]
        %v2749 = vld [vmem:[%s35 + $0x378] sm:$0xff]
        %v2750 = vld [vmem:[%s35 + $0x380] sm:$0xff]
        %v2751 = vld [vmem:[%s35 + $0x388] sm:$0xff]
        %v2752 = vld [vmem:[%s35 + $0x390] sm:$0xff]
        %v2753 = vld [vmem:[%s35 + $0x398] sm:$0xff]
        %v2754 = vld [vmem:[%s35 + $0x3a0] sm:$0xff]
        %v2755 = vld [vmem:[%s35 + $0x3a8] sm:$0xff]
        %v2756 = vld [vmem:[%s35 + $0x3b0] sm:$0xff]
        %v2757 = vld [vmem:[%s35 + $0x3b8] sm:$0xff]
        %v2758 = vld [vmem:[%s35 + $0x3c0] sm:$0xff]
        %v2759 = vld [vmem:[%s35 + $0x3c8] sm:$0xff]
        %v2760 = vld [vmem:[%s35 + $0x3d0] sm:$0xff]
        %v2761 = vld [vmem:[%s35 + $0x3d8] sm:$0xff]
        %v2762 = vld [vmem:[%s35 + $0x3e0] sm:$0xff]
        %v2763 = vld [vmem:[%s35 + $0x3e8] sm:$0xff]
        %v2764 = vld [vmem:[%s35 + $0x3f0] sm:$0xff]
        %v2765 = vld [vmem:[%s35 + $0x3f8] sm:$0xff]
        %v2766 = vld [vmem:[%s35 + $0x400] sm:$0xff]
        %v2767 = vld [vmem:[%s35 + $0x408] sm:$0xff]
        %v2768 = vld [vmem:[%s35 + $0x410] sm:$0xff]
        %v2769 = vld [vmem:[%s35 + $0x418] sm:$0xff]
        %v2770 = vld [vmem:[%s35 + $0x420] sm:$0xff]
        %v2771 = vld [vmem:[%s35 + $0x428] sm:$0xff]
        %v2772 = vld [vmem:[%s35 + $0x430] sm:$0xff]
        %v2773 = vld [vmem:[%s35 + $0x438] sm:$0xff]
        %v2774 = vld [vmem:[%s35 + $0x440] sm:$0xff]
        %v2775 = vld [vmem:[%s35 + $0x448] sm:$0xff]
        %v2776 = vld [vmem:[%s35 + $0x450] sm:$0xff]
        %v2777 = vld [vmem:[%s35 + $0x458] sm:$0xff]
        %v2778 = vld [vmem:[%s35 + $0x460] sm:$0xff]
        %v2779 = vld [vmem:[%s35 + $0x468] sm:$0xff]
        %v2780 = vld [vmem:[%s35 + $0x470] sm:$0xff]
        %v2781 = vld [vmem:[%s35 + $0x478] sm:$0xff]
        %v2782 = vld [vmem:[%s35 + $0x480] sm:$0xff]
        %v2783 = vld [vmem:[%s35 + $0x488] sm:$0xff]
        %v2784 = vld [vmem:[%s35 + $0x490] sm:$0xff]
        %v2785 = vld [vmem:[%s35 + $0x498] sm:$0xff]
        %v2786 = vld [vmem:[%s35 + $0x4a0] sm:$0xff]
        %v2787 = vld [vmem:[%s35 + $0x4a8] sm:$0xff]
        %v2788 = vld [vmem:[%s35 + $0x4b0] sm:$0xff]
        %v2789 = vld [vmem:[%s35 + $0x4b8] sm:$0xff]
        %v2790 = vld [vmem:[%s35 + $0x4c0] sm:$0xff]
        %v2791 = vld [vmem:[%s35 + $0x4c8] sm:$0xff]
        %v2792 = vld [vmem:[%s35 + $0x4d0] sm:$0xff]
        %v2793 = vld [vmem:[%s35 + $0x4d8] sm:$0xff]
        %v2794 = vld [vmem:[%s35 + $0x4e0] sm:$0xff]
        %v2795 = vld [vmem:[%s35 + $0x4e8] sm:$0xff]
        %v2796 = vld [vmem:[%s35 + $0x4f0] sm:$0xff]
        %v2797 = vld [vmem:[%s35 + $0x4f8] sm:$0xff]
        %v2798 = vld [vmem:[%s35 + $0x500] sm:$0xff]
        %v2799 = vld [vmem:[%s35 + $0x508] sm:$0xff]
        %v2800 = vld [vmem:[%s35 + $0x510] sm:$0xff]
        %v2801 = vld [vmem:[%s35 + $0x518] sm:$0xff]
        %v2802 = vld [vmem:[%s35 + $0x520] sm:$0xff]
        %v2803 = vld [vmem:[%s35 + $0x528] sm:$0xff]
        %v2804 = vld [vmem:[%s35 + $0x530] sm:$0xff]
        %v2805 = vld [vmem:[%s35 + $0x538] sm:$0xff]
        %v2806 = vld [vmem:[%s35 + $0x540] sm:$0xff]
        %v2807 = vld [vmem:[%s35 + $0x548] sm:$0xff]
        %v2808 = vld [vmem:[%s35 + $0x550] sm:$0xff]
        %v2809 = vld [vmem:[%s35 + $0x558] sm:$0xff]
        %v2810 = vld [vmem:[%s35 + $0x560] sm:$0xff]
        %v2811 = vld [vmem:[%s35 + $0x568] sm:$0xff]
        %v2812 = vld [vmem:[%s35 + $0x570] sm:$0xff]
        %v2813 = vld [vmem:[%s35 + $0x578] sm:$0xff]
        %v2814 = vld [vmem:[%s35 + $0x580] sm:$0xff]
        %v2815 = vld [vmem:[%s35 + $0x588] sm:$0xff]
        %v2816 = vld [vmem:[%s35 + $0x590] sm:$0xff]
        %v2817 = vld [vmem:[%s35 + $0x598] sm:$0xff]
        %v2818 = vld [vmem:[%s35 + $0x5a0] sm:$0xff]
        %v2819 = vld [vmem:[%s35 + $0x5a8] sm:$0xff]
        %v2820 = vld [vmem:[%s35 + $0x5b0] sm:$0xff]
        %v2821 = vld [vmem:[%s35 + $0x5b8] sm:$0xff]
        %v2822 = vld [vmem:[%s35 + $0x5c0] sm:$0xff]
        %v2823 = vld [vmem:[%s35 + $0x5c8] sm:$0xff]
        %v2824 = vld [vmem:[%s35 + $0x5d0] sm:$0xff]
        %v2825 = vld [vmem:[%s35 + $0x5d8] sm:$0xff]
        %v2826 = vld [vmem:[%s35 + $0x5e0] sm:$0xff]
        %v2827 = vld [vmem:[%s35 + $0x5e8] sm:$0xff]
        %v2828 = vld [vmem:[%s35 + $0x5f0] sm:$0xff]
        %v2829 = vld [vmem:[%s35 + $0x5f8] sm:$0xff]
        %2830 = vmatpush.msra.mxu0 %v2653
        %2831 = vmatpush.msra.mxu0 %v2652
        %2832 = vmatpush.msra.mxu0 %v2651
        %2833 = vmatpush.msra.mxu0 %v2650
        %2834 = vmatpush.msra.mxu0 %v2649
        %2835 = vmatpush.msra.mxu0 %v2648
        %2836 = vmatpush.msra.mxu0 %v2647
        %2837 = vmatpush.msra.mxu0 %v2646
        %2838 = vmatpush.msra.mxu0 %v2645
        %2839 = vmatpush.msra.mxu0 %v2644
        %2840 = vmatpush.msra.mxu0 %v2643
        %2841 = vmatpush.msra.mxu0 %v2642
        %2842 = vmatpush.msra.mxu0 %v2641
        %2843 = vmatpush.msra.mxu0 %v2640
        %2844 = vmatpush.msra.mxu0 %v2639
        %2845 = vmatpush.msra.mxu0 %v2638
        %2846 = vmatmul.f32.gmra.mxu0 %v2637
        %v2847 = vpop.f32.mrf.mxu0
        %v2848 = vadd.f32 0.0, %v2847
        %2849 = vdwg.mxu0
        %2850 = vmatpush.msra.mxu0 %v2669
        %2851 = vmatpush.msra.mxu0 %v2668
        %2852 = vmatpush.msra.mxu0 %v2667
        %2853 = vmatpush.msra.mxu0 %v2666
        %2854 = vmatpush.msra.mxu0 %v2665
        %2855 = vmatpush.msra.mxu0 %v2664
        %2856 = vmatpush.msra.mxu0 %v2663
        %2857 = vmatpush.msra.mxu0 %v2662
        %2858 = vmatpush.msra.mxu0 %v2661
        %2859 = vmatpush.msra.mxu0 %v2660
        %2860 = vmatpush.msra.mxu0 %v2659
        %2861 = vmatpush.msra.mxu0 %v2658
        %2862 = vmatpush.msra.mxu0 %v2657
        %2863 = vmatpush.msra.mxu0 %v2656
        %2864 = vmatpush.msra.mxu0 %v2655
        %2865 = vmatpush.msra.mxu0 %v2654
        %2866 = vmatmul.f32.gmra.mxu0 %v2637
        %v2867 = vpop.f32.mrf.mxu0
        %v2868 = vadd.f32 0.0, %v2867
        %2869 = vdwg.mxu0
        %2870 = vmatpush.msra.mxu0 %v2685
        %2871 = vmatpush.msra.mxu0 %v2684
        %2872 = vmatpush.msra.mxu0 %v2683
        %2873 = vmatpush.msra.mxu0 %v2682
        %2874 = vmatpush.msra.mxu0 %v2681
        %2875 = vmatpush.msra.mxu0 %v2680
        %2876 = vmatpush.msra.mxu0 %v2679
        %2877 = vmatpush.msra.mxu0 %v2678
        %2878 = vmatpush.msra.mxu0 %v2677
        %2879 = vmatpush.msra.mxu0 %v2676
        %2880 = vmatpush.msra.mxu0 %v2675
        %2881 = vmatpush.msra.mxu0 %v2674
        %2882 = vmatpush.msra.mxu0 %v2673
        %2883 = vmatpush.msra.mxu0 %v2672
        %2884 = vmatpush.msra.mxu0 %v2671
        %2885 = vmatpush.msra.mxu0 %v2670
        %2886 = vmatmul.f32.gmra.mxu0 %v2637
        %v2887 = vpop.f32.mrf.mxu0
        %v2888 = vadd.f32 0.0, %v2887
        %2889 = vdwg.mxu0
        %2890 = vmatpush.msra.mxu0 %v2701
        %2891 = vmatpush.msra.mxu0 %v2700
        %2892 = vmatpush.msra.mxu0 %v2699
        %2893 = vmatpush.msra.mxu0 %v2698
        %2894 = vmatpush.msra.mxu0 %v2697
        %2895 = vmatpush.msra.mxu0 %v2696
        %2896 = vmatpush.msra.mxu0 %v2695
        %2897 = vmatpush.msra.mxu0 %v2694
        %2898 = vmatpush.msra.mxu0 %v2693
        %2899 = vmatpush.msra.mxu0 %v2692
        %2900 = vmatpush.msra.mxu0 %v2691
        %2901 = vmatpush.msra.mxu0 %v2690
        %2902 = vmatpush.msra.mxu0 %v2689
        %2903 = vmatpush.msra.mxu0 %v2688
        %2904 = vmatpush.msra.mxu0 %v2687
        %2905 = vmatpush.msra.mxu0 %v2686
        %2906 = vmatmul.f32.gmra.mxu0 %v2637
        %v2907 = vpop.f32.mrf.mxu0
        %v2908 = vadd.f32 0.0, %v2907
        %2909 = vdwg.mxu0
        %2910 = vmatpush.msra.mxu0 %v2717
        %2911 = vmatpush.msra.mxu0 %v2716
        %2912 = vmatpush.msra.mxu0 %v2715
        %2913 = vmatpush.msra.mxu0 %v2714
        %2914 = vmatpush.msra.mxu0 %v2713
        %2915 = vmatpush.msra.mxu0 %v2712
        %2916 = vmatpush.msra.mxu0 %v2711
        %2917 = vmatpush.msra.mxu0 %v2710
        %2918 = vmatpush.msra.mxu0 %v2709
        %2919 = vmatpush.msra.mxu0 %v2708
        %2920 = vmatpush.msra.mxu0 %v2707
        %2921 = vmatpush.msra.mxu0 %v2706
        %2922 = vmatpush.msra.mxu0 %v2705
        %2923 = vmatpush.msra.mxu0 %v2704
        %2924 = vmatpush.msra.mxu0 %v2703
        %2925 = vmatpush.msra.mxu0 %v2702
        %2926 = vmatmul.f32.gmra.mxu0 %v2637
        %v2927 = vpop.f32.mrf.mxu0
        %v2928 = vadd.f32 0.0, %v2927
        %2929 = vdwg.mxu0
        %2930 = vmatpush.msra.mxu0 %v2733
        %2931 = vmatpush.msra.mxu0 %v2732
        %2932 = vmatpush.msra.mxu0 %v2731
        %2933 = vmatpush.msra.mxu0 %v2730
        %2934 = vmatpush.msra.mxu0 %v2729
        %2935 = vmatpush.msra.mxu0 %v2728
        %2936 = vmatpush.msra.mxu0 %v2727
        %2937 = vmatpush.msra.mxu0 %v2726
        %2938 = vmatpush.msra.mxu0 %v2725
        %2939 = vmatpush.msra.mxu0 %v2724
        %2940 = vmatpush.msra.mxu0 %v2723
        %2941 = vmatpush.msra.mxu0 %v2722
        %2942 = vmatpush.msra.mxu0 %v2721
        %2943 = vmatpush.msra.mxu0 %v2720
        %2944 = vmatpush.msra.mxu0 %v2719
        %2945 = vmatpush.msra.mxu0 %v2718
        %2946 = vmatmul.f32.gmra.mxu0 %v2637
        %v2947 = vpop.f32.mrf.mxu0
        %v2948 = vadd.f32 0.0, %v2947
        %2949 = vdwg.mxu0
        %2950 = vmatpush.msra.mxu0 %v2749
        %2951 = vmatpush.msra.mxu0 %v2748
        %2952 = vmatpush.msra.mxu0 %v2747
        %2953 = vmatpush.msra.mxu0 %v2746
        %2954 = vmatpush.msra.mxu0 %v2745
        %2955 = vmatpush.msra.mxu0 %v2744
        %2956 = vmatpush.msra.mxu0 %v2743
        %2957 = vmatpush.msra.mxu0 %v2742
        %2958 = vmatpush.msra.mxu0 %v2741
        %2959 = vmatpush.msra.mxu0 %v2740
        %2960 = vmatpush.msra.mxu0 %v2739
        %2961 = vmatpush.msra.mxu0 %v2738
        %2962 = vmatpush.msra.mxu0 %v2737
        %2963 = vmatpush.msra.mxu0 %v2736
        %2964 = vmatpush.msra.mxu0 %v2735
        %2965 = vmatpush.msra.mxu0 %v2734
        %2966 = vmatmul.f32.gmra.mxu0 %v2637
        %v2967 = vpop.f32.mrf.mxu0
        %v2968 = vadd.f32 0.0, %v2967
        %2969 = vdwg.mxu0
        %2970 = vmatpush.msra.mxu0 %v2765
        %2971 = vmatpush.msra.mxu0 %v2764
        %2972 = vmatpush.msra.mxu0 %v2763
        %2973 = vmatpush.msra.mxu0 %v2762
        %2974 = vmatpush.msra.mxu0 %v2761
        %2975 = vmatpush.msra.mxu0 %v2760
        %2976 = vmatpush.msra.mxu0 %v2759
        %2977 = vmatpush.msra.mxu0 %v2758
        %2978 = vmatpush.msra.mxu0 %v2757
        %2979 = vmatpush.msra.mxu0 %v2756
        %2980 = vmatpush.msra.mxu0 %v2755
        %2981 = vmatpush.msra.mxu0 %v2754
        %2982 = vmatpush.msra.mxu0 %v2753
        %2983 = vmatpush.msra.mxu0 %v2752
        %2984 = vmatpush.msra.mxu0 %v2751
        %2985 = vmatpush.msra.mxu0 %v2750
        %2986 = vmatmul.f32.gmra.mxu0 %v2637
        %v2987 = vpop.f32.mrf.mxu0
        %v2988 = vadd.f32 0.0, %v2987
        %2989 = vdwg.mxu0
        %2990 = vmatpush.msra.mxu0 %v2781
        %2991 = vmatpush.msra.mxu0 %v2780
        %2992 = vmatpush.msra.mxu0 %v2779
        %2993 = vmatpush.msra.mxu0 %v2778
        %2994 = vmatpush.msra.mxu0 %v2777
        %2995 = vmatpush.msra.mxu0 %v2776
        %2996 = vmatpush.msra.mxu0 %v2775
        %2997 = vmatpush.msra.mxu0 %v2774
        %2998 = vmatpush.msra.mxu0 %v2773
        %2999 = vmatpush.msra.mxu0 %v2772
        %3000 = vmatpush.msra.mxu0 %v2771
        %3001 = vmatpush.msra.mxu0 %v2770
        %3002 = vmatpush.msra.mxu0 %v2769
        %3003 = vmatpush.msra.mxu0 %v2768
        %3004 = vmatpush.msra.mxu0 %v2767
        %3005 = vmatpush.msra.mxu0 %v2766
        %3006 = vmatmul.f32.gmra.mxu0 %v2637
        %v3007 = vpop.f32.mrf.mxu0
        %v3008 = vadd.f32 0.0, %v3007
        %3009 = vdwg.mxu0
        %3010 = vmatpush.msra.mxu0 %v2797
        %3011 = vmatpush.msra.mxu0 %v2796
        %3012 = vmatpush.msra.mxu0 %v2795
        %3013 = vmatpush.msra.mxu0 %v2794
        %3014 = vmatpush.msra.mxu0 %v2793
        %3015 = vmatpush.msra.mxu0 %v2792
        %3016 = vmatpush.msra.mxu0 %v2791
        %3017 = vmatpush.msra.mxu0 %v2790
        %3018 = vmatpush.msra.mxu0 %v2789
        %3019 = vmatpush.msra.mxu0 %v2788
        %3020 = vmatpush.msra.mxu0 %v2787
        %3021 = vmatpush.msra.mxu0 %v2786
        %3022 = vmatpush.msra.mxu0 %v2785
        %3023 = vmatpush.msra.mxu0 %v2784
        %3024 = vmatpush.msra.mxu0 %v2783
        %3025 = vmatpush.msra.mxu0 %v2782
        %3026 = vmatmul.f32.gmra.mxu0 %v2637
        %v3027 = vpop.f32.mrf.mxu0
        %v3028 = vadd.f32 0.0, %v3027
        %3029 = vdwg.mxu0
        %3030 = vmatpush.msra.mxu0 %v2813
        %3031 = vmatpush.msra.mxu0 %v2812
        %3032 = vmatpush.msra.mxu0 %v2811
        %3033 = vmatpush.msra.mxu0 %v2810
        %3034 = vmatpush.msra.mxu0 %v2809
        %3035 = vmatpush.msra.mxu0 %v2808
        %3036 = vmatpush.msra.mxu0 %v2807
        %3037 = vmatpush.msra.mxu0 %v2806
        %3038 = vmatpush.msra.mxu0 %v2805
        %3039 = vmatpush.msra.mxu0 %v2804
        %3040 = vmatpush.msra.mxu0 %v2803
        %3041 = vmatpush.msra.mxu0 %v2802
        %3042 = vmatpush.msra.mxu0 %v2801
        %3043 = vmatpush.msra.mxu0 %v2800
        %3044 = vmatpush.msra.mxu0 %v2799
        %3045 = vmatpush.msra.mxu0 %v2798
        %3046 = vmatmul.f32.gmra.mxu0 %v2637
        %v3047 = vpop.f32.mrf.mxu0
        %v3048 = vadd.f32 0.0, %v3047
        %3049 = vdwg.mxu0
        %3050 = vmatpush.msra.mxu0 %v2829
        %3051 = vmatpush.msra.mxu0 %v2828
        %3052 = vmatpush.msra.mxu0 %v2827
        %3053 = vmatpush.msra.mxu0 %v2826
        %3054 = vmatpush.msra.mxu0 %v2825
        %3055 = vmatpush.msra.mxu0 %v2824
        %3056 = vmatpush.msra.mxu0 %v2823
        %3057 = vmatpush.msra.mxu0 %v2822
        %3058 = vmatpush.msra.mxu0 %v2821
        %3059 = vmatpush.msra.mxu0 %v2820
        %3060 = vmatpush.msra.mxu0 %v2819
        %3061 = vmatpush.msra.mxu0 %v2818
        %3062 = vmatpush.msra.mxu0 %v2817
        %3063 = vmatpush.msra.mxu0 %v2816
        %3064 = vmatpush.msra.mxu0 %v2815
        %3065 = vmatpush.msra.mxu0 %v2814
        %3066 = vmatmul.f32.gmra.mxu0 %v2637
        %v3067 = vpop.f32.mrf.mxu0
        %v3068 = vadd.f32 0.0, %v3067
        %3069 = vdwg.mxu0
        %v3070 = vld [vmem:[%s37] sm:$0x1]
        %v3071 = vld [vmem:[%s37 + $0x1] sm:$0x1]
        %v3072 = vld [vmem:[%s37 + $0x2] sm:$0x1]
        %v3073 = vld [vmem:[%s37 + $0x3] sm:$0x1]
        %v3078 = vperm.slane %v3070, 0
        %v3079 = vperm.slane %v3071, 0
        %v3080 = vperm.slane %v3072, 0
        %v3081 = vperm.slane %v3073, 0
        %v3086 = vadd.f32 %v2848, %v3078
        %v3087 = vadd.f32 %v2868, %v3079
        %v3088 = vadd.f32 %v2888, %v3080
        %v3089 = vadd.f32 %v2908, %v3081
        %v3090 = vld [vmem:[%s39] sm:$0x1]
        %v3091 = vld [vmem:[%s39 + $0x1] sm:$0x1]
        %v3092 = vld [vmem:[%s39 + $0x2] sm:$0x1]
        %v3093 = vld [vmem:[%s39 + $0x3] sm:$0x1]
        %v3098 = vperm.slane %v3090, 0
        %v3099 = vperm.slane %v3091, 0
        %v3100 = vperm.slane %v3092, 0
        %v3101 = vperm.slane %v3093, 0
        %v3106 = vadd.f32 %v2848, %v3098
        %v3107 = vadd.f32 %v2868, %v3099
        %v3108 = vadd.f32 %v2888, %v3100
        %v3109 = vadd.f32 %v2908, %v3101
        %v3114 = vrot.slane %v3106, 1
        %v3115 = vrot.slane %v3106, 2
        %v3116 = vrot.slane %v3106, 3
        %v3117 = vrot.slane %v3106, 4
        %v3118 = vrot.slane %v3106, 5
        %v3119 = vrot.slane %v3106, 6
        %v3120 = vrot.slane %v3106, 7
        %v3121 = vrot.slane %v3107, 1
        %v3122 = vrot.slane %v3107, 2
        %v3123 = vrot.slane %v3107, 3
        %v3124 = vrot.slane %v3107, 4
        %v3125 = vrot.slane %v3107, 5
        %v3126 = vrot.slane %v3107, 6
        %v3127 = vrot.slane %v3107, 7
        %v3128 = vrot.slane %v3108, 1
        %v3129 = vrot.slane %v3108, 2
        %v3130 = vrot.slane %v3108, 3
        %v3131 = vrot.slane %v3108, 4
        %v3132 = vrot.slane %v3108, 5
        %v3133 = vrot.slane %v3108, 6
        %v3134 = vrot.slane %v3108, 7
        %v3135 = vrot.slane %v3109, 1
        %v3136 = vrot.slane %v3109, 2
        %v3137 = vrot.slane %v3109, 3
        %v3138 = vrot.slane %v3109, 4
        %v3139 = vrot.slane %v3109, 5
        %v3140 = vrot.slane %v3109, 6
        %v3141 = vrot.slane %v3109, 7
        %v3142 = vld [vmem:[%s41] sm:$0xff]
        %v3143 = vld [vmem:[%s41 + $0x8] sm:$0xff]
        %v3144 = vld [vmem:[%s41 + $0x10] sm:$0xff]
        %v3145 = vld [vmem:[%s41 + $0x18] sm:$0xff]
        %v3146 = vld [vmem:[%s41 + $0x20] sm:$0xff]
        %v3147 = vld [vmem:[%s41 + $0x28] sm:$0xff]
        %v3148 = vld [vmem:[%s41 + $0x30] sm:$0xff]
        %v3149 = vld [vmem:[%s41 + $0x38] sm:$0xff]
        %v3150 = vld [vmem:[%s41 + $0x40] sm:$0xff]
        %v3151 = vld [vmem:[%s41 + $0x48] sm:$0xff]
        %v3152 = vld [vmem:[%s41 + $0x50] sm:$0xff]
        %v3153 = vld [vmem:[%s41 + $0x58] sm:$0xff]
        %v3154 = vld [vmem:[%s41 + $0x60] sm:$0xff]
        %v3155 = vld [vmem:[%s41 + $0x68] sm:$0xff]
        %v3156 = vld [vmem:[%s41 + $0x70] sm:$0xff]
        %v3157 = vld [vmem:[%s41 + $0x78] sm:$0xff]
        %v3158 = vld [vmem:[%s41 + $0x80] sm:$0xff]
        %v3159 = vld [vmem:[%s41 + $0x88] sm:$0xff]
        %v3160 = vld [vmem:[%s41 + $0x90] sm:$0xff]
        %v3161 = vld [vmem:[%s41 + $0x98] sm:$0xff]
        %v3162 = vld [vmem:[%s41 + $0xa0] sm:$0xff]
        %v3163 = vld [vmem:[%s41 + $0xa8] sm:$0xff]
        %v3164 = vld [vmem:[%s41 + $0xb0] sm:$0xff]
        %v3165 = vld [vmem:[%s41 + $0xb8] sm:$0xff]
        %v3166 = vld [vmem:[%s41 + $0xc0] sm:$0xff]
        %v3167 = vld [vmem:[%s41 + $0xc8] sm:$0xff]
        %v3168 = vld [vmem:[%s41 + $0xd0] sm:$0xff]
        %v3169 = vld [vmem:[%s41 + $0xd8] sm:$0xff]
        %v3170 = vld [vmem:[%s41 + $0xe0] sm:$0xff]
        %v3171 = vld [vmem:[%s41 + $0xe8] sm:$0xff]
        %v3172 = vld [vmem:[%s41 + $0xf0] sm:$0xff]
        %v3173 = vld [vmem:[%s41 + $0xf8] sm:$0xff]
        %v3174 = vperm.slane %v3106, 0
        %v3175 = vperm.slane %v3114, 0
        %v3176 = vperm.slane %v3115, 0
        %v3177 = vperm.slane %v3116, 0
        %v3178 = vperm.slane %v3117, 0
        %v3179 = vperm.slane %v3118, 0
        %v3180 = vperm.slane %v3119, 0
        %v3181 = vperm.slane %v3120, 0
        %v3182 = vperm.slane %v3107, 0
        %v3183 = vperm.slane %v3121, 0
        %v3184 = vperm.slane %v3122, 0
        %v3185 = vperm.slane %v3123, 0
        %v3186 = vperm.slane %v3124, 0
        %v3187 = vperm.slane %v3125, 0
        %v3188 = vperm.slane %v3126, 0
        %v3189 = vperm.slane %v3127, 0
        %v3190 = vperm.slane %v3108, 0
        %v3191 = vperm.slane %v3128, 0
        %v3192 = vperm.slane %v3129, 0
        %v3193 = vperm.slane %v3130, 0
        %v3194 = vperm.slane %v3131, 0
        %v3195 = vperm.slane %v3132, 0
        %v3196 = vperm.slane %v3133, 0
        %v3197 = vperm.slane %v3134, 0
        %v3198 = vperm.slane %v3109, 0
        %v3199 = vperm.slane %v3135, 0
        %v3200 = vperm.slane %v3136, 0
        %v3201 = vperm.slane %v3137, 0
        %v3202 = vperm.slane %v3138, 0
        %v3203 = vperm.slane %v3139, 0
        %v3204 = vperm.slane %v3140, 0
        %v3205 = vperm.slane %v3141, 0
        %v3238 = vmul.f32 %v3174, %v3142
        %v3239 = vmul.f32 %v3175, %v3143
        %v3240 = vmul.f32 %v3176, %v3144
        %v3241 = vmul.f32 %v3177, %v3145
        %v3242 = vmul.f32 %v3178, %v3146
        %v3243 = vmul.f32 %v3179, %v3147
        %v3244 = vmul.f32 %v3180, %v3148
        %v3245 = vmul.f32 %v3181, %v3149
        %v3246 = vmul.f32 %v3182, %v3150
        %v3247 = vmul.f32 %v3183, %v3151
        %v3248 = vmul.f32 %v3184, %v3152
        %v3249 = vmul.f32 %v3185, %v3153
        %v3250 = vmul.f32 %v3186, %v3154
        %v3251 = vmul.f32 %v3187, %v3155
        %v3252 = vmul.f32 %v3188, %v3156
        %v3253 = vmul.f32 %v3189, %v3157
        %v3254 = vmul.f32 %v3190, %v3158
        %v3255 = vmul.f32 %v3191, %v3159
        %v3256 = vmul.f32 %v3192, %v3160
        %v3257 = vmul.f32 %v3193, %v3161
        %v3258 = vmul.f32 %v3194, %v3162
        %v3259 = vmul.f32 %v3195, %v3163
        %v3260 = vmul.f32 %v3196, %v3164
        %v3261 = vmul.f32 %v3197, %v3165
        %v3262 = vmul.f32 %v3198, %v3166
        %v3263 = vmul.f32 %v3199, %v3167
        %v3264 = vmul.f32 %v3200, %v3168
        %v3265 = vmul.f32 %v3201, %v3169
        %v3266 = vmul.f32 %v3202, %v3170
        %v3267 = vmul.f32 %v3203, %v3171
        %v3268 = vmul.f32 %v3204, %v3172
        %v3269 = vmul.f32 %v3205, %v3173
        %v3270 = vsel %vm1769, %v3238, 0.0
        %3271 = vadd.xlane.f32.xlu0 %v3270
        %v3272 = vpop.xlane.xlu0 %3271
        %v3273 = vsel %vm1769, %v3239, 0.0
        %3274 = vadd.xlane.f32.xlu0 %v3273
        %v3275 = vpop.xlane.xlu0 %3274
        %v3276 = vsel %vm1769, %v3240, 0.0
        %3277 = vadd.xlane.f32.xlu0 %v3276
        %v3278 = vpop.xlane.xlu0 %3277
        %v3279 = vsel %vm1769, %v3241, 0.0
        %3280 = vadd.xlane.f32.xlu0 %v3279
        %v3281 = vpop.xlane.xlu0 %3280
        %v3282 = vsel %vm1769, %v3242, 0.0
        %3283 = vadd.xlane.f32.xlu0 %v3282
        %v3284 = vpop.xlane.xlu0 %3283
        %v3285 = vsel %vm1769, %v3243, 0.0
        %3286 = vadd.xlane.f32.xlu0 %v3285
        %v3287 = vpop.xlane.xlu0 %3286
        %v3288 = vsel %vm1769, %v3244, 0.0
        %3289 = vadd.xlane.f32.xlu0 %v3288
        %v3290 = vpop.xlane.xlu0 %3289
        %v3291 = vsel %vm1769, %v3245, 0.0
        %3292 = vadd.xlane.f32.xlu0 %v3291
        %v3293 = vpop.xlane.xlu0 %3292
        %v3294 = vsel %vm1769, %v3246, 0.0
        %3295 = vadd.xlane.f32.xlu0 %v3294
        %v3296 = vpop.xlane.xlu0 %3295
        %v3297 = vsel %vm1769, %v3247, 0.0
        %3298 = vadd.xlane.f32.xlu0 %v3297
        %v3299 = vpop.xlane.xlu0 %3298
        %v3300 = vsel %vm1769, %v3248, 0.0
        %3301 = vadd.xlane.f32.xlu0 %v3300
        %v3302 = vpop.xlane.xlu0 %3301
        %v3303 = vsel %vm1769, %v3249, 0.0
        %3304 = vadd.xlane.f32.xlu0 %v3303
        %v3305 = vpop.xlane.xlu0 %3304
        %v3306 = vsel %vm1769, %v3250, 0.0
        %3307 = vadd.xlane.f32.xlu0 %v3306
        %v3308 = vpop.xlane.xlu0 %3307
        %v3309 = vsel %vm1769, %v3251, 0.0
        %3310 = vadd.xlane.f32.xlu0 %v3309
        %v3311 = vpop.xlane.xlu0 %3310
        %v3312 = vsel %vm1769, %v3252, 0.0
        %3313 = vadd.xlane.f32.xlu0 %v3312
        %v3314 = vpop.xlane.xlu0 %3313
        %v3315 = vsel %vm1769, %v3253, 0.0
        %3316 = vadd.xlane.f32.xlu0 %v3315
        %v3317 = vpop.xlane.xlu0 %3316
        %v3318 = vsel %vm1769, %v3254, 0.0
        %3319 = vadd.xlane.f32.xlu0 %v3318
        %v3320 = vpop.xlane.xlu0 %3319
        %v3321 = vsel %vm1769, %v3255, 0.0
        %3322 = vadd.xlane.f32.xlu0 %v3321
        %v3323 = vpop.xlane.xlu0 %3322
        %v3324 = vsel %vm1769, %v3256, 0.0
        %3325 = vadd.xlane.f32.xlu0 %v3324
        %v3326 = vpop.xlane.xlu0 %3325
        %v3327 = vsel %vm1769, %v3257, 0.0
        %3328 = vadd.xlane.f32.xlu0 %v3327
        %v3329 = vpop.xlane.xlu0 %3328
        %v3330 = vsel %vm1769, %v3258, 0.0
        %3331 = vadd.xlane.f32.xlu0 %v3330
        %v3332 = vpop.xlane.xlu0 %3331
        %v3333 = vsel %vm1769, %v3259, 0.0
        %3334 = vadd.xlane.f32.xlu0 %v3333
        %v3335 = vpop.xlane.xlu0 %3334
        %v3336 = vsel %vm1769, %v3260, 0.0
        %3337 = vadd.xlane.f32.xlu0 %v3336
        %v3338 = vpop.xlane.xlu0 %3337
        %v3339 = vsel %vm1769, %v3261, 0.0
        %3340 = vadd.xlane.f32.xlu0 %v3339
        %v3341 = vpop.xlane.xlu0 %3340
        %v3342 = vsel %vm1769, %v3262, 0.0
        %3343 = vadd.xlane.f32.xlu0 %v3342
        %v3344 = vpop.xlane.xlu0 %3343
        %v3345 = vsel %vm1769, %v3263, 0.0
        %3346 = vadd.xlane.f32.xlu0 %v3345
        %v3347 = vpop.xlane.xlu0 %3346
        %v3348 = vsel %vm1769, %v3264, 0.0
        %3349 = vadd.xlane.f32.xlu0 %v3348
        %v3350 = vpop.xlane.xlu0 %3349
        %v3351 = vsel %vm1769, %v3265, 0.0
        %3352 = vadd.xlane.f32.xlu0 %v3351
        %v3353 = vpop.xlane.xlu0 %3352
        %v3354 = vsel %vm1769, %v3266, 0.0
        %3355 = vadd.xlane.f32.xlu0 %v3354
        %v3356 = vpop.xlane.xlu0 %3355
        %v3357 = vsel %vm1769, %v3267, 0.0
        %3358 = vadd.xlane.f32.xlu0 %v3357
        %v3359 = vpop.xlane.xlu0 %3358
        %v3360 = vsel %vm1769, %v3268, 0.0
        %3361 = vadd.xlane.f32.xlu0 %v3360
        %v3362 = vpop.xlane.xlu0 %3361
        %v3363 = vsel %vm1769, %v3269, 0.0
        %3364 = vadd.xlane.f32.xlu0 %v3363
        %v3365 = vpop.xlane.xlu0 %3364
        %v3374 = vperm.slane %v3272, %v1875
        %v3375 = vperm.slane %v3275, %v1875
        %v3376 = vperm.slane %v3278, %v1875
        %v3377 = vperm.slane %v3281, %v1875
        %v3378 = vperm.slane %v3284, %v1875
        %v3379 = vperm.slane %v3287, %v1875
        %v3380 = vperm.slane %v3290, %v1875
        %v3381 = vperm.slane %v3293, %v1875
        %v3382 = vsel %vm1884, %v3375, %v3374
        %v3383 = vsel %vm1886, %v3376, %v3382
        %v3384 = vsel %vm1888, %v3377, %v3383
        %v3385 = vsel %vm1890, %v3378, %v3384
        %v3386 = vsel %vm1892, %v3379, %v3385
        %v3387 = vsel %vm1894, %v3380, %v3386
        %v3388 = vsel %vm1896, %v3381, %v3387
        %v3391 = vsel %vm1769, %v3086, 0
        %v3394 = vsel %vm1769, %v2928, 0
        %3396 = vmatpush.xpose.msra.mxu0 0.0
        %3397 = vmatpush.xpose.msra.mxu0 0.0
        %3398 = vmatpush.xpose.msra.mxu0 0.0
        %3399 = vmatpush.xpose.msra.mxu0 0.0
        %3400 = vmatpush.xpose.msra.mxu0 0.0
        %3401 = vmatpush.xpose.msra.mxu0 0.0
        %3402 = vmatpush.xpose.msra.mxu0 0.0
        %3403 = vmatpush.xpose.msra.mxu0 0.0
        %3404 = vmatpush.xpose.msra.mxu0 0.0
        %3405 = vmatpush.xpose.msra.mxu0 0.0
        %3406 = vmatpush.xpose.msra.mxu0 0.0
        %3407 = vmatpush.xpose.msra.mxu0 0.0
        %3408 = vmatpush.xpose.msra.mxu0 0.0
        %3409 = vmatpush.xpose.msra.mxu0 0.0
        %3410 = vmatpush.xpose.msra.mxu0 0.0
        %3411 = vmatpush.xpose.msra.mxu0 %v3394
        %3412 = vmatmul.f32.gmra.mxu0 %v3391
        %v3413 = vpop.f32.mrf.mxu0
        %v3414 = vadd.f32 %v3388, %v3413
        %3415 = vdwg.mxu0
        %v3424 = vperm.slane %v3296, %v1875
        %v3425 = vperm.slane %v3299, %v1875
        %v3426 = vperm.slane %v3302, %v1875
        %v3427 = vperm.slane %v3305, %v1875
        %v3428 = vperm.slane %v3308, %v1875
        %v3429 = vperm.slane %v3311, %v1875
        %v3430 = vperm.slane %v3314, %v1875
        %v3431 = vperm.slane %v3317, %v1875
        %v3432 = vsel %vm1884, %v3425, %v3424
        %v3433 = vsel %vm1886, %v3426, %v3432
        %v3434 = vsel %vm1888, %v3427, %v3433
        %v3435 = vsel %vm1890, %v3428, %v3434
        %v3436 = vsel %vm1892, %v3429, %v3435
        %v3437 = vsel %vm1894, %v3430, %v3436
        %v3438 = vsel %vm1896, %v3431, %v3437
        %v3441 = vsel %vm1769, %v3087, 0
        %v3444 = vsel %vm1769, %v2948, 0
        %3446 = vmatpush.xpose.msra.mxu0 0.0
        %3447 = vmatpush.xpose.msra.mxu0 0.0
        %3448 = vmatpush.xpose.msra.mxu0 0.0
        %3449 = vmatpush.xpose.msra.mxu0 0.0
        %3450 = vmatpush.xpose.msra.mxu0 0.0
        %3451 = vmatpush.xpose.msra.mxu0 0.0
        %3452 = vmatpush.xpose.msra.mxu0 0.0
        %3453 = vmatpush.xpose.msra.mxu0 0.0
        %3454 = vmatpush.xpose.msra.mxu0 0.0
        %3455 = vmatpush.xpose.msra.mxu0 0.0
        %3456 = vmatpush.xpose.msra.mxu0 0.0
        %3457 = vmatpush.xpose.msra.mxu0 0.0
        %3458 = vmatpush.xpose.msra.mxu0 0.0
        %3459 = vmatpush.xpose.msra.mxu0 0.0
        %3460 = vmatpush.xpose.msra.mxu0 0.0
        %3461 = vmatpush.xpose.msra.mxu0 %v3444
        %3462 = vmatmul.f32.gmra.mxu0 %v3441
        %v3463 = vpop.f32.mrf.mxu0
        %v3464 = vadd.f32 %v3438, %v3463
        %3465 = vdwg.mxu0
        %v3474 = vperm.slane %v3320, %v1875
        %v3475 = vperm.slane %v3323, %v1875
        %v3476 = vperm.slane %v3326, %v1875
        %v3477 = vperm.slane %v3329, %v1875
        %v3478 = vperm.slane %v3332, %v1875
        %v3479 = vperm.slane %v3335, %v1875
        %v3480 = vperm.slane %v3338, %v1875
        %v3481 = vperm.slane %v3341, %v1875
        %v3482 = vsel %vm1884, %v3475, %v3474
        %v3483 = vsel %vm1886, %v3476, %v3482
        %v3484 = vsel %vm1888, %v3477, %v3483
        %v3485 = vsel %vm1890, %v3478, %v3484
        %v3486 = vsel %vm1892, %v3479, %v3485
        %v3487 = vsel %vm1894, %v3480, %v3486
        %v3488 = vsel %vm1896, %v3481, %v3487
        %v3491 = vsel %vm1769, %v3088, 0
        %v3494 = vsel %vm1769, %v2968, 0
        %3496 = vmatpush.xpose.msra.mxu0 0.0
        %3497 = vmatpush.xpose.msra.mxu0 0.0
        %3498 = vmatpush.xpose.msra.mxu0 0.0
        %3499 = vmatpush.xpose.msra.mxu0 0.0
        %3500 = vmatpush.xpose.msra.mxu0 0.0
        %3501 = vmatpush.xpose.msra.mxu0 0.0
        %3502 = vmatpush.xpose.msra.mxu0 0.0
        %3503 = vmatpush.xpose.msra.mxu0 0.0
        %3504 = vmatpush.xpose.msra.mxu0 0.0
        %3505 = vmatpush.xpose.msra.mxu0 0.0
        %3506 = vmatpush.xpose.msra.mxu0 0.0
        %3507 = vmatpush.xpose.msra.mxu0 0.0
        %3508 = vmatpush.xpose.msra.mxu0 0.0
        %3509 = vmatpush.xpose.msra.mxu0 0.0
        %3510 = vmatpush.xpose.msra.mxu0 0.0
        %3511 = vmatpush.xpose.msra.mxu0 %v3494
        %3512 = vmatmul.f32.gmra.mxu0 %v3491
        %v3513 = vpop.f32.mrf.mxu0
        %v3514 = vadd.f32 %v3488, %v3513
        %3515 = vdwg.mxu0
        %v3524 = vperm.slane %v3344, %v1875
        %v3525 = vperm.slane %v3347, %v1875
        %v3526 = vperm.slane %v3350, %v1875
        %v3527 = vperm.slane %v3353, %v1875
        %v3528 = vperm.slane %v3356, %v1875
        %v3529 = vperm.slane %v3359, %v1875
        %v3530 = vperm.slane %v3362, %v1875
        %v3531 = vperm.slane %v3365, %v1875
        %v3532 = vsel %vm1884, %v3525, %v3524
        %v3533 = vsel %vm1886, %v3526, %v3532
        %v3534 = vsel %vm1888, %v3527, %v3533
        %v3535 = vsel %vm1890, %v3528, %v3534
        %v3536 = vsel %vm1892, %v3529, %v3535
        %v3537 = vsel %vm1894, %v3530, %v3536
        %v3538 = vsel %vm1896, %v3531, %v3537
        %v3541 = vsel %vm1769, %v3089, 0
        %v3544 = vsel %vm1769, %v2988, 0
        %3546 = vmatpush.xpose.msra.mxu0 0.0
        %3547 = vmatpush.xpose.msra.mxu0 0.0
        %3548 = vmatpush.xpose.msra.mxu0 0.0
        %3549 = vmatpush.xpose.msra.mxu0 0.0
        %3550 = vmatpush.xpose.msra.mxu0 0.0
        %3551 = vmatpush.xpose.msra.mxu0 0.0
        %3552 = vmatpush.xpose.msra.mxu0 0.0
        %3553 = vmatpush.xpose.msra.mxu0 0.0
        %3554 = vmatpush.xpose.msra.mxu0 0.0
        %3555 = vmatpush.xpose.msra.mxu0 0.0
        %3556 = vmatpush.xpose.msra.mxu0 0.0
        %3557 = vmatpush.xpose.msra.mxu0 0.0
        %3558 = vmatpush.xpose.msra.mxu0 0.0
        %3559 = vmatpush.xpose.msra.mxu0 0.0
        %3560 = vmatpush.xpose.msra.mxu0 0.0
        %3561 = vmatpush.xpose.msra.mxu0 %v3544
        %3562 = vmatmul.f32.gmra.mxu0 %v3541
        %v3563 = vpop.f32.mrf.mxu0
        %v3564 = vadd.f32 %v3538, %v3563
        %3565 = vdwg.mxu0
        %v3566 = vadd.f32 %v3414, %v1136
        %v3567 = vadd.f32 %v3464, %v1136
        %v3568 = vadd.f32 %v3514, %v1136
        %v3569 = vadd.f32 %v3564, %v1136
        %v3570 = vsel %vm2079, %v3566, -inf
        %3571 = vmax.xlane.f32.xlu0 %v3570
        %v3572 = vpop.xlane.xlu0 %3571
        %v3573 = vsel %vm2079, %v3567, -inf
        %3574 = vmax.xlane.f32.xlu0 %v3573
        %v3575 = vpop.xlane.xlu0 %3574
        %v3576 = vsel %vm2079, %v3568, -inf
        %3577 = vmax.xlane.f32.xlu0 %v3576
        %v3578 = vpop.xlane.xlu0 %3577
        %v3579 = vsel %vm2079, %v3569, -inf
        %3580 = vmax.xlane.f32.xlu0 %v3579
        %v3581 = vpop.xlane.xlu0 %3580
        %v3582 = vsub.f32 %v3566, %v3572
        %v3583 = vsub.f32 %v3567, %v3575
        %v3584 = vsub.f32 %v3568, %v3578
        %v3585 = vsub.f32 %v3569, %v3581
        %v3586 = vmul.f32 %v3582, 1.442695
        %v3587 = vpow.pop %v3586
        %v3588 = vmul.f32 %v3583, 1.442695
        %v3589 = vpow.pop %v3588
        %v3590 = vmul.f32 %v3584, 1.442695
        %v3591 = vpow.pop %v3590
        %v3592 = vmul.f32 %v3585, 1.442695
        %v3593 = vpow.pop %v3592
        %v3594 = vsel %vm2079, %v3587, 0.0
        %3595 = vadd.xlane.f32.xlu0 %v3594
        %v3596 = vpop.xlane.xlu0 %3595
        %v3597 = vsel %vm2079, %v3589, 0.0
        %3598 = vadd.xlane.f32.xlu0 %v3597
        %v3599 = vpop.xlane.xlu0 %3598
        %v3600 = vsel %vm2079, %v3591, 0.0
        %3601 = vadd.xlane.f32.xlu0 %v3600
        %v3602 = vpop.xlane.xlu0 %3601
        %v3603 = vsel %vm2079, %v3593, 0.0
        %3604 = vadd.xlane.f32.xlu0 %v3603
        %v3605 = vpop.xlane.xlu0 %3604
        %v3606 = vrcp.pop %v3596
        %v3607 = vrcp.pop %v3599
        %v3608 = vrcp.pop %v3602
        %v3609 = vrcp.pop %v3605
        %v3610 = vmul.f32 %v3587, %v3606
        %v3611 = vmul.f32 %v3589, %v3607
        %v3612 = vmul.f32 %v3591, %v3608
        %v3613 = vmul.f32 %v3593, %v3609
        %v3615 = vsel %vm2079, %v3610, 0
        %3617 = vmatpush.msra.mxu0 0.0
        %3618 = vmatpush.msra.mxu0 0.0
        %3619 = vmatpush.msra.mxu0 0.0
        %3620 = vmatpush.msra.mxu0 0.0
        %3621 = vmatpush.msra.mxu0 0.0
        %3622 = vmatpush.msra.mxu0 0.0
        %3623 = vmatpush.msra.mxu0 0.0
        %3624 = vmatpush.msra.mxu0 0.0
        %3625 = vmatpush.msra.mxu0 0.0
        %3626 = vmatpush.msra.mxu0 0.0
        %3627 = vmatpush.msra.mxu0 0.0
        %3628 = vmatpush.msra.mxu0 0.0
        %3629 = vmatpush.msra.mxu0 0.0
        %3630 = vmatpush.msra.mxu0 0.0
        %3631 = vmatpush.msra.mxu0 0.0
        %3632 = vmatpush.msra.mxu0 %v3008
        %3633 = vmatmul.f32.gmra.mxu0 %v3615
        %v3634 = vpop.f32.mrf.mxu0
        %v3635 = vadd.f32 0.0, %v3634
        %3636 = vdwg.mxu0
        %v3638 = vsel %vm2079, %v3611, 0
        %3640 = vmatpush.msra.mxu0 0.0
        %3641 = vmatpush.msra.mxu0 0.0
        %3642 = vmatpush.msra.mxu0 0.0
        %3643 = vmatpush.msra.mxu0 0.0
        %3644 = vmatpush.msra.mxu0 0.0
        %3645 = vmatpush.msra.mxu0 0.0
        %3646 = vmatpush.msra.mxu0 0.0
        %3647 = vmatpush.msra.mxu0 0.0
        %3648 = vmatpush.msra.mxu0 0.0
        %3649 = vmatpush.msra.mxu0 0.0
        %3650 = vmatpush.msra.mxu0 0.0
        %3651 = vmatpush.msra.mxu0 0.0
        %3652 = vmatpush.msra.mxu0 0.0
        %3653 = vmatpush.msra.mxu0 0.0
        %3654 = vmatpush.msra.mxu0 0.0
        %3655 = vmatpush.msra.mxu0 %v3028
        %3656 = vmatmul.f32.gmra.mxu0 %v3638
        %v3657 = vpop.f32.mrf.mxu0
        %v3658 = vadd.f32 0.0, %v3657
        %3659 = vdwg.mxu0
        %v3661 = vsel %vm2079, %v3612, 0
        %3663 = vmatpush.msra.mxu0 0.0
        %3664 = vmatpush.msra.mxu0 0.0
        %3665 = vmatpush.msra.mxu0 0.0
        %3666 = vmatpush.msra.mxu0 0.0
        %3667 = vmatpush.msra.mxu0 0.0
        %3668 = vmatpush.msra.mxu0 0.0
        %3669 = vmatpush.msra.mxu0 0.0
        %3670 = vmatpush.msra.mxu0 0.0
        %3671 = vmatpush.msra.mxu0 0.0
        %3672 = vmatpush.msra.mxu0 0.0
        %3673 = vmatpush.msra.mxu0 0.0
        %3674 = vmatpush.msra.mxu0 0.0
        %3675 = vmatpush.msra.mxu0 0.0
        %3676 = vmatpush.msra.mxu0 0.0
        %3677 = vmatpush.msra.mxu0 0.0
        %3678 = vmatpush.msra.mxu0 %v3048
        %3679 = vmatmul.f32.gmra.mxu0 %v3661
        %v3680 = vpop.f32.mrf.mxu0
        %v3681 = vadd.f32 0.0, %v3680
        %3682 = vdwg.mxu0
        %v3684 = vsel %vm2079, %v3613, 0
        %3686 = vmatpush.msra.mxu0 0.0
        %3687 = vmatpush.msra.mxu0 0.0
        %3688 = vmatpush.msra.mxu0 0.0
        %3689 = vmatpush.msra.mxu0 0.0
        %3690 = vmatpush.msra.mxu0 0.0
        %3691 = vmatpush.msra.mxu0 0.0
        %3692 = vmatpush.msra.mxu0 0.0
        %3693 = vmatpush.msra.mxu0 0.0
        %3694 = vmatpush.msra.mxu0 0.0
        %3695 = vmatpush.msra.mxu0 0.0
        %3696 = vmatpush.msra.mxu0 0.0
        %3697 = vmatpush.msra.mxu0 0.0
        %3698 = vmatpush.msra.mxu0 0.0
        %3699 = vmatpush.msra.mxu0 0.0
        %3700 = vmatpush.msra.mxu0 0.0
        %3701 = vmatpush.msra.mxu0 %v3068
        %3702 = vmatmul.f32.gmra.mxu0 %v3684
        %v3703 = vpop.f32.mrf.mxu0
        %v3704 = vadd.f32 0.0, %v3703
        %3705 = vdwg.mxu0
        %v3706 = vld [vmem:[%s43] sm:$0xff]
        %v3707 = vld [vmem:[%s43 + $0x8] sm:$0xff]
        %v3708 = vld [vmem:[%s43 + $0x10] sm:$0xff]
        %v3709 = vld [vmem:[%s43 + $0x18] sm:$0xff]
        %v3710 = vld [vmem:[%s43 + $0x20] sm:$0xff]
        %v3711 = vld [vmem:[%s43 + $0x28] sm:$0xff]
        %v3712 = vld [vmem:[%s43 + $0x30] sm:$0xff]
        %v3713 = vld [vmem:[%s43 + $0x38] sm:$0xff]
        %v3714 = vld [vmem:[%s43 + $0x40] sm:$0xff]
        %v3715 = vld [vmem:[%s43 + $0x48] sm:$0xff]
        %v3716 = vld [vmem:[%s43 + $0x50] sm:$0xff]
        %v3717 = vld [vmem:[%s43 + $0x58] sm:$0xff]
        %v3718 = vld [vmem:[%s43 + $0x60] sm:$0xff]
        %v3719 = vld [vmem:[%s43 + $0x68] sm:$0xff]
        %v3720 = vld [vmem:[%s43 + $0x70] sm:$0xff]
        %v3721 = vld [vmem:[%s43 + $0x78] sm:$0xff]
        %v3723 = vsel %vm1769, %v3635, 0
        %3725 = vmatpush.msra.mxu0 0.0
        %3726 = vmatpush.msra.mxu0 0.0
        %3727 = vmatpush.msra.mxu0 0.0
        %3728 = vmatpush.msra.mxu0 0.0
        %3729 = vmatpush.msra.mxu0 0.0
        %3730 = vmatpush.msra.mxu0 0.0
        %3731 = vmatpush.msra.mxu0 0.0
        %3732 = vmatpush.msra.mxu0 0.0
        %3733 = vmatpush.msra.mxu0 0.0
        %3734 = vmatpush.msra.mxu0 0.0
        %3735 = vmatpush.msra.mxu0 0.0
        %3736 = vmatpush.msra.mxu0 0.0
        %3737 = vmatpush.msra.mxu0 %v3709
        %3738 = vmatpush.msra.mxu0 %v3708
        %3739 = vmatpush.msra.mxu0 %v3707
        %3740 = vmatpush.msra.mxu0 %v3706
        %3741 = vmatmul.f32.gmra.mxu0 %v3723
        %v3742 = vpop.f32.mrf.mxu0
        %v3743 = vadd.f32 0.0, %v3742
        %3744 = vdwg.mxu0
        %v3746 = vsel %vm1769, %v3658, 0
        %3748 = vmatpush.msra.mxu0 0.0
        %3749 = vmatpush.msra.mxu0 0.0
        %3750 = vmatpush.msra.mxu0 0.0
        %3751 = vmatpush.msra.mxu0 0.0
        %3752 = vmatpush.msra.mxu0 0.0
        %3753 = vmatpush.msra.mxu0 0.0
        %3754 = vmatpush.msra.mxu0 0.0
        %3755 = vmatpush.msra.mxu0 0.0
        %3756 = vmatpush.msra.mxu0 0.0
        %3757 = vmatpush.msra.mxu0 0.0
        %3758 = vmatpush.msra.mxu0 0.0
        %3759 = vmatpush.msra.mxu0 0.0
        %3760 = vmatpush.msra.mxu0 %v3713
        %3761 = vmatpush.msra.mxu0 %v3712
        %3762 = vmatpush.msra.mxu0 %v3711
        %3763 = vmatpush.msra.mxu0 %v3710
        %3764 = vmatmul.f32.gmra.mxu0 %v3746
        %v3765 = vpop.f32.mrf.mxu0
        %v3766 = vadd.f32 0.0, %v3765
        %3767 = vdwg.mxu0
        %v3769 = vsel %vm1769, %v3681, 0
        %3771 = vmatpush.msra.mxu0 0.0
        %3772 = vmatpush.msra.mxu0 0.0
        %3773 = vmatpush.msra.mxu0 0.0
        %3774 = vmatpush.msra.mxu0 0.0
        %3775 = vmatpush.msra.mxu0 0.0
        %3776 = vmatpush.msra.mxu0 0.0
        %3777 = vmatpush.msra.mxu0 0.0
        %3778 = vmatpush.msra.mxu0 0.0
        %3779 = vmatpush.msra.mxu0 0.0
        %3780 = vmatpush.msra.mxu0 0.0
        %3781 = vmatpush.msra.mxu0 0.0
        %3782 = vmatpush.msra.mxu0 0.0
        %3783 = vmatpush.msra.mxu0 %v3717
        %3784 = vmatpush.msra.mxu0 %v3716
        %3785 = vmatpush.msra.mxu0 %v3715
        %3786 = vmatpush.msra.mxu0 %v3714
        %3787 = vmatmul.f32.gmra.mxu0 %v3769
        %v3788 = vpop.f32.mrf.mxu0
        %v3789 = vadd.f32 0.0, %v3788
        %3790 = vdwg.mxu0
        %v3792 = vsel %vm1769, %v3704, 0
        %3794 = vmatpush.msra.mxu0 0.0
        %3795 = vmatpush.msra.mxu0 0.0
        %3796 = vmatpush.msra.mxu0 0.0
        %3797 = vmatpush.msra.mxu0 0.0
        %3798 = vmatpush.msra.mxu0 0.0
        %3799 = vmatpush.msra.mxu0 0.0
        %3800 = vmatpush.msra.mxu0 0.0
        %3801 = vmatpush.msra.mxu0 0.0
        %3802 = vmatpush.msra.mxu0 0.0
        %3803 = vmatpush.msra.mxu0 0.0
        %3804 = vmatpush.msra.mxu0 0.0
        %3805 = vmatpush.msra.mxu0 0.0
        %3806 = vmatpush.msra.mxu0 %v3721
        %3807 = vmatpush.msra.mxu0 %v3720
        %3808 = vmatpush.msra.mxu0 %v3719
        %3809 = vmatpush.msra.mxu0 %v3718
        %3810 = vmatmul.f32.gmra.mxu0 %v3792
        %v3811 = vpop.f32.mrf.mxu0
        %v3812 = vadd.f32 0.0, %v3811
        %3813 = vdwg.mxu0
        %v3814 = vadd.f32 %v3743, %v3766
        %v3815 = vadd.f32 %v3814, %v3789
        %v3816 = vadd.f32 %v3815, %v3812
        %v3817 = vadd.f32 %v3816, %v2637
        %v3818 = vld [vmem:[%s45] sm:$0x1]
        %v3819 = vld [vmem:[%s47] sm:$0x1]
        %3820 = vadd.xlane.f32.xlu0 %v3817
        %v3821 = vpop.xlane.xlu0 %3820
        %v3822 = vmul.f32 %v3821, %v2338
        %v3823 = vsub.f32 %v3817, %v3822
        %v3824 = vmul.f32 %v3823, %v3823
        %3825 = vadd.xlane.f32.xlu0 %v3824
        %v3826 = vpop.xlane.xlu0 %3825
        %v3827 = vmul.f32 %v3826, %v2338
        %v3828 = vadd.f32 %v3827, 1e-12
        %v3829 = vrsqrt.pop %v3828
        %v3830 = vmul.f32 %v3829, %v3828
        %v3831 = vmul.f32 %v3830, %v3829
        %v3832 = vmul.f32 0.5, %v3831
        %v3833 = vsub.f32 1.5, %v3832
        %v3834 = vmul.f32 %v3829, %v3833
        %vm3835 = vweird.f32 %v3828
        %vm3836 = vweird.f32 %v3829
        %vm3837 = vmor %vm3835, %vm3836
        %v3838 = vsel %vm3837, %v3829, %v3834
        %v3839 = vmul.f32 %v3823, %v3838
        %v3841 = vperm.slane %v3818, 0
        %v3843 = vmul.f32 %v3839, %v3841
        %v3845 = vperm.slane %v3819, 0
        %v3847 = vadd.f32 %v3843, %v3845
        %v3848 = vld [vmem:[%s49] sm:$0xff]
        %v3849 = vld [vmem:[%s49 + $0x8] sm:$0xff]
        %v3850 = vld [vmem:[%s49 + $0x10] sm:$0xff]
        %v3851 = vld [vmem:[%s49 + $0x18] sm:$0xff]
        %v3852 = vld [vmem:[%s49 + $0x20] sm:$0xff]
        %v3853 = vld [vmem:[%s49 + $0x28] sm:$0xff]
        %v3854 = vld [vmem:[%s49 + $0x30] sm:$0xff]
        %v3855 = vld [vmem:[%s49 + $0x38] sm:$0xff]
        %v3856 = vld [vmem:[%s49 + $0x40] sm:$0xff]
        %v3857 = vld [vmem:[%s49 + $0x48] sm:$0xff]
        %v3858 = vld [vmem:[%s49 + $0x50] sm:$0xff]
        %v3859 = vld [vmem:[%s49 + $0x58] sm:$0xff]
        %v3860 = vld [vmem:[%s49 + $0x60] sm:$0xff]
        %v3861 = vld [vmem:[%s49 + $0x68] sm:$0xff]
        %v3862 = vld [vmem:[%s49 + $0x70] sm:$0xff]
        %v3863 = vld [vmem:[%s49 + $0x78] sm:$0xff]
        %v3864 = vld [vmem:[%s49 + $0x80] sm:$0xff]
        %v3865 = vld [vmem:[%s49 + $0x88] sm:$0xff]
        %v3866 = vld [vmem:[%s49 + $0x90] sm:$0xff]
        %v3867 = vld [vmem:[%s49 + $0x98] sm:$0xff]
        %v3868 = vld [vmem:[%s49 + $0xa0] sm:$0xff]
        %v3869 = vld [vmem:[%s49 + $0xa8] sm:$0xff]
        %v3870 = vld [vmem:[%s49 + $0xb0] sm:$0xff]
        %v3871 = vld [vmem:[%s49 + $0xb8] sm:$0xff]
        %v3872 = vld [vmem:[%s49 + $0xc0] sm:$0xff]
        %v3873 = vld [vmem:[%s49 + $0xc8] sm:$0xff]
        %v3874 = vld [vmem:[%s49 + $0xd0] sm:$0xff]
        %v3875 = vld [vmem:[%s49 + $0xd8] sm:$0xff]
        %v3876 = vld [vmem:[%s49 + $0xe0] sm:$0xff]
        %v3877 = vld [vmem:[%s49 + $0xe8] sm:$0xff]
        %v3878 = vld [vmem:[%s49 + $0xf0] sm:$0xff]
        %v3879 = vld [vmem:[%s49 + $0xf8] sm:$0xff]
        %v3880 = vld [vmem:[%s51] sm:$0x3]
        %v3882 = vperm.slane %v3880, 0
        %v3883 = vperm.slane %v3880, 1
        %3886 = vmatpush.msra.mxu0 %v3878
        %3887 = vmatpush.msra.mxu0 %v3876
        %3888 = vmatpush.msra.mxu0 %v3874
        %3889 = vmatpush.msra.mxu0 %v3872
        %3890 = vmatpush.msra.mxu0 %v3870
        %3891 = vmatpush.msra.mxu0 %v3868
        %3892 = vmatpush.msra.mxu0 %v3866
        %3893 = vmatpush.msra.mxu0 %v3864
        %3894 = vmatpush.msra.mxu0 %v3862
        %3895 = vmatpush.msra.mxu0 %v3860
        %3896 = vmatpush.msra.mxu0 %v3858
        %3897 = vmatpush.msra.mxu0 %v3856
        %3898 = vmatpush.msra.mxu0 %v3854
        %3899 = vmatpush.msra.mxu0 %v3852
        %3900 = vmatpush.msra.mxu0 %v3850
        %3901 = vmatpush.msra.mxu0 %v3848
        %3902 = vmatmul.f32.gmra.mxu0 %v3847
        %v3903 = vpop.f32.mrf.mxu0
        %v3904 = vadd.f32 %v3882, %v3903
        %3905 = vdwg.mxu0
        %3906 = vmatpush.msra.mxu0 %v3879
        %3907 = vmatpush.msra.mxu0 %v3877
        %3908 = vmatpush.msra.mxu0 %v3875
        %3909 = vmatpush.msra.mxu0 %v3873
        %3910 = vmatpush.msra.mxu0 %v3871
        %3911 = vmatpush.msra.mxu0 %v3869
        %3912 = vmatpush.msra.mxu0 %v3867
        %3913 = vmatpush.msra.mxu0 %v3865
        %3914 = vmatpush.msra.mxu0 %v3863
        %3915 = vmatpush.msra.mxu0 %v3861
        %3916 = vmatpush.msra.mxu0 %v3859
        %3917 = vmatpush.msra.mxu0 %v3857
        %3918 = vmatpush.msra.mxu0 %v3855
        %3919 = vmatpush.msra.mxu0 %v3853
        %3920 = vmatpush.msra.mxu0 %v3851
        %3921 = vmatpush.msra.mxu0 %v3849
        %3922 = vmatmul.f32.gmra.mxu0 %v3847
        %v3923 = vpop.f32.mrf.mxu0
        %v3924 = vadd.f32 %v3883, %v3923
        %3925 = vdwg.mxu0
        %v3926 = vmul.f32 %v3904, 0.5
        %v3927 = vmul.f32 %v3924, 0.5
        %v3928 = vmul.f32 %v3904, 0.70710677
        %v3929 = vmul.f32 %v3924, 0.70710677
        %v3930 = vmul.f32 %v3928, %v3928
        %v3931 = vmin.f32 16.0, %v3930
        %v3932 = vmul.f32 %v3931, 2.1237322e-06
        %v3933 = vadd.f32 %v3932, 0.00028619796
        %v3934 = vmul.f32 %v3931, %v3933
        %v3935 = vadd.f32 %v3934, 0.0036580483
        %v3936 = vmul.f32 %v3931, %v3935
        %v3937 = vadd.f32 %v3936, 0.05243302
        %v3938 = vmul.f32 %v3931, %v3937
        %v3939 = vadd.f32 %v3938, 0.18741608
        %v3940 = vmul.f32 %v3931, %v3939
        %v3941 = vadd.f32 %v3940, 1.1283791
        %v3942 = vmul.f32 %v3928, %v3941
        %v3943 = vmul.f32 %v3931, 3.8918573e-05
        %v3944 = vadd.f32 %v3943, 0.001143296
        %v3945 = vmul.f32 %v3931, %v3944
        %v3946 = vadd.f32 %v3945, 0.014752088
        %v3947 = vmul.f32 %v3931, %v3946
        %v3948 = vadd.f32 %v3947, 0.112945676
        %v3949 = vmul.f32 %v3931, %v3948
        %v3950 = vadd.f32 %v3949, 0.4994258
        %v3951 = vmul.f32 %v3931, %v3950
        %v3952 = vadd.f32 %v3951, 1.0
        %v3953 = vrcp.pop %v3952
        %v3954 = vmul.f32 %v3952, %v3953
        %v3955 = vsub.f32 1.0, %v3954
        %v3956 = vmul.f32 %v3953, %v3955
        %v3957 = vadd.f32 %v3953, %v3956
        %vm3958 = vweird.f32 %v3952
        %vm3959 = vweird.f32 %v3953
        %vm3960 = vmor %vm3958, %vm3959
        %v3961 = vsel %vm3960, %v3953, %v3957
        %v3962 = vand.u32 2147483647, %v3952
        %vm3963 = vcmp.eq.f32.partialorder %v3962, 8.507059e+37
        %v3964 = vand.u32 %v3952, 2147483648
        %v3965 = vor.u32 1.1754944e-38, %v3964
        %v3966 = vsel %vm3963, %v3965, %v3961
        %v3967 = vmul.f32 %v3942, %v3966
        %v3968 = vmin.f32 %v3967, 1.0
        %v3969 = vmax.f32 %v3968, -1.0
        %v3970 = vmul.f32 %v3929, %v3929
        %v3971 = vmin.f32 16.0, %v3970
        %v3972 = vmul.f32 %v3971, 2.1237322e-06
        %v3973 = vadd.f32 %v3972, 0.00028619796
        %v3974 = vmul.f32 %v3971, %v3973
        %v3975 = vadd.f32 %v3974, 0.0036580483
        %v3976 = vmul.f32 %v3971, %v3975
        %v3977 = vadd.f32 %v3976, 0.05243302
        %v3978 = vmul.f32 %v3971, %v3977
        %v3979 = vadd.f32 %v3978, 0.18741608
        %v3980 = vmul.f32 %v3971, %v3979
        %v3981 = vadd.f32 %v3980, 1.1283791
        %v3982 = vmul.f32 %v3929, %v3981
        %v3983 = vmul.f32 %v3971, 3.8918573e-05
        %v3984 = vadd.f32 %v3983, 0.001143296
        %v3985 = vmul.f32 %v3971, %v3984
        %v3986 = vadd.f32 %v3985, 0.014752088
        %v3987 = vmul.f32 %v3971, %v3986
        %v3988 = vadd.f32 %v3987, 0.112945676
        %v3989 = vmul.f32 %v3971, %v3988
        %v3990 = vadd.f32 %v3989, 0.4994258
        %v3991 = vmul.f32 %v3971, %v3990
        %v3992 = vadd.f32 %v3991, 1.0
        %v3993 = vrcp.pop %v3992
        %v3994 = vmul.f32 %v3992, %v3993
        %v3995 = vsub.f32 1.0, %v3994
        %v3996 = vmul.f32 %v3993, %v3995
        %v3997 = vadd.f32 %v3993, %v3996
        %vm3998 = vweird.f32 %v3992
        %vm3999 = vweird.f32 %v3993
        %vm4000 = vmor %vm3998, %vm3999
        %v4001 = vsel %vm4000, %v3993, %v3997
        %v4002 = vand.u32 2147483647, %v3992
        %vm4003 = vcmp.eq.f32.partialorder %v4002, 8.507059e+37
        %v4004 = vand.u32 %v3992, 2147483648
        %v4005 = vor.u32 1.1754944e-38, %v4004
        %v4006 = vsel %vm4003, %v4005, %v4001
        %v4007 = vmul.f32 %v3982, %v4006
        %v4008 = vmin.f32 %v4007, 1.0
        %v4009 = vmax.f32 %v4008, -1.0
        %v4010 = vadd.f32 %v3969, 1.0
        %v4011 = vadd.f32 %v4009, 1.0
        %v4012 = vmul.f32 %v3926, %v4010
        %v4013 = vmul.f32 %v3927, %v4011
        %v4014 = vld [vmem:[%s53] sm:$0xff]
        %v4015 = vld [vmem:[%s53 + $0x8] sm:$0xff]
        %v4016 = vld [vmem:[%s53 + $0x10] sm:$0xff]
        %v4017 = vld [vmem:[%s53 + $0x18] sm:$0xff]
        %v4018 = vld [vmem:[%s53 + $0x20] sm:$0xff]
        %v4019 = vld [vmem:[%s53 + $0x28] sm:$0xff]
        %v4020 = vld [vmem:[%s53 + $0x30] sm:$0xff]
        %v4021 = vld [vmem:[%s53 + $0x38] sm:$0xff]
        %v4022 = vld [vmem:[%s53 + $0x40] sm:$0xff]
        %v4023 = vld [vmem:[%s53 + $0x48] sm:$0xff]
        %v4024 = vld [vmem:[%s53 + $0x50] sm:$0xff]
        %v4025 = vld [vmem:[%s53 + $0x58] sm:$0xff]
        %v4026 = vld [vmem:[%s53 + $0x60] sm:$0xff]
        %v4027 = vld [vmem:[%s53 + $0x68] sm:$0xff]
        %v4028 = vld [vmem:[%s53 + $0x70] sm:$0xff]
        %v4029 = vld [vmem:[%s53 + $0x78] sm:$0xff]
        %v4030 = vld [vmem:[%s53 + $0x80] sm:$0xff]
        %v4031 = vld [vmem:[%s53 + $0x88] sm:$0xff]
        %v4032 = vld [vmem:[%s53 + $0x90] sm:$0xff]
        %v4033 = vld [vmem:[%s53 + $0x98] sm:$0xff]
        %v4034 = vld [vmem:[%s53 + $0xa0] sm:$0xff]
        %v4035 = vld [vmem:[%s53 + $0xa8] sm:$0xff]
        %v4036 = vld [vmem:[%s53 + $0xb0] sm:$0xff]
        %v4037 = vld [vmem:[%s53 + $0xb8] sm:$0xff]
        %v4038 = vld [vmem:[%s53 + $0xc0] sm:$0xff]
        %v4039 = vld [vmem:[%s53 + $0xc8] sm:$0xff]
        %v4040 = vld [vmem:[%s53 + $0xd0] sm:$0xff]
        %v4041 = vld [vmem:[%s53 + $0xd8] sm:$0xff]
        %v4042 = vld [vmem:[%s53 + $0xe0] sm:$0xff]
        %v4043 = vld [vmem:[%s53 + $0xe8] sm:$0xff]
        %v4044 = vld [vmem:[%s53 + $0xf0] sm:$0xff]
        %v4045 = vld [vmem:[%s53 + $0xf8] sm:$0xff]
        %v4046 = vld [vmem:[%s55] sm:$0x1]
        %v4048 = vperm.slane %v4046, 0
        %4050 = vmatpush.msra.mxu0 %v4029
        %4051 = vmatpush.msra.mxu0 %v4028
        %4052 = vmatpush.msra.mxu0 %v4027
        %4053 = vmatpush.msra.mxu0 %v4026
        %4054 = vmatpush.msra.mxu0 %v4025
        %4055 = vmatpush.msra.mxu0 %v4024
        %4056 = vmatpush.msra.mxu0 %v4023
        %4057 = vmatpush.msra.mxu0 %v4022
        %4058 = vmatpush.msra.mxu0 %v4021
        %4059 = vmatpush.msra.mxu0 %v4020
        %4060 = vmatpush.msra.mxu0 %v4019
        %4061 = vmatpush.msra.mxu0 %v4018
        %4062 = vmatpush.msra.mxu0 %v4017
        %4063 = vmatpush.msra.mxu0 %v4016
        %4064 = vmatpush.msra.mxu0 %v4015
        %4065 = vmatpush.msra.mxu0 %v4014
        %4066 = vmatmul.f32.gmra.mxu0 %v4012
        %v4067 = vpop.f32.mrf.mxu0
        %v4068 = vadd.f32 %v4048, %v4067
        %4069 = vdwg.mxu0
        %4070 = vmatpush.msra.mxu0 %v4045
        %4071 = vmatpush.msra.mxu0 %v4044
        %4072 = vmatpush.msra.mxu0 %v4043
        %4073 = vmatpush.msra.mxu0 %v4042
        %4074 = vmatpush.msra.mxu0 %v4041
        %4075 = vmatpush.msra.mxu0 %v4040
        %4076 = vmatpush.msra.mxu0 %v4039
        %4077 = vmatpush.msra.mxu0 %v4038
        %4078 = vmatpush.msra.mxu0 %v4037
        %4079 = vmatpush.msra.mxu0 %v4036
        %4080 = vmatpush.msra.mxu0 %v4035
        %4081 = vmatpush.msra.mxu0 %v4034
        %4082 = vmatpush.msra.mxu0 %v4033
        %4083 = vmatpush.msra.mxu0 %v4032
        %4084 = vmatpush.msra.mxu0 %v4031
        %4085 = vmatpush.msra.mxu0 %v4030
        %4086 = vmatmul.f32.gmra.mxu0 %v4013
        %v4087 = vpop.f32.mrf.mxu0
        %v4088 = vadd.f32 %v4068, %v4087
        %4089 = vdwg.mxu0
        %v4090 = vadd.f32 %v4088, %v3847
        %v4091 = vld [vmem:[%s57] sm:$0x1]
        %v4092 = vld [vmem:[%s59] sm:$0x1]
        %4093 = vadd.xlane.f32.xlu0 %v4090
        %v4094 = vpop.xlane.xlu0 %4093
        %v4095 = vmul.f32 %v4094, %v2338
        %v4096 = vsub.f32 %v4090, %v4095
        %v4097 = vmul.f32 %v4096, %v4096
        %4098 = vadd.xlane.f32.xlu0 %v4097
        %v4099 = vpop.xlane.xlu0 %4098
        %v4100 = vmul.f32 %v4099, %v2338
        %v4101 = vadd.f32 %v4100, 1e-12
        %v4102 = vrsqrt.pop %v4101
        %v4103 = vmul.f32 %v4102, %v4101
        %v4104 = vmul.f32 %v4103, %v4102
        %v4105 = vmul.f32 0.5, %v4104
        %v4106 = vsub.f32 1.5, %v4105
        %v4107 = vmul.f32 %v4102, %v4106
        %vm4108 = vweird.f32 %v4101
        %vm4109 = vweird.f32 %v4102
        %vm4110 = vmor %vm4108, %vm4109
        %v4111 = vsel %vm4110, %v4102, %v4107
        %v4112 = vmul.f32 %v4096, %v4111
        %v4114 = vperm.slane %v4091, 0
        %v4116 = vmul.f32 %v4112, %v4114
        %v4118 = vperm.slane %v4092, 0
        %v4120 = vadd.f32 %v4116, %v4118
        %4121 = vst [vmem:[%s936] sm:$0xff] %v4120
        %s4122 = sand.u32 %s723, 1
        %s4123 = scalar_lea.sflag [#allocation3], %s4122
        %s4124 = sand.u32 %s723, 1
        %s4125 = smul.addr %s4124, 8
        %s4126 = scalar_lea.vmem [#allocation2], %s4125
        // Predicated region
        $region141: #{xlnet_lm_encoder_forward.1} parent=139 // pred_check
          %p4127 = pneg %p733
        $region142: #{xlnet_lm_encoder_forward.1} parent=139 // pred_check_branch
          %4129 = sbr.rel (%p4127) target = $region144
        $region143: #{xlnet_lm_encoder_forward.1} parent=139 // pred_region
          %4131 = vsyncadd %s4123, 0
          %s4132 = smul.addr %s75, 8
          %s4133 = scalar_lea.hbm %s61, %s4132
          %s4135 = sshll.u32 %s4126, 4
          %s4136 = int_to_ptr.vmem [resolvable:$true] %s4135
          %s4137 = sshll.u32 %s4133, 4
          %s4138 = int_to_ptr.hbm [resolvable:$true] %s4137
          %4140 = dma.vmem_to_hbm [thread:$0]  %s4136, 128, %s4138, %s4123
        $region144: #{xlnet_lm_encoder_forward.1} parent=139 // pred_fallthru
          _
      $region140: #{xlnet_lm_encoder_forward.1} parent=5 // pred_fallthru
        _
      %p4141 = scmp.le.s32.totalorder 2, %s70
      // Predicated region
      $region145: #{xlnet_lm_encoder_forward.1} parent=5 // pred_check
        %p4142 = pneg %p4141
      $region146: #{xlnet_lm_encoder_forward.1} parent=5 // pred_check_branch
        %4144 = sbr.rel (%p4142) target = $region148
      $region147: #{xlnet_lm_encoder_forward.1} parent=5 // pred_region
        %s4145 = ssub.s32 %s70, 2
        // Predicated region
        $region149: #{xlnet_lm_encoder_forward.1} parent=147 // pred_check
          %p4146 = pneg %p739
        $region150: #{xlnet_lm_encoder_forward.1} parent=147 // pred_check_branch
          %4148 = sbr.rel (%p4146) target = $region152
        $region151: #{xlnet_lm_encoder_forward.1} parent=147 // pred_region
          %s4149 = sand.u32 %s724, 1
          %s4150 = scalar_lea.sflag [#allocation3], %s4149
          %s4151 = sand.u32 %s724, 1
          %s4152 = smul.addr %s4151, 8
          %s4153 = scalar_lea.vmem [#allocation2], %s4152
          %4155 = dma.done %s4150, 128
        $region152: #{xlnet_lm_encoder_forward.1} parent=147 // pred_fallthru
          _
      $region148: #{xlnet_lm_encoder_forward.1} parent=5 // pred_fallthru
        _
    $region6: #{xlnet_lm_encoder_forward.1} parent=1 // loop_footer
      %s74 = sadd.s32 1, %s70
    $region7: #{xlnet_lm_encoder_forward.1} parent=1 // loop_footer_branch
      %69 = sbr.rel target = $region3
    $region8: #{xlnet_lm_encoder_forward.1} parent=1 // loop_exit
      _
    %4156 = vsyncpa [#allocation3], 1
    %s4157 = scalar_lea.sflag [#allocation3], 1
    %4158 = vsyncpa %s4157, 1

</llo_original>
